<compile_context>
chip_gen: v6e
topology: v6e:2x2x1
jax: 0.10.0
libtpu: 0.0.40
codegen_flags: <defaults>
</compile_context>

<pallas_src>
import functools

import jax
import jax.numpy as jnp
from jax.experimental import pallas as pl
from jax.experimental.pallas import tpu as pltpu

# bf16 MXU inputs (v5e/v6e/v7x MXUs are bf16-native); accumulation stays f32.
MXU_INPUT_DTYPE = jnp.bfloat16


def _round_up(x, m):
    return (x + m - 1) // m * m


def _pick_tile(dim, prefs):
    for p in prefs:
        if dim >= p and dim % p == 0:
            return p
    return dim


# --------------------------- tiled GEMM (all dense layers) -------------------

def _matmul_kernel(x_ref, w_ref, b_ref, o_ref, acc_ref, *, activation):
    k = pl.program_id(2)

    @pl.when(k == 0)
    def _():
        acc_ref[...] = jnp.zeros_like(acc_ref)

    acc_ref[...] += jnp.dot(x_ref[...], w_ref[...],
                            preferred_element_type=jnp.float32)

    @pl.when(k == pl.num_programs(2) - 1)
    def _():
        y = acc_ref[...] + b_ref[...]
        if activation == "relu":
            y = jnp.maximum(y, 0.0)
        o_ref[...] = y.astype(o_ref.dtype)


def pallas_linear(x, w, b, activation=None, out_dtype=jnp.float32):
    """y = act(x @ w + b) as an M/N/K-tiled Pallas GEMM with an f32 accumulator.

    `w` is pre-padded (Kp, Np) in MXU_INPUT_DTYPE and `b` is pre-padded (1, Np)
    f32 (done once at init).  Only the activation's M dim may need padding here.
    """
    M, K = x.shape
    Kp, Np = w.shape
    assert K == Kp and b.shape == (1, Np) and Np % 128 == 0

    Mp = _round_up(M, 8)
    tm = _pick_tile(Mp, (256, 128, 64, 32, 16, 8))
    tn = _pick_tile(Np, (512, 384, 256, 128))
    if Kp % 128 == 0:
        # Skinny-M GEMMs (e.g. the (8, 32768) embed layer): few, huge K blocks
        # to avoid being dominated by per-grid-step overhead.
        tk_prefs = (4096, 2048, 1024, 512, 256, 128) if Mp <= 64 else (1024, 512, 256, 128)
        tk = _pick_tile(Kp, tk_prefs)
    else:
        tk = Kp  # small-K path (im2col conv): block == full K dim (legal, unpadded)

    # Keep the double-buffered weight tile under ~4 MiB so the default scoped
    # VMEM limit is safe on every generation (16 MiB v5e, 32 MiB v6e/v7x).
    itemsize = jnp.dtype(w.dtype).itemsize
    while Kp % 128 == 0 and tk > 128 and tk * tn * itemsize * 2 > 4 * 1024 * 1024:
        tk //= 2

    xp = x.astype(w.dtype)
    if Mp != M:
        xp = jnp.pad(xp, ((0, Mp - M), (0, 0)))

    out = pl.pallas_call(
        functools.partial(_matmul_kernel, activation=activation),
        out_shape=jax.ShapeDtypeStruct((Mp, Np), out_dtype),
        grid=(Mp // tm, Np // tn, Kp // tk),
        in_specs=[
            pl.BlockSpec((tm, tk), lambda i, j, k: (i, k)),
            pl.BlockSpec((tk, tn), lambda i, j, k: (k, j)),
            pl.BlockSpec((1, tn), lambda i, j, k: (0, j)),
        ],
        out_specs=pl.BlockSpec((tm, tn), lambda i, j, k: (i, j)),
        scratch_shapes=[pltpu.VMEM((tm, tn), jnp.float32)],
        compiler_params=pltpu.CompilerParams(
            dimension_semantics=("parallel", "parallel", "arbitrary")),
    )(xp, w, b)
    return out if Mp == M else out[:M]


# --------------------------- GRU: grid-over-T streamed recurrence ------------

def _gru_step_kernel(gx_ref, whh_ref, bhn_ref, out_ref, h_ref, *, hp):
    """One GRU time step per grid iteration; h carried in VMEM scratch.

    gx_ref : (1, B, 3*hp) bf16  precomputed x_t @ W_ih^T + b_ih (+ b_hr, b_hz folded)
    whh_ref: (hp, 3*hp)  bf16   fused W_h{r,z,n}^T, resident across all steps
    bhn_ref: (1, hp)     f32    hidden bias of the n gate only
    out_ref: (1, B, hp)  f32    h_t
    h_ref  : (B, hp)     f32    carried hidden state (scratch)
    """
    @pl.when(pl.program_id(0) == 0)
    def _():
        h_ref[...] = jnp.zeros_like(h_ref)

    h = h_ref[...]                                                     # (B, hp) f32
    gx = gx_ref[0].astype(jnp.float32)                                 # (B, 3*hp)
    gh = jnp.dot(h.astype(whh_ref.dtype), whh_ref[...],
                 preferred_element_type=jnp.float32)                   # (B, 3*hp)

    r = jax.nn.sigmoid(gx[:, 0:hp] + gh[:, 0:hp])
    z = jax.nn.sigmoid(gx[:, hp:2 * hp] + gh[:, hp:2 * hp])
    n = jnp.tanh(gx[:, 2 * hp:3 * hp] + r * (gh[:, 2 * hp:3 * hp] + bhn_ref[...]))
    h_new = (1.0 - z) * n + z * h

    h_ref[...] = h_new
    out_ref[0] = h_new.astype(out_ref.dtype)


def gru_direction(x_seq, w_ih, b_ih, w_hh, b_hn, hp):
    """x_seq: (T, B, Fp).  Returns (T, B, hp); real hidden lives in [:, :, :hid]."""
    T, B, F = x_seq.shape
    # Input-to-hidden projection for ALL time steps in one tiled GEMM; gates stay
    # (T, B, 3*hp) in bf16 so the HBM round trip between the two calls is halved.
    gates = pallas_linear(x_seq.reshape(T * B, F), w_ih, b_ih,
                          out_dtype=MXU_INPUT_DTYPE).reshape(T, B, 3 * hp)
    return pl.pallas_call(
        functools.partial(_gru_step_kernel, hp=hp),
        out_shape=jax.ShapeDtypeStruct((T, B, hp), jnp.float32),
        grid=(T,),
        in_specs=[
            pl.BlockSpec((1, B, 3 * hp), lambda t: (t, 0, 0)),
            pl.BlockSpec((hp, 3 * hp), lambda t: (0, 0)),   # resident every step
            pl.BlockSpec((1, hp), lambda t: (0, 0)),
        ],
        out_specs=pl.BlockSpec((1, B, hp), lambda t: (t, 0, 0)),
        scratch_shapes=[pltpu.VMEM((B, hp), jnp.float32)],
        compiler_params=pltpu.CompilerParams(dimension_semantics=("arbitrary",)),
    )(gates, w_hh, b_hn)


# --------------------------- CNN embed (synthetic stand-in) ------------------

def cnn_embed(frames_nchw, cnn_params):
    """(N, C, H, W) -> (N, FEATp): 3x3 same conv + ReLU (NHWC im2col GEMM),
    then NHWC flatten + Linear + ReLU.  The flatten permutation is baked into
    the embed weight's row order, so no post-GEMM relayout is needed."""
    N, C, H, W = frames_nchw.shape
    w_conv, b_conv, w_emb, b_emb = cnn_params
    kc, ocp = w_conv.shape

    x = jnp.transpose(frames_nchw, (0, 2, 3, 1)).astype(MXU_INPUT_DTYPE)  # NCHW->NHWC
    xp = jnp.pad(x, ((0, 0), (1, 1), (1, 1), (0, 0)))
    cols = [xp[:, di:di + H, dj:dj + W, :] for di in range(3) for dj in range(3)]
    patches = jnp.concatenate(cols, axis=-1)                       # (N, H, W, 9C) bf16
    patches = jnp.pad(patches, ((0, 0), (0, 0), (0, 0), (0, kc - 9 * C)))
    patches = patches.reshape(N * H * W, kc)
    # TODO(synk): fuse the 9-tap im2col into this GEMM (shifted windows inside
    # the kernel) to remove the 9x patch materialization at production sizes.

    y = pallas_linear(patches, w_conv, b_conv, activation="relu",
                      out_dtype=MXU_INPUT_DTYPE)                   # (N*H*W, OCp)
    flat = y.reshape(N, H * W * ocp)                               # NHWC flatten
    return pallas_linear(flat, w_emb, b_emb, activation="relu",
                         out_dtype=MXU_INPUT_DTYPE)                # (N, FEATp)


# --------------------------- forward pass ------------------------------------

def cnn_gru_forward(inputs, params, cfg):
    B = inputs.shape[0]
    T = cfg["VIDEO_CUT_LENGTH"]
    C, H, W = inputs.shape[2], inputs.shape[3], inputs.shape[4]
    hp = _round_up(cfg["hidden_size"], 128)
    Bp = _round_up(B, 8)                      # sublane-dense batch for GRU / FC

    c_in = inputs.reshape(B * T, C, H, W)
    c_out = cnn_embed(c_in, params["cnn"])    # (B*T, FEATp) bf16

    # Reproduce torch `c_out.view(sequence_length, batch_size, -1)` exactly,
    # then zero-pad the (independent) batch rows to a multiple of 8.
    x = c_out.reshape(T, B, -1)
    if Bp != B:
        x = jnp.pad(x, ((0, 0), (0, Bp - B), (0, 0)))

    for lp in params["gru"]:
        out_f = gru_direction(x, lp["w_ih_f"], lp["b_ih_f"],
                              lp["w_hh_f"], lp["b_hn_f"], hp)
        if cfg["bidirectional"]:
            out_b = gru_direction(jnp.flip(x, 0), lp["w_ih_b"], lp["b_ih_b"],
                                  lp["w_hh_b"], lp["b_hn_b"], hp)
            x = jnp.concatenate([out_f, jnp.flip(out_b, 0)], axis=-1)
        else:
            x = out_f

    last = x[-1]                                          # (Bp, ndir*hp)
    logits = pallas_linear(last, params["fc_w"], params["fc_b"])
    return logits[:B, :cfg["num_classes"]]


# --------------------------- deterministic init ------------------------------
# All weights are padded to lane/sublane-friendly shapes and cast to the MXU
# input dtype ONCE here, so the forward pass never re-pads multi-MB tensors.

def _pad_gates_cols(w_real, hid, hp):
    """(rows, 3*hid) torch gate order [r|z|n] -> (rows, 3*hp), gate g at [g*hp:g*hp+hid]."""
    out = jnp.zeros((w_real.shape[0], 3 * hp), jnp.float32)
    for g in range(3):
        out = out.at[:, g * hp:g * hp + hid].set(w_real[:, g * hid:(g + 1) * hid])
    return out


def _pad_rows(w_real, row_slots, rows_pad):
    """Scatter row-blocks of w_real into a zero (rows_pad, cols) matrix."""
    out = jnp.zeros((rows_pad, w_real.shape[1]), jnp.float32)
    for src, dst, ln in row_slots:
        out = out.at[dst:dst + ln].set(w_real[src:src + ln])
    return out


def _make_direction(rnd, in_real, row_slots, in_pad, hid, hp):
    w_ih = rnd((in_real, 3 * hid))        # == torch weight_ih_l{k}.T
    b_ih = rnd((3 * hid,))
    w_hh = rnd((hid, 3 * hid))            # == torch weight_hh_l{k}.T (fused gates)
    b_hh = rnd((3 * hid,))
    # Fold b_hr / b_hz into the precomputed input gates (they are purely additive
    # there); only b_hn remains inside the recurrence (it sits under r * (...)).
    b_ih_fold = b_ih.at[:2 * hid].add(b_hh[:2 * hid])
    return {
        "w_ih": _pad_rows(_pad_gates_cols(w_ih, hid, hp), row_slots,
                          in_pad).astype(MXU_INPUT_DTYPE),
        "b_ih": _pad_gates_cols(b_ih_fold.reshape(1, -1), hid, hp),        # (1, 3hp) f32
        "w_hh": _pad_rows(_pad_gates_cols(w_hh, hid, hp), [(0, 0, hid)],
                          hp).astype(MXU_INPUT_DTYPE),
        "b_hn": jnp.zeros((1, hp), jnp.float32).at[0, :hid].set(b_hh[2 * hid:]),
    }


def init_params(key, cfg, C, H, W, conv_oc, feat):
    hid = cfg["hidden_size"]
    hp = _round_up(hid, 128)
    ndir = 2 if cfg["bidirectional"] else 1
    nc = cfg["num_classes"]
    ks = iter(jax.random.split(key, 128))

    def rnd(shape, scale=0.08):
        return (scale * jax.random.normal(next(ks), shape)).astype(jnp.float32)

    kc = _round_up(9 * C, 8)              # im2col K padded 27 -> 32 (not 128)
    ocp = _round_up(conv_oc, 128)
    featp = _round_up(feat, 128)
    ncp = _round_up(nc, 128)

    # Synthetic CNN stand-in (see module-level TODO).
    w_conv = jnp.zeros((kc, ocp), jnp.float32).at[:9 * C, :conv_oc].set(
        rnd((9 * C, conv_oc))).astype(MXU_INPUT_DTYPE)
    b_conv = jnp.zeros((1, ocp), jnp.float32).at[0, :conv_oc].set(rnd((conv_oc,)))
    # Embed weight rows follow the NHWC(+padded OC) flatten order of the conv out.
    w_emb = jnp.zeros((H * W, ocp, featp), jnp.float32)
    w_emb = w_emb.at[:, :conv_oc, :feat].set(
        rnd((conv_oc * H * W, feat)).reshape(H * W, conv_oc, feat))
    w_emb = w_emb.reshape(H * W * ocp, featp).astype(MXU_INPUT_DTYPE)
    b_emb = jnp.zeros((1, featp), jnp.float32).at[0, :feat].set(rnd((feat,)))
    cnn = (w_conv, b_conv, w_emb, b_emb)

    gru_layers = []
    for layer in range(cfg["num_layers"]):
        if layer == 0:
            in_real, in_pad, slots = feat, featp, [(0, 0, feat)]
        elif ndir == 1:
            in_real, in_pad, slots = hid, hp, [(0, 0, hid)]
        else:
            in_real, in_pad, slots = 2 * hid, 2 * hp, [(0, 0, hid), (hid, hp, hid)]
        lp = {}
        for k, v in _make_direction(rnd, in_real, slots, in_pad, hid, hp).items():
            lp[k + "_f"] = v
        if cfg["bidirectional"]:
            for k, v in _make_direction(rnd, in_real, slots, in_pad, hid, hp).items():
                lp[k + "_b"] = v
        gru_layers.append(lp)

    fc_real = rnd((hid * ndir, nc))
    fc_slots = [(0, 0, hid)] if ndir == 1 else [(0, 0, hid), (hid, hp, hid)]
    fc_cols = jnp.zeros((hid * ndir, ncp), jnp.float32).at[:, :nc].set(fc_real)
    return {
        "cnn": cnn,
        "gru": gru_layers,
        "fc_w": _pad_rows(fc_cols, fc_slots, hp * ndir).astype(MXU_INPUT_DTYPE),
        "fc_b": jnp.zeros((1, ncp), jnp.float32).at[0, :nc].set(rnd((nc,))),
    }


# --------------------------------- main --------------------------------------

if __name__ == "__main__":
    cfg = {
        "num_classes": 5,
        "num_layers": 2,
        "hidden_size": 32,
        "VIDEO_CUT_LENGTH": 4,    # sequence length T
        "bidirectional": False,
    }
    B, T, C, H, W = 2, cfg["VIDEO_CUT_LENGTH"], 3, 16, 16
    CONV_OC, FEAT = 128, 128      # synthetic stand-in for the 4096-dim CNN embed

    key = jax.random.PRNGKey(0)
    k_in, k_par = jax.random.split(key)
    inputs = jax.random.normal(k_in, (B, T, C, H, W), dtype=jnp.float32)
    params = init_params(k_par, cfg, C, H, W, CONV_OC, FEAT)

    fwd = jax.jit(functools.partial(cnn_gru_forward, cfg=cfg))
    out = jax.block_until_ready(fwd(inputs, params))

    assert out.shape == (B, cfg["num_classes"])
    assert bool(jnp.all(jnp.isfinite(out)))
    print("KERNEL_OK")
</pallas_src>

<mosaic_0001>
module attributes {stable_mosaic.version = 11 : i64} {
  func.func @_matmul_kernel(%arg0: i32, %arg1: i32, %arg2: i32, %arg3: memref<256x32xbf16, #tpu.memory_space<vmem>>, %arg4: memref<32x128xbf16, #tpu.memory_space<vmem>>, %arg5: memref<1x128xf32, #tpu.memory_space<vmem>>, %arg6: memref<256x128xbf16, #tpu.memory_space<vmem>>, %arg7: memref<256x128xf32, #tpu.memory_space<vmem>>) attributes {dimension_semantics = [#tpu.dimension_semantics<parallel>, #tpu.dimension_semantics<parallel>, #tpu.dimension_semantics<arbitrary>], iteration_bounds = array<i64: 8, 1, 1>, scalar_prefetch = 0 : i64, scratch_operands = 1 : i64, tpu.core_type = #tpu.core_type<tc>, window_params = [{transform_indices = @transform_0, window_bounds = array<i64: 256, 32>}, {transform_indices = @transform_1, window_bounds = array<i64: 32, 128>}, {transform_indices = @transform_2, window_bounds = array<i64: 1, 128>}, {transform_indices = @transform_3, window_bounds = array<i64: 256, 128>}]} {
    %c0_i32 = arith.constant 0 : i32
    %0 = arith.cmpi eq, %arg2, %c0_i32 : i32
    %1 = arith.extui %0 : i1 to i32
    %c0_i32_0 = arith.constant 0 : i32
    %2 = arith.cmpi ne, %1, %c0_i32_0 : i32
    scf.if %2 {
      %cst_10 = arith.constant 0.000000e+00 : f32
      %12 = vector.broadcast %cst_10 : f32 to vector<256x128xf32>
      %c0_11 = arith.constant 0 : index
      %c0_12 = arith.constant 0 : index
      %13 = vector.load %arg7[%c0_11, %c0_12] : memref<256x128xf32, #tpu.memory_space<vmem>>, vector<256x128xf32>
      tpu.vector_store %arg7[%c0_11, %c0_12], %12 {strides = array<i32>} : memref<256x128xf32, #tpu.memory_space<vmem>>, vector<256x128xf32>,
    } else {
    }
    %c0 = arith.constant 0 : index
    %c0_1 = arith.constant 0 : index
    %3 = vector.load %arg7[%c0, %c0_1] : memref<256x128xf32, #tpu.memory_space<vmem>>, vector<256x128xf32>
    %c0_2 = arith.constant 0 : index
    %c0_3 = arith.constant 0 : index
    %4 = vector.load %arg3[%c0_2, %c0_3] : memref<256x32xbf16, #tpu.memory_space<vmem>>, vector<256x32xbf16>
    %c0_4 = arith.constant 0 : index
    %c0_5 = arith.constant 0 : index
    %5 = vector.load %arg4[%c0_4, %c0_5] : memref<32x128xbf16, #tpu.memory_space<vmem>>, vector<32x128xbf16>
    %cst = arith.constant dense<0.000000e+00> : vector<256x128xf32>
    %6 = tpu.matmul %4, %5, %cst {dimension_numbers = #tpu.dot_dimension_numbers<[1], [0], [0], [1], [0, 0, 1, 1], [], []>} : vector<256x32xbf16>, vector<32x128xbf16>, vector<256x128xf32> -> vector<256x128xf32>
    %7 = arith.addf %3, %6 : vector<256x128xf32>
    %c0_6 = arith.constant 0 : index
    %c0_7 = arith.constant 0 : index
    %8 = vector.load %arg7[%c0_6, %c0_7] : memref<256x128xf32, #tpu.memory_space<vmem>>, vector<256x128xf32>
    tpu.vector_store %arg7[%c0_6, %c0_7], %7 {strides = array<i32>} : memref<256x128xf32, #tpu.memory_space<vmem>>, vector<256x128xf32>,
    %c0_i32_8 = arith.constant 0 : i32
    %9 = arith.cmpi eq, %arg2, %c0_i32_8 : i32
    %10 = arith.extui %9 : i1 to i32
    %c0_i32_9 = arith.constant 0 : i32
    %11 = arith.cmpi ne, %10, %c0_i32_9 : i32
    scf.if %11 {
      %c0_10 = arith.constant 0 : index
      %c0_11 = arith.constant 0 : index
      %12 = vector.load %arg7[%c0_10, %c0_11] : memref<256x128xf32, #tpu.memory_space<vmem>>, vector<256x128xf32>
      %c0_12 = arith.constant 0 : index
      %c0_13 = arith.constant 0 : index
      %13 = vector.load %arg5[%c0_12, %c0_13] : memref<1x128xf32, #tpu.memory_space<vmem>>, vector<1x128xf32>
      %14 = vector.broadcast %13 : vector<1x128xf32> to vector<256x128xf32>
      %15 = arith.addf %12, %14 : vector<256x128xf32>
      %cst_14 = arith.constant 0.000000e+00 : f32
      %16 = vector.broadcast %cst_14 : f32 to vector<256x128xf32>
      %17 = arith.maximumf %15, %16 : vector<256x128xf32>
      %18 = arith.truncf %17 : vector<256x128xf32> to vector<256x128xbf16>
      %c0_15 = arith.constant 0 : index
      %c0_16 = arith.constant 0 : index
      %19 = vector.load %arg6[%c0_15, %c0_16] : memref<256x128xbf16, #tpu.memory_space<vmem>>, vector<256x128xbf16>
      tpu.vector_store %arg6[%c0_15, %c0_16], %18 {strides = array<i32>} : memref<256x128xbf16, #tpu.memory_space<vmem>>, vector<256x128xbf16>,
    } else {
    }
    return
  }
  func.func @transform_0(%arg0: i32, %arg1: i32, %arg2: i32) -> (i32, i32) {
    %c0_i32 = arith.constant 0 : i32
    return %arg0, %arg2 : i32, i32
  }
  func.func @transform_1(%arg0: i32, %arg1: i32, %arg2: i32) -> (i32, i32) {
    %c0_i32 = arith.constant 0 : i32
    return %arg2, %arg1 : i32, i32
  }
  func.func @transform_2(%arg0: i32, %arg1: i32, %arg2: i32) -> (i32, i32) {
    %c0_i32 = arith.constant 0 : i32
    %c0_i32_0 = arith.constant 0 : i32
    return %c0_i32, %arg1 : i32, i32
  }
  func.func @transform_3(%arg0: i32, %arg1: i32, %arg2: i32) -> (i32, i32) {
    %c0_i32 = arith.constant 0 : i32
    return %arg0, %arg1 : i32, i32
  }
}

module attributes {stable_mosaic.version = 11 : i64} {
  func.func @_matmul_kernel(%arg0: i32, %arg1: i32, %arg2: i32, %arg3: memref<8x4096xbf16, #tpu.memory_space<vmem>>, %arg4: memref<4096x128xbf16, #tpu.memory_space<vmem>>, %arg5: memref<1x128xf32, #tpu.memory_space<vmem>>, %arg6: memref<8x128xbf16, #tpu.memory_space<vmem>>, %arg7: memref<8x128xf32, #tpu.memory_space<vmem>>) attributes {dimension_semantics = [#tpu.dimension_semantics<parallel>, #tpu.dimension_semantics<parallel>, #tpu.dimension_semantics<arbitrary>], iteration_bounds = array<i64: 1, 1, 8>, scalar_prefetch = 0 : i64, scratch_operands = 1 : i64, tpu.core_type = #tpu.core_type<tc>, window_params = [{transform_indices = @transform_0, window_bounds = array<i64: 8, 4096>}, {transform_indices = @transform_1, window_bounds = array<i64: 4096, 128>}, {transform_indices = @transform_2, window_bounds = array<i64: 1, 128>}, {transform_indices = @transform_3, window_bounds = array<i64: 8, 128>}]} {
    %c0_i32 = arith.constant 0 : i32
    %0 = arith.cmpi eq, %arg2, %c0_i32 : i32
    %1 = arith.extui %0 : i1 to i32
    %c0_i32_0 = arith.constant 0 : i32
    %2 = arith.cmpi ne, %1, %c0_i32_0 : i32
    scf.if %2 {
      %cst_9 = arith.constant 0.000000e+00 : f32
      %12 = vector.broadcast %cst_9 : f32 to vector<8x128xf32>
      %c0_10 = arith.constant 0 : index
      %c0_11 = arith.constant 0 : index
      %13 = vector.load %arg7[%c0_10, %c0_11] : memref<8x128xf32, #tpu.memory_space<vmem>>, vector<8x128xf32>
      tpu.vector_store %arg7[%c0_10, %c0_11], %12 {strides = array<i32>} : memref<8x128xf32, #tpu.memory_space<vmem>>, vector<8x128xf32>,
    } else {
    }
    %c0 = arith.constant 0 : index
    %c0_1 = arith.constant 0 : index
    %3 = vector.load %arg7[%c0, %c0_1] : memref<8x128xf32, #tpu.memory_space<vmem>>, vector<8x128xf32>
    %c0_2 = arith.constant 0 : index
    %c0_3 = arith.constant 0 : index
    %4 = vector.load %arg3[%c0_2, %c0_3] : memref<8x4096xbf16, #tpu.memory_space<vmem>>, vector<8x4096xbf16>
    %c0_4 = arith.constant 0 : index
    %c0_5 = arith.constant 0 : index
    %5 = vector.load %arg4[%c0_4, %c0_5] : memref<4096x128xbf16, #tpu.memory_space<vmem>>, vector<4096x128xbf16>
    %cst = arith.constant dense<0.000000e+00> : vector<8x128xf32>
    %6 = tpu.matmul %4, %5, %cst {dimension_numbers = #tpu.dot_dimension_numbers<[1], [0], [0], [1], [0, 0, 1, 1], [], []>} : vector<8x4096xbf16>, vector<4096x128xbf16>, vector<8x128xf32> -> vector<8x128xf32>
    %7 = arith.addf %3, %6 : vector<8x128xf32>
    %c0_6 = arith.constant 0 : index
    %c0_7 = arith.constant 0 : index
    %8 = vector.load %arg7[%c0_6, %c0_7] : memref<8x128xf32, #tpu.memory_space<vmem>>, vector<8x128xf32>
    tpu.vector_store %arg7[%c0_6, %c0_7], %7 {strides = array<i32>} : memref<8x128xf32, #tpu.memory_space<vmem>>, vector<8x128xf32>,
    %c7_i32 = arith.constant 7 : i32
    %9 = arith.cmpi eq, %arg2, %c7_i32 : i32
    %10 = arith.extui %9 : i1 to i32
    %c0_i32_8 = arith.constant 0 : i32
    %11 = arith.cmpi ne, %10, %c0_i32_8 : i32
    scf.if %11 {
      %c0_9 = arith.constant 0 : index
      %c0_10 = arith.constant 0 : index
      %12 = vector.load %arg7[%c0_9, %c0_10] : memref<8x128xf32, #tpu.memory_space<vmem>>, vector<8x128xf32>
      %c0_11 = arith.constant 0 : index
      %c0_12 = arith.constant 0 : index
      %13 = vector.load %arg5[%c0_11, %c0_12] : memref<1x128xf32, #tpu.memory_space<vmem>>, vector<1x128xf32>
      %14 = vector.broadcast %13 : vector<1x128xf32> to vector<8x128xf32>
      %15 = arith.addf %12, %14 : vector<8x128xf32>
      %cst_13 = arith.constant 0.000000e+00 : f32
      %16 = vector.broadcast %cst_13 : f32 to vector<8x128xf32>
      %17 = arith.maximumf %15, %16 : vector<8x128xf32>
      %18 = arith.truncf %17 : vector<8x128xf32> to vector<8x128xbf16>
      %c0_14 = arith.constant 0 : index
      %c0_15 = arith.constant 0 : index
      %19 = vector.load %arg6[%c0_14, %c0_15] : memref<8x128xbf16, #tpu.memory_space<vmem>>, vector<8x128xbf16>
      tpu.vector_store %arg6[%c0_14, %c0_15], %18 {strides = array<i32>} : memref<8x128xbf16, #tpu.memory_space<vmem>>, vector<8x128xbf16>,
    } else {
    }
    return
  }
  func.func @transform_0(%arg0: i32, %arg1: i32, %arg2: i32) -> (i32, i32) {
    %c0_i32 = arith.constant 0 : i32
    return %arg0, %arg2 : i32, i32
  }
  func.func @transform_1(%arg0: i32, %arg1: i32, %arg2: i32) -> (i32, i32) {
    %c0_i32 = arith.constant 0 : i32
    return %arg2, %arg1 : i32, i32
  }
  func.func @transform_2(%arg0: i32, %arg1: i32, %arg2: i32) -> (i32, i32) {
    %c0_i32 = arith.constant 0 : i32
    %c0_i32_0 = arith.constant 0 : i32
    return %c0_i32, %arg1 : i32, i32
  }
  func.func @transform_3(%arg0: i32, %arg1: i32, %arg2: i32) -> (i32, i32) {
    %c0_i32 = arith.constant 0 : i32
    return %arg0, %arg1 : i32, i32
  }
}

module attributes {stable_mosaic.version = 11 : i64} {
  func.func @_matmul_kernel(%arg0: i32, %arg1: i32, %arg2: i32, %arg3: memref<32x128xbf16, #tpu.memory_space<vmem>>, %arg4: memref<128x384xbf16, #tpu.memory_space<vmem>>, %arg5: memref<1x384xf32, #tpu.memory_space<vmem>>, %arg6: memref<32x384xbf16, #tpu.memory_space<vmem>>, %arg7: memref<32x384xf32, #tpu.memory_space<vmem>>) attributes {dimension_semantics = [#tpu.dimension_semantics<parallel>, #tpu.dimension_semantics<parallel>, #tpu.dimension_semantics<arbitrary>], iteration_bounds = array<i64: 1, 1, 1>, scalar_prefetch = 0 : i64, scratch_operands = 1 : i64, tpu.core_type = #tpu.core_type<tc>, window_params = [{transform_indices = @transform_0, window_bounds = array<i64: 32, 128>}, {transform_indices = @transform_1, window_bounds = array<i64: 128, 384>}, {transform_indices = @transform_2, window_bounds = array<i64: 1, 384>}, {transform_indices = @transform_3, window_bounds = array<i64: 32, 384>}]} {
    %c0_i32 = arith.constant 0 : i32
    %0 = arith.cmpi eq, %arg2, %c0_i32 : i32
    %1 = arith.extui %0 : i1 to i32
    %c0_i32_0 = arith.constant 0 : i32
    %2 = arith.cmpi ne, %1, %c0_i32_0 : i32
    scf.if %2 {
      %cst_10 = arith.constant 0.000000e+00 : f32
      %12 = vector.broadcast %cst_10 : f32 to vector<32x384xf32>
      %c0_11 = arith.constant 0 : index
      %c0_12 = arith.constant 0 : index
      %13 = vector.load %arg7[%c0_11, %c0_12] : memref<32x384xf32, #tpu.memory_space<vmem>>, vector<32x384xf32>
      tpu.vector_store %arg7[%c0_11, %c0_12], %12 {strides = array<i32>} : memref<32x384xf32, #tpu.memory_space<vmem>>, vector<32x384xf32>,
    } else {
    }
    %c0 = arith.constant 0 : index
    %c0_1 = arith.constant 0 : index
    %3 = vector.load %arg7[%c0, %c0_1] : memref<32x384xf32, #tpu.memory_space<vmem>>, vector<32x384xf32>
    %c0_2 = arith.constant 0 : index
    %c0_3 = arith.constant 0 : index
    %4 = vector.load %arg3[%c0_2, %c0_3] : memref<32x128xbf16, #tpu.memory_space<vmem>>, vector<32x128xbf16>
    %c0_4 = arith.constant 0 : index
    %c0_5 = arith.constant 0 : index
    %5 = vector.load %arg4[%c0_4, %c0_5] : memref<128x384xbf16, #tpu.memory_space<vmem>>, vector<128x384xbf16>
    %cst = arith.constant dense<0.000000e+00> : vector<32x384xf32>
    %6 = tpu.matmul %4, %5, %cst {dimension_numbers = #tpu.dot_dimension_numbers<[1], [0], [0], [1], [0, 0, 1, 1], [], []>} : vector<32x128xbf16>, vector<128x384xbf16>, vector<32x384xf32> -> vector<32x384xf32>
    %7 = arith.addf %3, %6 : vector<32x384xf32>
    %c0_6 = arith.constant 0 : index
    %c0_7 = arith.constant 0 : index
    %8 = vector.load %arg7[%c0_6, %c0_7] : memref<32x384xf32, #tpu.memory_space<vmem>>, vector<32x384xf32>
    tpu.vector_store %arg7[%c0_6, %c0_7], %7 {strides = array<i32>} : memref<32x384xf32, #tpu.memory_space<vmem>>, vector<32x384xf32>,
    %c0_i32_8 = arith.constant 0 : i32
    %9 = arith.cmpi eq, %arg2, %c0_i32_8 : i32
    %10 = arith.extui %9 : i1 to i32
    %c0_i32_9 = arith.constant 0 : i32
    %11 = arith.cmpi ne, %10, %c0_i32_9 : i32
    scf.if %11 {
      %c0_10 = arith.constant 0 : index
      %c0_11 = arith.constant 0 : index
      %12 = vector.load %arg7[%c0_10, %c0_11] : memref<32x384xf32, #tpu.memory_space<vmem>>, vector<32x384xf32>
      %c0_12 = arith.constant 0 : index
      %c0_13 = arith.constant 0 : index
      %13 = vector.load %arg5[%c0_12, %c0_13] : memref<1x384xf32, #tpu.memory_space<vmem>>, vector<1x384xf32>
      %14 = vector.broadcast %13 : vector<1x384xf32> to vector<32x384xf32>
      %15 = arith.addf %12, %14 : vector<32x384xf32>
      %16 = arith.truncf %15 : vector<32x384xf32> to vector<32x384xbf16>
      %c0_14 = arith.constant 0 : index
      %c0_15 = arith.constant 0 : index
      %17 = vector.load %arg6[%c0_14, %c0_15] : memref<32x384xbf16, #tpu.memory_space<vmem>>, vector<32x384xbf16>
      tpu.vector_store %arg6[%c0_14, %c0_15], %16 {strides = array<i32>} : memref<32x384xbf16, #tpu.memory_space<vmem>>, vector<32x384xbf16>,
    } else {
    }
    return
  }
  func.func @transform_0(%arg0: i32, %arg1: i32, %arg2: i32) -> (i32, i32) {
    %c0_i32 = arith.constant 0 : i32
    return %arg0, %arg2 : i32, i32
  }
  func.func @transform_1(%arg0: i32, %arg1: i32, %arg2: i32) -> (i32, i32) {
    %c0_i32 = arith.constant 0 : i32
    return %arg2, %arg1 : i32, i32
  }
  func.func @transform_2(%arg0: i32, %arg1: i32, %arg2: i32) -> (i32, i32) {
    %c0_i32 = arith.constant 0 : i32
    %c0_i32_0 = arith.constant 0 : i32
    return %c0_i32, %arg1 : i32, i32
  }
  func.func @transform_3(%arg0: i32, %arg1: i32, %arg2: i32) -> (i32, i32) {
    %c0_i32 = arith.constant 0 : i32
    return %arg0, %arg1 : i32, i32
  }
}

module attributes {stable_mosaic.version = 11 : i64} {
  func.func @_gru_step_kernel(%arg0: i32, %arg1: memref<1x8x384xbf16, #tpu.memory_space<vmem>>, %arg2: memref<128x384xbf16, #tpu.memory_space<vmem>>, %arg3: memref<1x128xf32, #tpu.memory_space<vmem>>, %arg4: memref<1x8x128xf32, #tpu.memory_space<vmem>>, %arg5: memref<8x128xf32, #tpu.memory_space<vmem>>) attributes {dimension_semantics = [#tpu.dimension_semantics<arbitrary>], iteration_bounds = array<i64: 4>, scalar_prefetch = 0 : i64, scratch_operands = 1 : i64, tpu.core_type = #tpu.core_type<tc>, window_params = [{transform_indices = @transform_0, window_bounds = array<i64: 1, 8, 384>}, {pipeline_mode = #tpu.pipeline_mode<synchronous>, transform_indices = @transform_1, window_bounds = array<i64: 128, 384>}, {pipeline_mode = #tpu.pipeline_mode<synchronous>, transform_indices = @transform_2, window_bounds = array<i64: 1, 128>}, {transform_indices = @transform_3, window_bounds = array<i64: 1, 8, 128>}]} {
    %c0_i32 = arith.constant 0 : i32
    %0 = arith.cmpi eq, %arg0, %c0_i32 : i32
    %1 = arith.extui %0 : i1 to i32
    %c0_i32_0 = arith.constant 0 : i32
    %2 = arith.cmpi ne, %1, %c0_i32_0 : i32
    scf.if %2 {
      %cst_17 = arith.constant 0.000000e+00 : f32
      %43 = vector.broadcast %cst_17 : f32 to vector<8x128xf32>
      %c0_18 = arith.constant 0 : index
      %c0_19 = arith.constant 0 : index
      %44 = vector.load %arg5[%c0_18, %c0_19] : memref<8x128xf32, #tpu.memory_space<vmem>>, vector<8x128xf32>
      tpu.vector_store %arg5[%c0_18, %c0_19], %43 {strides = array<i32>} : memref<8x128xf32, #tpu.memory_space<vmem>>, vector<8x128xf32>,
    } else {
    }
    %c0 = arith.constant 0 : index
    %c0_1 = arith.constant 0 : index
    %3 = vector.load %arg5[%c0, %c0_1] : memref<8x128xf32, #tpu.memory_space<vmem>>, vector<8x128xf32>
    %c0_2 = arith.constant 0 : index
    %c0_3 = arith.constant 0 : index
    %c0_4 = arith.constant 0 : index
    %4 = vector.load %arg1[%c0_2, %c0_3, %c0_4] : memref<1x8x384xbf16, #tpu.memory_space<vmem>>, vector<1x8x384xbf16>
    %5 = vector.shape_cast %4 : vector<1x8x384xbf16> to vector<8x384xbf16>
    %6 = arith.extf %5 : vector<8x384xbf16> to vector<8x384xf32>
    %7 = arith.truncf %3 : vector<8x128xf32> to vector<8x128xbf16>
    %c0_5 = arith.constant 0 : index
    %c0_6 = arith.constant 0 : index
    %8 = vector.load %arg2[%c0_5, %c0_6] : memref<128x384xbf16, #tpu.memory_space<vmem>>, vector<128x384xbf16>
    %cst = arith.constant dense<0.000000e+00> : vector<8x384xf32>
    %9 = tpu.matmul %7, %8, %cst {dimension_numbers = #tpu.dot_dimension_numbers<[1], [0], [0], [1], [0, 0, 1, 1], [], []>} : vector<8x128xbf16>, vector<128x384xbf16>, vector<8x384xf32> -> vector<8x384xf32>
    %10 = vector.extract_strided_slice %6 {offsets = [0, 0], sizes = [8, 128], strides = [1, 1]} : vector<8x384xf32> to vector<8x128xf32>
    %11 = vector.extract_strided_slice %9 {offsets = [0, 0], sizes = [8, 128], strides = [1, 1]} : vector<8x384xf32> to vector<8x128xf32>
    %12 = arith.addf %10, %11 : vector<8x128xf32>
    %13 = arith.negf %12 : vector<8x128xf32>
    %14 = math.exp %13 : vector<8x128xf32>
    %cst_7 = arith.constant 1.000000e+00 : f32
    %15 = vector.broadcast %cst_7 : f32 to vector<8x128xf32>
    %16 = arith.addf %15, %14 : vector<8x128xf32>
    %17 = arith.divf %15, %16 : vector<8x128xf32>
    %18 = vector.extract_strided_slice %6 {offsets = [0, 128], sizes = [8, 128], strides = [1, 1]} : vector<8x384xf32> to vector<8x128xf32>
    %19 = vector.extract_strided_slice %9 {offsets = [0, 128], sizes = [8, 128], strides = [1, 1]} : vector<8x384xf32> to vector<8x128xf32>
    %20 = arith.addf %18, %19 : vector<8x128xf32>
    %21 = arith.negf %20 : vector<8x128xf32>
    %22 = math.exp %21 : vector<8x128xf32>
    %cst_8 = arith.constant 1.000000e+00 : f32
    %23 = vector.broadcast %cst_8 : f32 to vector<8x128xf32>
    %24 = arith.addf %23, %22 : vector<8x128xf32>
    %25 = arith.divf %23, %24 : vector<8x128xf32>
    %26 = vector.extract_strided_slice %6 {offsets = [0, 256], sizes = [8, 128], strides = [1, 1]} : vector<8x384xf32> to vector<8x128xf32>
    %27 = vector.extract_strided_slice %9 {offsets = [0, 256], sizes = [8, 128], strides = [1, 1]} : vector<8x384xf32> to vector<8x128xf32>
    %c0_9 = arith.constant 0 : index
    %c0_10 = arith.constant 0 : index
    %28 = vector.load %arg3[%c0_9, %c0_10] : memref<1x128xf32, #tpu.memory_space<vmem>>, vector<1x128xf32>
    %29 = vector.broadcast %28 : vector<1x128xf32> to vector<8x128xf32>
    %30 = arith.addf %27, %29 : vector<8x128xf32>
    %31 = arith.mulf %17, %30 : vector<8x128xf32>
    %32 = arith.addf %26, %31 : vector<8x128xf32>
    %33 = math.tanh %32 : vector<8x128xf32>
    %cst_11 = arith.constant 1.000000e+00 : f32
    %34 = vector.broadcast %cst_11 : f32 to vector<8x128xf32>
    %35 = arith.subf %34, %25 : vector<8x128xf32>
    %36 = arith.mulf %35, %33 : vector<8x128xf32>
    %37 = arith.mulf %25, %3 : vector<8x128xf32>
    %38 = arith.addf %36, %37 : vector<8x128xf32>
    %c0_12 = arith.constant 0 : index
    %c0_13 = arith.constant 0 : index
    %39 = vector.load %arg5[%c0_12, %c0_13] : memref<8x128xf32, #tpu.memory_space<vmem>>, vector<8x128xf32>
    tpu.vector_store %arg5[%c0_12, %c0_13], %38 {strides = array<i32>} : memref<8x128xf32, #tpu.memory_space<vmem>>, vector<8x128xf32>,
    %c0_14 = arith.constant 0 : index
    %c0_15 = arith.constant 0 : index
    %c0_16 = arith.constant 0 : index
    %40 = vector.load %arg4[%c0_14, %c0_15, %c0_16] : memref<1x8x128xf32, #tpu.memory_space<vmem>>, vector<1x8x128xf32>
    %41 = vector.shape_cast %40 : vector<1x8x128xf32> to vector<8x128xf32>
    %42 = vector.shape_cast %38 : vector<8x128xf32> to vector<1x8x128xf32>
    tpu.vector_store %arg4[%c0_14, %c0_15, %c0_16], %42 {strides = array<i32>} : memref<1x8x128xf32, #tpu.memory_space<vmem>>, vector<1x8x128xf32>,
    return
  }
  func.func @transform_0(%arg0: i32) -> (i32, i32, i32) {
    %c0_i32 = arith.constant 0 : i32
    %c0_i32_0 = arith.constant 0 : i32
    %c0_i32_1 = arith.constant 0 : i32
    return %arg0, %c0_i32, %c0_i32_0 : i32, i32, i32
  }
  func.func @transform_1(%arg0: i32) -> (i32, i32) {
    %c0_i32 = arith.constant 0 : i32
    %c0_i32_0 = arith.constant 0 : i32
    %c0_i32_1 = arith.constant 0 : i32
    return %c0_i32, %c0_i32_0 : i32, i32
  }
  func.func @transform_2(%arg0: i32) -> (i32, i32) {
    %c0_i32 = arith.constant 0 : i32
    %c0_i32_0 = arith.constant 0 : i32
    %c0_i32_1 = arith.constant 0 : i32
    return %c0_i32, %c0_i32_0 : i32, i32
  }
  func.func @transform_3(%arg0: i32) -> (i32, i32, i32) {
    %c0_i32 = arith.constant 0 : i32
    %c0_i32_0 = arith.constant 0 : i32
    %c0_i32_1 = arith.constant 0 : i32
    return %arg0, %c0_i32, %c0_i32_0 : i32, i32, i32
  }
}

module attributes {stable_mosaic.version = 11 : i64} {
  func.func @_matmul_kernel(%arg0: i32, %arg1: i32, %arg2: i32, %arg3: memref<8x128xbf16, #tpu.memory_space<vmem>>, %arg4: memref<128x128xbf16, #tpu.memory_space<vmem>>, %arg5: memref<1x128xf32, #tpu.memory_space<vmem>>, %arg6: memref<8x128xf32, #tpu.memory_space<vmem>>, %arg7: memref<8x128xf32, #tpu.memory_space<vmem>>) attributes {dimension_semantics = [#tpu.dimension_semantics<parallel>, #tpu.dimension_semantics<parallel>, #tpu.dimension_semantics<arbitrary>], iteration_bounds = array<i64: 1, 1, 1>, scalar_prefetch = 0 : i64, scratch_operands = 1 : i64, tpu.core_type = #tpu.core_type<tc>, window_params = [{transform_indices = @transform_0, window_bounds = array<i64: 8, 128>}, {transform_indices = @transform_1, window_bounds = array<i64: 128, 128>}, {transform_indices = @transform_2, window_bounds = array<i64: 1, 128>}, {transform_indices = @transform_3, window_bounds = array<i64: 8, 128>}]} {
    %c0_i32 = arith.constant 0 : i32
    %0 = arith.cmpi eq, %arg2, %c0_i32 : i32
    %1 = arith.extui %0 : i1 to i32
    %c0_i32_0 = arith.constant 0 : i32
    %2 = arith.cmpi ne, %1, %c0_i32_0 : i32
    scf.if %2 {
      %cst_10 = arith.constant 0.000000e+00 : f32
      %12 = vector.broadcast %cst_10 : f32 to vector<8x128xf32>
      %c0_11 = arith.constant 0 : index
      %c0_12 = arith.constant 0 : index
      %13 = vector.load %arg7[%c0_11, %c0_12] : memref<8x128xf32, #tpu.memory_space<vmem>>, vector<8x128xf32>
      tpu.vector_store %arg7[%c0_11, %c0_12], %12 {strides = array<i32>} : memref<8x128xf32, #tpu.memory_space<vmem>>, vector<8x128xf32>,
    } else {
    }
    %c0 = arith.constant 0 : index
    %c0_1 = arith.constant 0 : index
    %3 = vector.load %arg7[%c0, %c0_1] : memref<8x128xf32, #tpu.memory_space<vmem>>, vector<8x128xf32>
    %c0_2 = arith.constant 0 : index
    %c0_3 = arith.constant 0 : index
    %4 = vector.load %arg3[%c0_2, %c0_3] : memref<8x128xbf16, #tpu.memory_space<vmem>>, vector<8x128xbf16>
    %c0_4 = arith.constant 0 : index
    %c0_5 = arith.constant 0 : index
    %5 = vector.load %arg4[%c0_4, %c0_5] : memref<128x128xbf16, #tpu.memory_space<vmem>>, vector<128x128xbf16>
    %cst = arith.constant dense<0.000000e+00> : vector<8x128xf32>
    %6 = tpu.matmul %4, %5, %cst {dimension_numbers = #tpu.dot_dimension_numbers<[1], [0], [0], [1], [0, 0, 1, 1], [], []>} : vector<8x128xbf16>, vector<128x128xbf16>, vector<8x128xf32> -> vector<8x128xf32>
    %7 = arith.addf %3, %6 : vector<8x128xf32>
    %c0_6 = arith.constant 0 : index
    %c0_7 = arith.constant 0 : index
    %8 = vector.load %arg7[%c0_6, %c0_7] : memref<8x128xf32, #tpu.memory_space<vmem>>, vector<8x128xf32>
    tpu.vector_store %arg7[%c0_6, %c0_7], %7 {strides = array<i32>} : memref<8x128xf32, #tpu.memory_space<vmem>>, vector<8x128xf32>,
    %c0_i32_8 = arith.constant 0 : i32
    %9 = arith.cmpi eq, %arg2, %c0_i32_8 : i32
    %10 = arith.extui %9 : i1 to i32
    %c0_i32_9 = arith.constant 0 : i32
    %11 = arith.cmpi ne, %10, %c0_i32_9 : i32
    scf.if %11 {
      %c0_10 = arith.constant 0 : index
      %c0_11 = arith.constant 0 : index
      %12 = vector.load %arg7[%c0_10, %c0_11] : memref<8x128xf32, #tpu.memory_space<vmem>>, vector<8x128xf32>
      %c0_12 = arith.constant 0 : index
      %c0_13 = arith.constant 0 : index
      %13 = vector.load %arg5[%c0_12, %c0_13] : memref<1x128xf32, #tpu.memory_space<vmem>>, vector<1x128xf32>
      %14 = vector.broadcast %13 : vector<1x128xf32> to vector<8x128xf32>
      %15 = arith.addf %12, %14 : vector<8x128xf32>
      %c0_14 = arith.constant 0 : index
      %c0_15 = arith.constant 0 : index
      %16 = vector.load %arg6[%c0_14, %c0_15] : memref<8x128xf32, #tpu.memory_space<vmem>>, vector<8x128xf32>
      tpu.vector_store %arg6[%c0_14, %c0_15], %15 {strides = array<i32>} : memref<8x128xf32, #tpu.memory_space<vmem>>, vector<8x128xf32>,
    } else {
    }
    return
  }
  func.func @transform_0(%arg0: i32, %arg1: i32, %arg2: i32) -> (i32, i32) {
    %c0_i32 = arith.constant 0 : i32
    return %arg0, %arg2 : i32, i32
  }
  func.func @transform_1(%arg0: i32, %arg1: i32, %arg2: i32) -> (i32, i32) {
    %c0_i32 = arith.constant 0 : i32
    return %arg2, %arg1 : i32, i32
  }
  func.func @transform_2(%arg0: i32, %arg1: i32, %arg2: i32) -> (i32, i32) {
    %c0_i32 = arith.constant 0 : i32
    %c0_i32_0 = arith.constant 0 : i32
    return %c0_i32, %arg1 : i32, i32
  }
  func.func @transform_3(%arg0: i32, %arg1: i32, %arg2: i32) -> (i32, i32) {
    %c0_i32 = arith.constant 0 : i32
    return %arg0, %arg1 : i32, i32
  }
}

</mosaic_0001>

<llo_original>
// kernel: cnn_gru_forward.7
$region0: #{cnn_gru_forward.7}
  #allocation0 [shape = 'u32[]', space=smem, size = 0x4, offset = 0x4, fixed_abs, tag = 'smem constant byte address 0x4 - core index']
  #allocation1 [shape = 'u32[144,128]{1,0:T(1,128)}', space=vmem, size = 0x12000, scoped, tag = 'internal scratch']
  #allocation2 [shape = 'f32[256,128]{1,0:T(8,128)}', space=vmem, size = 0x20000, scoped, tag = 'scratch operand']
  %s0 = inlined_call_operand.vmem [shape: bf16[2048,32], index: 0, kind: input, shape index: {}]
  %s1 = inlined_call_operand.vmem [shape: bf16[32,128], index: 1, kind: input, shape index: {}]
  %s2 = inlined_call_operand.vmem [shape: f32[1,128], index: 2, kind: input, shape index: {}]
  %s3 = inlined_call_operand.vmem [shape: bf16[2048,128], index: 3, kind: output, shape index: {}]
  %s4 = sld [smem:[#allocation0]]
  $region53: #{cnn_gru_forward.7} parent=0
    _
  %s6 = ssub.s32 1, %s4
  %s7 = scalar_select 0, %s6, %s4
  loop: start=0, step=1, limit=10
  $region2: #{cnn_gru_forward.7} parent=0 // loop_pre_header
    _
  $region3: #{cnn_gru_forward.7} parent=0 // loop_header
    %s9 = sphi 0, %s13
    %p10 = scmp.ge.s32.totalorder %s9, 10
    %s16 = sphi 0, %s35
    %s17 = sphi 0, %s31
    %s18 = sphi 0, %s27
    %s19 = sphi 0, %s16
    %s20 = sphi 0, %s17
    %s21 = sphi 0, %s18
    %s22 = sphi 0, %s19
    %s23 = sphi 0, %s20
    %s24 = sphi 0, %s21
    %s40 = sphi 0, %s42
    %s43 = sphi 0, %s40
    %s44 = sphi 0, %s43
    %s60 = sphi 0, %s44
    %s68 = sphi 0, %s70
    %s71 = sphi 0, %s68
    %s72 = sphi 0, %s71
    %s88 = sphi 0, %s72
    %s94 = sphi 0, %s96
    %s97 = sphi 0, %s94
    %s98 = sphi 0, %s97
    %s114 = sphi 0, %s98
    %s122 = sphi 0, %s124
    %s125 = sphi 0, %s122
    %s126 = sphi 0, %s125
    %s142 = sphi 0, %s126
  $region4: #{cnn_gru_forward.7} parent=0 // loop_header_branch
    %12 = sbr.rel (%p10) target = $region8
  $region5: #{cnn_gru_forward.7} parent=0 // loop_body
    %s14 = ssub.s32 %s9, 1
    %s15 = ssub.s32 %s9, 2
    %s25 = sadd.s32 1, %s18
    %p26 = scmp.ge.s32.totalorder %s25, 1
    %s27 = scalar_select %p26, 0, %s25
    %s28 = sadd.s32 1, %s17
    %s29 = scalar_select %p26, %s28, %s17
    %p30 = scmp.ge.s32.totalorder %s29, 1
    %s31 = scalar_select %p30, 0, %s29
    %s32 = sadd.s32 1, %s16
    %s33 = scalar_select %p30, %s32, %s16
    %p34 = scmp.ge.s32.totalorder %s33, 8
    %s35 = scalar_select %p34, 0, %s33
    %s36 = ssub.s32 %s16, %s35
    %s37 = ssub.s32 %s18, %s27
    %s38 = sor.u32 %s36, %s37
    %p39 = scmp.eq.s32.totalorder %s38, 0
    %s41 = sadd.s32 %s40, 1
    %s42 = scalar_select %p39, %s40, %s41
    %p45 = pneg %p39
    %p46 = scmp.eq.s32.totalorder %s9, 7
    %p47 = por %p45, %p46
    %p48 = scmp.ne.s32.totalorder %s40, %s43
    %p49 = scmp.eq.s32.totalorder %s9, 0
    %p50 = por %p48, %p49
    %p51 = scmp.ne.s32.totalorder %s40, %s43
    %p52 = scmp.eq.s32.totalorder %s14, 7
    %p53 = por %p51, %p52
    %p54 = scmp.ne.s32.totalorder %s43, %s44
    %p55 = scmp.eq.s32.totalorder %s14, 0
    %p56 = por %p54, %p55
    %p57 = scmp.ne.s32.totalorder %s43, %s44
    %p58 = scmp.eq.s32.totalorder %s15, 7
    %p59 = por %p57, %p58
    %p61 = scmp.ne.s32.totalorder %s44, %s60
    %p62 = scmp.eq.s32.totalorder %s15, 0
    %p63 = por %p61, %p62
    %s64 = ssub.s32 %s18, %s27
    %s65 = ssub.s32 %s17, %s31
    %s66 = sor.u32 %s64, %s65
    %p67 = scmp.eq.s32.totalorder %s66, 0
    %s69 = sadd.s32 %s68, 1
    %s70 = scalar_select %p67, %s68, %s69
    %p73 = pneg %p67
    %p74 = scmp.eq.s32.totalorder %s9, 7
    %p75 = por %p73, %p74
    %p76 = scmp.ne.s32.totalorder %s68, %s71
    %p77 = scmp.eq.s32.totalorder %s9, 0
    %p78 = por %p76, %p77
    %p79 = scmp.ne.s32.totalorder %s68, %s71
    %p80 = scmp.eq.s32.totalorder %s14, 7
    %p81 = por %p79, %p80
    %p82 = scmp.ne.s32.totalorder %s71, %s72
    %p83 = scmp.eq.s32.totalorder %s14, 0
    %p84 = por %p82, %p83
    %p85 = scmp.ne.s32.totalorder %s71, %s72
    %p86 = scmp.eq.s32.totalorder %s15, 7
    %p87 = por %p85, %p86
    %p89 = scmp.ne.s32.totalorder %s72, %s88
    %p90 = scmp.eq.s32.totalorder %s15, 0
    %p91 = por %p89, %p90
    %s92 = ssub.s32 %s17, %s31
    %p93 = scmp.eq.s32.totalorder %s92, 0
    %s95 = sadd.s32 %s94, 1
    %s96 = scalar_select %p93, %s94, %s95
    %p99 = pneg %p93
    %p100 = scmp.eq.s32.totalorder %s9, 7
    %p101 = por %p99, %p100
    %p102 = scmp.ne.s32.totalorder %s94, %s97
    %p103 = scmp.eq.s32.totalorder %s9, 0
    %p104 = por %p102, %p103
    %p105 = scmp.ne.s32.totalorder %s94, %s97
    %p106 = scmp.eq.s32.totalorder %s14, 7
    %p107 = por %p105, %p106
    %p108 = scmp.ne.s32.totalorder %s97, %s98
    %p109 = scmp.eq.s32.totalorder %s14, 0
    %p110 = por %p108, %p109
    %p111 = scmp.ne.s32.totalorder %s97, %s98
    %p112 = scmp.eq.s32.totalorder %s15, 7
    %p113 = por %p111, %p112
    %p115 = scmp.ne.s32.totalorder %s98, %s114
    %p116 = scmp.eq.s32.totalorder %s15, 0
    %p117 = por %p115, %p116
    %s118 = ssub.s32 %s16, %s35
    %s119 = ssub.s32 %s17, %s31
    %s120 = sor.u32 %s118, %s119
    %p121 = scmp.eq.s32.totalorder %s120, 0
    %s123 = sadd.s32 %s122, 1
    %s124 = scalar_select %p121, %s122, %s123
    %p127 = pneg %p121
    %p128 = scmp.eq.s32.totalorder %s9, 7
    %p129 = por %p127, %p128
    %p130 = scmp.ne.s32.totalorder %s122, %s125
    %p131 = scmp.eq.s32.totalorder %s9, 0
    %p132 = por %p130, %p131
    %p133 = scmp.ne.s32.totalorder %s122, %s125
    %p134 = scmp.eq.s32.totalorder %s14, 7
    %p135 = por %p133, %p134
    %p136 = scmp.ne.s32.totalorder %s125, %s126
    %p137 = scmp.eq.s32.totalorder %s14, 0
    %p138 = por %p136, %p137
    %p139 = scmp.ne.s32.totalorder %s125, %s126
    %p140 = scmp.eq.s32.totalorder %s15, 7
    %p141 = por %p139, %p140
    %p143 = scmp.ne.s32.totalorder %s126, %s142
    %p144 = scmp.eq.s32.totalorder %s15, 0
    %p145 = por %p143, %p144
    %p146 = scmp.le.s32.totalorder 1, %s9
    %p147 = scmp.lt.s32.totalorder %s9, 9
    %p148 = pnand %p146, %p147
    %p149 = pneg %p148
    // Predicated region
    $region9: #{cnn_gru_forward.7} parent=5 // pred_check
      _
    $region10: #{cnn_gru_forward.7} parent=5 // pred_check_branch
      %151 = sbr.rel (%p148) target = $region12
    $region11: #{cnn_gru_forward.7} parent=5 // pred_region
      %s152 = ssub.s32 %s9, 1
      // Predicated region
      $region13: #{cnn_gru_forward.7} parent=11 // pred_check
        %p153 = pneg %p84
      $region14: #{cnn_gru_forward.7} parent=11 // pred_check_branch
        %155 = sbr.rel (%p153) target = $region16
      $region15: #{cnn_gru_forward.7} parent=11 // pred_region
        %s156 = smul.u32 4, %s21
        %p157 = scmp.lt.s32.totalorder %s156, 3
        %s158 = scalar_select %p157, %s156, 3
        %p159 = scmp.lt.s32.totalorder %s20, 0
        %s160 = scalar_select %p159, %s20, 0
        %s161 = sadd.s32 %s160, %s158
        %s162 = smul.addr %s161, 4
        %s163 = scalar_lea.vmem %s1, %s162
        %s164 = smul.u32 4, %s21
      $region16: #{cnn_gru_forward.7} parent=11 // pred_fallthru
        _
      // Predicated region
      $region17: #{cnn_gru_forward.7} parent=11 // pred_check
        %p165 = pneg %p110
      $region18: #{cnn_gru_forward.7} parent=11 // pred_check_branch
        %167 = sbr.rel (%p165) target = $region20
      $region19: #{cnn_gru_forward.7} parent=11 // pred_region
        %p168 = scmp.lt.s32.totalorder %s20, 0
        %s169 = scalar_select %p168, %s20, 0
        %s170 = scalar_lea.vmem %s2, %s169
      $region20: #{cnn_gru_forward.7} parent=11 // pred_fallthru
        _
    $region12: #{cnn_gru_forward.7} parent=5 // pred_fallthru
      _
    %p171 = scmp.lt.s32.totalorder %s9, 8
    // Predicated region
    $region21: #{cnn_gru_forward.7} parent=5 // pred_check
      %p172 = pneg %p171
    $region22: #{cnn_gru_forward.7} parent=5 // pred_check_branch
      %174 = sbr.rel (%p172) target = $region24
    $region23: #{cnn_gru_forward.7} parent=5 // pred_region
      // Predicated region
      $region25: #{cnn_gru_forward.7} parent=23 // pred_check
        %p175 = pneg %p50
      $region26: #{cnn_gru_forward.7} parent=23 // pred_check_branch
        %177 = sbr.rel (%p175) target = $region28
      $region27: #{cnn_gru_forward.7} parent=23 // pred_region
        %s178 = smul.u32 32, %s16
        %p179 = scmp.lt.s32.totalorder %s178, 255
        %s180 = scalar_select %p179, %s178, 255
        %p181 = scmp.lt.s32.totalorder %s18, 0
        %s182 = scalar_select %p181, %s18, 0
        %s183 = sadd.s32 %s182, %s180
        %s184 = smul.addr %s183, 4
        %s185 = scalar_lea.vmem %s0, %s184
        %s186 = smul.u32 32, %s16
      $region28: #{cnn_gru_forward.7} parent=23 // pred_fallthru
        _
    $region24: #{cnn_gru_forward.7} parent=5 // pred_fallthru
      _
    %p187 = scmp.le.s32.totalorder 1, %s9
    %p188 = scmp.lt.s32.totalorder %s9, 9
    %p189 = pnand %p187, %p188
    %p190 = pneg %p189
    // Predicated region
    $region29: #{cnn_gru_forward.7} parent=5 // pred_check
      _
    $region30: #{cnn_gru_forward.7} parent=5 // pred_check_branch
      %192 = sbr.rel (%p189) target = $region32
    $region31: #{cnn_gru_forward.7} parent=5 // pred_region
      %s193 = ssub.s32 %s9, 1
      %s194 = smul.u32 32, %s19
      %p195 = scmp.lt.s32.totalorder %s194, 255
      %s196 = scalar_select %p195, %s194, 255
      %p197 = scmp.lt.s32.totalorder %s21, 0
      %s198 = scalar_select %p197, %s21, 0
      %s199 = sadd.s32 %s198, %s196
      %s200 = smul.addr %s199, 4
      %s201 = scalar_lea.vmem %s0, %s200
      %p202 = pneg %p56
      %p203 = pneg %p53
      %s204 = smul.u32 4, %s21
      %p205 = scmp.lt.s32.totalorder %s204, 3
      %s206 = scalar_select %p205, %s204, 3
      %p207 = scmp.lt.s32.totalorder %s20, 0
      %s208 = scalar_select %p207, %s20, 0
      %s209 = sadd.s32 %s208, %s206
      %s210 = smul.addr %s209, 4
      %s211 = scalar_lea.vmem %s1, %s210
      %p212 = pneg %p84
      %p213 = pneg %p81
      %p214 = scmp.lt.s32.totalorder %s20, 0
      %s215 = scalar_select %p214, %s20, 0
      %s216 = scalar_lea.vmem %s2, %s215
      %p217 = pneg %p110
      %p218 = pneg %p107
      %p219 = pneg %p138
      %p220 = pneg %p135
      %s221 = smul.u32 32, %s19
      %p222 = scmp.lt.s32.totalorder %s221, 255
      %s223 = scalar_select %p222, %s221, 255
      %p224 = scmp.lt.s32.totalorder %s20, 0
      %s225 = scalar_select %p224, %s20, 0
      %s226 = sadd.s32 %s225, %s223
      %s227 = smul.addr %s226, 4
      %s228 = scalar_lea.vmem %s3, %s227
      %s229 = smul.u32 32, %s19
      %p230 = scmp.lt.s32.totalorder %s229, 255
      %s231 = scalar_select %p230, %s229, 255
      %p232 = scmp.lt.s32.totalorder %s21, 0
      %s233 = scalar_select %p232, %s21, 0
      %s234 = sadd.s32 %s233, %s231
      %s235 = smul.addr %s234, 4
      %s236 = scalar_lea.vmem %s0, %s235
      %s237 = smul.u32 32, %s19
      %s238 = smul.u32 4, %s21
      %p239 = scmp.lt.s32.totalorder %s238, 3
      %s240 = scalar_select %p239, %s238, 3
      %p241 = scmp.lt.s32.totalorder %s20, 0
      %s242 = scalar_select %p241, %s20, 0
      %s243 = sadd.s32 %s242, %s240
      %s244 = smul.addr %s243, 4
      %s245 = scalar_lea.vmem %s1, %s244
      %s246 = smul.u32 4, %s21
      %p247 = scmp.lt.s32.totalorder %s20, 0
      %s248 = scalar_select %p247, %s20, 0
      %s249 = scalar_lea.vmem %s2, %s248
      %s250 = smul.u32 32, %s19
      %p251 = scmp.lt.s32.totalorder %s250, 255
      %s252 = scalar_select %p251, %s250, 255
      %p253 = scmp.lt.s32.totalorder %s20, 0
      %s254 = scalar_select %p253, %s20, 0
      %s255 = sadd.s32 %s254, %s252
      %s256 = smul.addr %s255, 4
      %s257 = scalar_lea.vmem %s3, %s256
      %s258 = smul.u32 32, %s19
      %p260 = scmp.eq.s32.totalorder %s21, 0
      // Predicated region
      $region33: #{cnn_gru_forward.7} parent=31 // pred_check
        %p261 = pneg %p260
      $region34: #{cnn_gru_forward.7} parent=31 // pred_check_branch
        %263 = sbr.rel (%p261) target = $region36
      $region35: #{cnn_gru_forward.7} parent=31 // pred_region
        %264 = vst [vmem:[#allocation2] sm:$0xff] 0.0
        %265 = vst [vmem:[#allocation2 + $0x8] sm:$0xff] 0.0
        %266 = vst [vmem:[#allocation2 + $0x10] sm:$0xff] 0.0
        %267 = vst [vmem:[#allocation2 + $0x18] sm:$0xff] 0.0
        %268 = vst [vmem:[#allocation2 + $0x20] sm:$0xff] 0.0
        %269 = vst [vmem:[#allocation2 + $0x28] sm:$0xff] 0.0
        %270 = vst [vmem:[#allocation2 + $0x30] sm:$0xff] 0.0
        %271 = vst [vmem:[#allocation2 + $0x38] sm:$0xff] 0.0
        %272 = vst [vmem:[#allocation2 + $0x40] sm:$0xff] 0.0
        %273 = vst [vmem:[#allocation2 + $0x48] sm:$0xff] 0.0
        %274 = vst [vmem:[#allocation2 + $0x50] sm:$0xff] 0.0
        %275 = vst [vmem:[#allocation2 + $0x58] sm:$0xff] 0.0
        %276 = vst [vmem:[#allocation2 + $0x60] sm:$0xff] 0.0
        %277 = vst [vmem:[#allocation2 + $0x68] sm:$0xff] 0.0
        %278 = vst [vmem:[#allocation2 + $0x70] sm:$0xff] 0.0
        %279 = vst [vmem:[#allocation2 + $0x78] sm:$0xff] 0.0
        %280 = vst [vmem:[#allocation2 + $0x80] sm:$0xff] 0.0
        %281 = vst [vmem:[#allocation2 + $0x88] sm:$0xff] 0.0
        %282 = vst [vmem:[#allocation2 + $0x90] sm:$0xff] 0.0
        %283 = vst [vmem:[#allocation2 + $0x98] sm:$0xff] 0.0
        %284 = vst [vmem:[#allocation2 + $0xa0] sm:$0xff] 0.0
        %285 = vst [vmem:[#allocation2 + $0xa8] sm:$0xff] 0.0
        %286 = vst [vmem:[#allocation2 + $0xb0] sm:$0xff] 0.0
        %287 = vst [vmem:[#allocation2 + $0xb8] sm:$0xff] 0.0
        %288 = vst [vmem:[#allocation2 + $0xc0] sm:$0xff] 0.0
        %289 = vst [vmem:[#allocation2 + $0xc8] sm:$0xff] 0.0
        %290 = vst [vmem:[#allocation2 + $0xd0] sm:$0xff] 0.0
        %291 = vst [vmem:[#allocation2 + $0xd8] sm:$0xff] 0.0
        %292 = vst [vmem:[#allocation2 + $0xe0] sm:$0xff] 0.0
        %293 = vst [vmem:[#allocation2 + $0xe8] sm:$0xff] 0.0
        %294 = vst [vmem:[#allocation2 + $0xf0] sm:$0xff] 0.0
        %295 = vst [vmem:[#allocation2 + $0xf8] sm:$0xff] 0.0
      $region36: #{cnn_gru_forward.7} parent=31 // pred_fallthru
        _
      %v296 = vld [vmem:[#allocation2] sm:$0xff]
      %v297 = vld [vmem:[#allocation2 + $0x8] sm:$0xff]
      %v298 = vld [vmem:[#allocation2 + $0x10] sm:$0xff]
      %v299 = vld [vmem:[#allocation2 + $0x18] sm:$0xff]
      %v300 = vld [vmem:[#allocation2 + $0x20] sm:$0xff]
      %v301 = vld [vmem:[#allocation2 + $0x28] sm:$0xff]
      %v302 = vld [vmem:[#allocation2 + $0x30] sm:$0xff]
      %v303 = vld [vmem:[#allocation2 + $0x38] sm:$0xff]
      %v304 = vld [vmem:[#allocation2 + $0x40] sm:$0xff]
      %v305 = vld [vmem:[#allocation2 + $0x48] sm:$0xff]
      %v306 = vld [vmem:[#allocation2 + $0x50] sm:$0xff]
      %v307 = vld [vmem:[#allocation2 + $0x58] sm:$0xff]
      %v308 = vld [vmem:[#allocation2 + $0x60] sm:$0xff]
      %v309 = vld [vmem:[#allocation2 + $0x68] sm:$0xff]
      %v310 = vld [vmem:[#allocation2 + $0x70] sm:$0xff]
      %v311 = vld [vmem:[#allocation2 + $0x78] sm:$0xff]
      %v312 = vld [vmem:[#allocation2 + $0x80] sm:$0xff]
      %v313 = vld [vmem:[#allocation2 + $0x88] sm:$0xff]
      %v314 = vld [vmem:[#allocation2 + $0x90] sm:$0xff]
      %v315 = vld [vmem:[#allocation2 + $0x98] sm:$0xff]
      %v316 = vld [vmem:[#allocation2 + $0xa0] sm:$0xff]
      %v317 = vld [vmem:[#allocation2 + $0xa8] sm:$0xff]
      %v318 = vld [vmem:[#allocation2 + $0xb0] sm:$0xff]
      %v319 = vld [vmem:[#allocation2 + $0xb8] sm:$0xff]
      %v320 = vld [vmem:[#allocation2 + $0xc0] sm:$0xff]
      %v321 = vld [vmem:[#allocation2 + $0xc8] sm:$0xff]
      %v322 = vld [vmem:[#allocation2 + $0xd0] sm:$0xff]
      %v323 = vld [vmem:[#allocation2 + $0xd8] sm:$0xff]
      %v324 = vld [vmem:[#allocation2 + $0xe0] sm:$0xff]
      %v325 = vld [vmem:[#allocation2 + $0xe8] sm:$0xff]
      %v326 = vld [vmem:[#allocation2 + $0xf0] sm:$0xff]
      %v327 = vld [vmem:[#allocation2 + $0xf8] sm:$0xff]
      %v328 = vld [vmem:[%s236] sm:$0xf]
      %v329 = vld [vmem:[%s236 + $0x4] sm:$0xf]
      %v330 = vld [vmem:[%s236 + $0x8] sm:$0xf]
      %v331 = vld [vmem:[%s236 + $0xc] sm:$0xf]
      %v332 = vld [vmem:[%s236 + $0x10] sm:$0xf]
      %v333 = vld [vmem:[%s236 + $0x14] sm:$0xf]
      %v334 = vld [vmem:[%s236 + $0x18] sm:$0xf]
      %v335 = vld [vmem:[%s236 + $0x1c] sm:$0xf]
      %v336 = vld [vmem:[%s236 + $0x20] sm:$0xf]
      %v337 = vld [vmem:[%s236 + $0x24] sm:$0xf]
      %v338 = vld [vmem:[%s236 + $0x28] sm:$0xf]
      %v339 = vld [vmem:[%s236 + $0x2c] sm:$0xf]
      %v340 = vld [vmem:[%s236 + $0x30] sm:$0xf]
      %v341 = vld [vmem:[%s236 + $0x34] sm:$0xf]
      %v342 = vld [vmem:[%s236 + $0x38] sm:$0xf]
      %v343 = vld [vmem:[%s236 + $0x3c] sm:$0xf]
      %v344 = vld [vmem:[%s236 + $0x40] sm:$0xf]
      %v345 = vld [vmem:[%s236 + $0x44] sm:$0xf]
      %v346 = vld [vmem:[%s236 + $0x48] sm:$0xf]
      %v347 = vld [vmem:[%s236 + $0x4c] sm:$0xf]
      %v348 = vld [vmem:[%s236 + $0x50] sm:$0xf]
      %v349 = vld [vmem:[%s236 + $0x54] sm:$0xf]
      %v350 = vld [vmem:[%s236 + $0x58] sm:$0xf]
      %v351 = vld [vmem:[%s236 + $0x5c] sm:$0xf]
      %v352 = vld [vmem:[%s236 + $0x60] sm:$0xf]
      %v353 = vld [vmem:[%s236 + $0x64] sm:$0xf]
      %v354 = vld [vmem:[%s236 + $0x68] sm:$0xf]
      %v355 = vld [vmem:[%s236 + $0x6c] sm:$0xf]
      %v356 = vld [vmem:[%s236 + $0x70] sm:$0xf]
      %v357 = vld [vmem:[%s236 + $0x74] sm:$0xf]
      %v358 = vld [vmem:[%s236 + $0x78] sm:$0xf]
      %v359 = vld [vmem:[%s236 + $0x7c] sm:$0xf]
      %v360 = vld [vmem:[%s245] sm:$0xf]
      %v361 = vld [vmem:[%s245 + $0x4] sm:$0xf]
      %v362 = vld [vmem:[%s245 + $0x8] sm:$0xf]
      %v363 = vld [vmem:[%s245 + $0xc] sm:$0xf]
      %v396 = vunpack.c.l.b16 %v328
      %v397 = vunpack.c.l.b16 %v329
      %v398 = vunpack.c.l.b16 %v330
      %v399 = vunpack.c.l.b16 %v331
      %v400 = vunpack.c.l.b16 %v332
      %v401 = vunpack.c.l.b16 %v333
      %v402 = vunpack.c.l.b16 %v334
      %v403 = vunpack.c.l.b16 %v335
      %v404 = vunpack.c.l.b16 %v336
      %v405 = vunpack.c.l.b16 %v337
      %v406 = vunpack.c.l.b16 %v338
      %v407 = vunpack.c.l.b16 %v339
      %v408 = vunpack.c.l.b16 %v340
      %v409 = vunpack.c.l.b16 %v341
      %v410 = vunpack.c.l.b16 %v342
      %v411 = vunpack.c.l.b16 %v343
      %v412 = vunpack.c.l.b16 %v344
      %v413 = vunpack.c.l.b16 %v345
      %v414 = vunpack.c.l.b16 %v346
      %v415 = vunpack.c.l.b16 %v347
      %v416 = vunpack.c.l.b16 %v348
      %v417 = vunpack.c.l.b16 %v349
      %v418 = vunpack.c.l.b16 %v350
      %v419 = vunpack.c.l.b16 %v351
      %v420 = vunpack.c.l.b16 %v352
      %v421 = vunpack.c.l.b16 %v353
      %v422 = vunpack.c.l.b16 %v354
      %v423 = vunpack.c.l.b16 %v355
      %v424 = vunpack.c.l.b16 %v356
      %v425 = vunpack.c.l.b16 %v357
      %v426 = vunpack.c.l.b16 %v358
      %v427 = vunpack.c.l.b16 %v359
      %v428 = vpack.c.b16 %v397, %v396
      %v429 = vpack.c.b16 %v399, %v398
      %v430 = vpack.c.b16 %v401, %v400
      %v431 = vpack.c.b16 %v403, %v402
      %v432 = vpack.c.b16 %v405, %v404
      %v433 = vpack.c.b16 %v407, %v406
      %v434 = vpack.c.b16 %v409, %v408
      %v435 = vpack.c.b16 %v411, %v410
      %v436 = vpack.c.b16 %v413, %v412
      %v437 = vpack.c.b16 %v415, %v414
      %v438 = vpack.c.b16 %v417, %v416
      %v439 = vpack.c.b16 %v419, %v418
      %v440 = vpack.c.b16 %v421, %v420
      %v441 = vpack.c.b16 %v423, %v422
      %v442 = vpack.c.b16 %v425, %v424
      %v443 = vpack.c.b16 %v427, %v426
      %v448 = vunpack.c.l.b16 %v360
      %v449 = vunpack.c.l.b16 %v361
      %v450 = vunpack.c.l.b16 %v362
      %v451 = vunpack.c.l.b16 %v363
      %v452 = vpack.c.b16 %v449, %v448
      %v453 = vpack.c.b16 %v451, %v450
      %vm456 = vcmask 261120
      %v458 = vsel %vm456, %v428, 0
      %v461 = vsel %vm456, %v429, 0
      %v464 = vsel %vm456, %v430, 0
      %v467 = vsel %vm456, %v431, 0
      %v470 = vsel %vm456, %v432, 0
      %v473 = vsel %vm456, %v433, 0
      %v476 = vsel %vm456, %v434, 0
      %v479 = vsel %vm456, %v435, 0
      %v482 = vsel %vm456, %v436, 0
      %v485 = vsel %vm456, %v437, 0
      %v488 = vsel %vm456, %v438, 0
      %v491 = vsel %vm456, %v439, 0
      %v494 = vsel %vm456, %v440, 0
      %v497 = vsel %vm456, %v441, 0
      %v500 = vsel %vm456, %v442, 0
      %v503 = vsel %vm456, %v443, 0
      %505 = vmatprep.subr.bf16.mxu0 0
      %506 = vmatpush1.bf16.msra.mxu0 0
      %507 = vmatprep.subr.bf16.mxu0 0
      %508 = vmatpush1.bf16.msra.mxu0 0
      %509 = vmatprep.subr.bf16.mxu0 0
      %510 = vmatpush1.bf16.msra.mxu0 0
      %511 = vmatprep.subr.bf16.mxu0 0
      %512 = vmatpush1.bf16.msra.mxu0 0
      %513 = vmatprep.subr.bf16.mxu0 0
      %514 = vmatpush1.bf16.msra.mxu0 0
      %515 = vmatprep.subr.bf16.mxu0 0
      %516 = vmatpush1.bf16.msra.mxu0 0
      %517 = vmatprep.subr.bf16.mxu0 0
      %518 = vmatpush1.bf16.msra.mxu0 %v453
      %519 = vmatprep.subr.bf16.mxu0 0
      %520 = vmatpush1.bf16.msra.mxu0 %v452
      %521 = vmatprep.subr.bf16.mxu0 0
      %522 = vmatpush2.bf16.msra.mxu0 0
      %523 = vmatprep.subr.bf16.mxu0 0
      %524 = vmatpush2.bf16.msra.mxu0 0
      %525 = vmatprep.subr.bf16.mxu0 0
      %526 = vmatpush2.bf16.msra.mxu0 0
      %527 = vmatprep.subr.bf16.mxu0 0
      %528 = vmatpush2.bf16.msra.mxu0 0
      %529 = vmatprep.subr.bf16.mxu0 0
      %530 = vmatpush2.bf16.msra.mxu0 0
      %531 = vmatprep.subr.bf16.mxu0 0
      %532 = vmatpush2.bf16.msra.mxu0 0
      %533 = vmatprep.subr.bf16.mxu0 0
      %534 = vmatpush2.bf16.msra.mxu0 0
      %535 = vmatprep.subr.bf16.mxu0 0
      %536 = vmatpush2.bf16.msra.mxu0 0
      %537 = vmatprep.mubr.bf16.mxu0 0
      %538 = vmatmul.mubr.bf16.gmra.mxu0 %v458
      %v539 = vpop.f32.mrf.mxu0
      %v540 = vadd.f32 0.0, %v539
      %v541 = vpop.f32.mrf.mxu0
      %v542 = vpop.f32.mrf.mxu0
      %v543 = vadd.f32 0.0, %v542
      %v544 = vpop.f32.mrf.mxu0
      %545 = vmatprep.mubr.bf16.mxu0 0
      %546 = vmatmul.mubr.bf16.gmra.mxu0 %v461
      %v547 = vpop.f32.mrf.mxu0
      %v548 = vadd.f32 0.0, %v547
      %v549 = vpop.f32.mrf.mxu0
      %v550 = vpop.f32.mrf.mxu0
      %v551 = vadd.f32 0.0, %v550
      %v552 = vpop.f32.mrf.mxu0
      %553 = vmatprep.mubr.bf16.mxu0 0
      %554 = vmatmul.mubr.bf16.gmra.mxu0 %v464
      %v555 = vpop.f32.mrf.mxu0
      %v556 = vadd.f32 0.0, %v555
      %v557 = vpop.f32.mrf.mxu0
      %v558 = vpop.f32.mrf.mxu0
      %v559 = vadd.f32 0.0, %v558
      %v560 = vpop.f32.mrf.mxu0
      %561 = vmatprep.mubr.bf16.mxu0 0
      %562 = vmatmul.mubr.bf16.gmra.mxu0 %v467
      %v563 = vpop.f32.mrf.mxu0
      %v564 = vadd.f32 0.0, %v563
      %v565 = vpop.f32.mrf.mxu0
      %v566 = vpop.f32.mrf.mxu0
      %v567 = vadd.f32 0.0, %v566
      %v568 = vpop.f32.mrf.mxu0
      %569 = vmatprep.mubr.bf16.mxu0 0
      %570 = vmatmul.mubr.bf16.gmra.mxu0 %v470
      %v571 = vpop.f32.mrf.mxu0
      %v572 = vadd.f32 0.0, %v571
      %v573 = vpop.f32.mrf.mxu0
      %v574 = vpop.f32.mrf.mxu0
      %v575 = vadd.f32 0.0, %v574
      %v576 = vpop.f32.mrf.mxu0
      %577 = vmatprep.mubr.bf16.mxu0 0
      %578 = vmatmul.mubr.bf16.gmra.mxu0 %v473
      %v579 = vpop.f32.mrf.mxu0
      %v580 = vadd.f32 0.0, %v579
      %v581 = vpop.f32.mrf.mxu0
      %v582 = vpop.f32.mrf.mxu0
      %v583 = vadd.f32 0.0, %v582
      %v584 = vpop.f32.mrf.mxu0
      %585 = vmatprep.mubr.bf16.mxu0 0
      %586 = vmatmul.mubr.bf16.gmra.mxu0 %v476
      %v587 = vpop.f32.mrf.mxu0
      %v588 = vadd.f32 0.0, %v587
      %v589 = vpop.f32.mrf.mxu0
      %v590 = vpop.f32.mrf.mxu0
      %v591 = vadd.f32 0.0, %v590
      %v592 = vpop.f32.mrf.mxu0
      %593 = vmatprep.mubr.bf16.mxu0 0
      %594 = vmatmul.mubr.bf16.gmra.mxu0 %v479
      %v595 = vpop.f32.mrf.mxu0
      %v596 = vadd.f32 0.0, %v595
      %v597 = vpop.f32.mrf.mxu0
      %v598 = vpop.f32.mrf.mxu0
      %v599 = vadd.f32 0.0, %v598
      %v600 = vpop.f32.mrf.mxu0
      %601 = vmatprep.mubr.bf16.mxu0 0
      %602 = vmatmul.mubr.bf16.gmra.mxu0 %v482
      %v603 = vpop.f32.mrf.mxu0
      %v604 = vadd.f32 0.0, %v603
      %v605 = vpop.f32.mrf.mxu0
      %v606 = vpop.f32.mrf.mxu0
      %v607 = vadd.f32 0.0, %v606
      %v608 = vpop.f32.mrf.mxu0
      %609 = vmatprep.mubr.bf16.mxu0 0
      %610 = vmatmul.mubr.bf16.gmra.mxu0 %v485
      %v611 = vpop.f32.mrf.mxu0
      %v612 = vadd.f32 0.0, %v611
      %v613 = vpop.f32.mrf.mxu0
      %v614 = vpop.f32.mrf.mxu0
      %v615 = vadd.f32 0.0, %v614
      %v616 = vpop.f32.mrf.mxu0
      %617 = vmatprep.mubr.bf16.mxu0 0
      %618 = vmatmul.mubr.bf16.gmra.mxu0 %v488
      %v619 = vpop.f32.mrf.mxu0
      %v620 = vadd.f32 0.0, %v619
      %v621 = vpop.f32.mrf.mxu0
      %v622 = vpop.f32.mrf.mxu0
      %v623 = vadd.f32 0.0, %v622
      %v624 = vpop.f32.mrf.mxu0
      %625 = vmatprep.mubr.bf16.mxu0 0
      %626 = vmatmul.mubr.bf16.gmra.mxu0 %v491
      %v627 = vpop.f32.mrf.mxu0
      %v628 = vadd.f32 0.0, %v627
      %v629 = vpop.f32.mrf.mxu0
      %v630 = vpop.f32.mrf.mxu0
      %v631 = vadd.f32 0.0, %v630
      %v632 = vpop.f32.mrf.mxu0
      %633 = vmatprep.mubr.bf16.mxu0 0
      %634 = vmatmul.mubr.bf16.gmra.mxu0 %v494
      %v635 = vpop.f32.mrf.mxu0
      %v636 = vadd.f32 0.0, %v635
      %v637 = vpop.f32.mrf.mxu0
      %v638 = vpop.f32.mrf.mxu0
      %v639 = vadd.f32 0.0, %v638
      %v640 = vpop.f32.mrf.mxu0
      %641 = vmatprep.mubr.bf16.mxu0 0
      %642 = vmatmul.mubr.bf16.gmra.mxu0 %v497
      %v643 = vpop.f32.mrf.mxu0
      %v644 = vadd.f32 0.0, %v643
      %v645 = vpop.f32.mrf.mxu0
      %v646 = vpop.f32.mrf.mxu0
      %v647 = vadd.f32 0.0, %v646
      %v648 = vpop.f32.mrf.mxu0
      %649 = vmatprep.mubr.bf16.mxu0 0
      %650 = vmatmul.mubr.bf16.gmra.mxu0 %v500
      %v651 = vpop.f32.mrf.mxu0
      %v652 = vadd.f32 0.0, %v651
      %v653 = vpop.f32.mrf.mxu0
      %v654 = vpop.f32.mrf.mxu0
      %v655 = vadd.f32 0.0, %v654
      %v656 = vpop.f32.mrf.mxu0
      %657 = vmatprep.mubr.bf16.mxu0 0
      %658 = vmatmul.mubr.bf16.gmra.mxu0 %v503
      %v659 = vpop.f32.mrf.mxu0
      %v660 = vadd.f32 0.0, %v659
      %v661 = vpop.f32.mrf.mxu0
      %v662 = vpop.f32.mrf.mxu0
      %v663 = vadd.f32 0.0, %v662
      %v664 = vpop.f32.mrf.mxu0
      %665 = vdwg.mxu0
      %v666 = vadd.f32 %v296, %v540
      %v667 = vadd.f32 %v297, %v543
      %v668 = vadd.f32 %v298, %v548
      %v669 = vadd.f32 %v299, %v551
      %v670 = vadd.f32 %v300, %v556
      %v671 = vadd.f32 %v301, %v559
      %v672 = vadd.f32 %v302, %v564
      %v673 = vadd.f32 %v303, %v567
      %v674 = vadd.f32 %v304, %v572
      %v675 = vadd.f32 %v305, %v575
      %v676 = vadd.f32 %v306, %v580
      %v677 = vadd.f32 %v307, %v583
      %v678 = vadd.f32 %v308, %v588
      %v679 = vadd.f32 %v309, %v591
      %v680 = vadd.f32 %v310, %v596
      %v681 = vadd.f32 %v311, %v599
      %v682 = vadd.f32 %v312, %v604
      %v683 = vadd.f32 %v313, %v607
      %v684 = vadd.f32 %v314, %v612
      %v685 = vadd.f32 %v315, %v615
      %v686 = vadd.f32 %v316, %v620
      %v687 = vadd.f32 %v317, %v623
      %v688 = vadd.f32 %v318, %v628
      %v689 = vadd.f32 %v319, %v631
      %v690 = vadd.f32 %v320, %v636
      %v691 = vadd.f32 %v321, %v639
      %v692 = vadd.f32 %v322, %v644
      %v693 = vadd.f32 %v323, %v647
      %v694 = vadd.f32 %v324, %v652
      %v695 = vadd.f32 %v325, %v655
      %v696 = vadd.f32 %v326, %v660
      %v697 = vadd.f32 %v327, %v663
      %698 = vst [vmem:[#allocation2] sm:$0xff] %v666
      %699 = vst [vmem:[#allocation2 + $0x8] sm:$0xff] %v667
      %700 = vst [vmem:[#allocation2 + $0x10] sm:$0xff] %v668
      %701 = vst [vmem:[#allocation2 + $0x18] sm:$0xff] %v669
      %702 = vst [vmem:[#allocation2 + $0x20] sm:$0xff] %v670
      %703 = vst [vmem:[#allocation2 + $0x28] sm:$0xff] %v671
      %704 = vst [vmem:[#allocation2 + $0x30] sm:$0xff] %v672
      %705 = vst [vmem:[#allocation2 + $0x38] sm:$0xff] %v673
      %706 = vst [vmem:[#allocation2 + $0x40] sm:$0xff] %v674
      %707 = vst [vmem:[#allocation2 + $0x48] sm:$0xff] %v675
      %708 = vst [vmem:[#allocation2 + $0x50] sm:$0xff] %v676
      %709 = vst [vmem:[#allocation2 + $0x58] sm:$0xff] %v677
      %710 = vst [vmem:[#allocation2 + $0x60] sm:$0xff] %v678
      %711 = vst [vmem:[#allocation2 + $0x68] sm:$0xff] %v679
      %712 = vst [vmem:[#allocation2 + $0x70] sm:$0xff] %v680
      %713 = vst [vmem:[#allocation2 + $0x78] sm:$0xff] %v681
      %714 = vst [vmem:[#allocation2 + $0x80] sm:$0xff] %v682
      %715 = vst [vmem:[#allocation2 + $0x88] sm:$0xff] %v683
      %716 = vst [vmem:[#allocation2 + $0x90] sm:$0xff] %v684
      %717 = vst [vmem:[#allocation2 + $0x98] sm:$0xff] %v685
      %718 = vst [vmem:[#allocation2 + $0xa0] sm:$0xff] %v686
      %719 = vst [vmem:[#allocation2 + $0xa8] sm:$0xff] %v687
      %720 = vst [vmem:[#allocation2 + $0xb0] sm:$0xff] %v688
      %721 = vst [vmem:[#allocation2 + $0xb8] sm:$0xff] %v689
      %722 = vst [vmem:[#allocation2 + $0xc0] sm:$0xff] %v690
      %723 = vst [vmem:[#allocation2 + $0xc8] sm:$0xff] %v691
      %724 = vst [vmem:[#allocation2 + $0xd0] sm:$0xff] %v692
      %725 = vst [vmem:[#allocation2 + $0xd8] sm:$0xff] %v693
      %726 = vst [vmem:[#allocation2 + $0xe0] sm:$0xff] %v694
      %727 = vst [vmem:[#allocation2 + $0xe8] sm:$0xff] %v695
      %728 = vst [vmem:[#allocation2 + $0xf0] sm:$0xff] %v696
      %729 = vst [vmem:[#allocation2 + $0xf8] sm:$0xff] %v697
      // Predicated region
      $region37: #{cnn_gru_forward.7} parent=31 // pred_check
        %p730 = pneg %p260
      $region38: #{cnn_gru_forward.7} parent=31 // pred_check_branch
        %732 = sbr.rel (%p730) target = $region40
      $region39: #{cnn_gru_forward.7} parent=31 // pred_region
        %v733 = vld [vmem:[#allocation2] sm:$0xff]
        %v734 = vld [vmem:[#allocation2 + $0x8] sm:$0xff]
        %v735 = vld [vmem:[#allocation2 + $0x10] sm:$0xff]
        %v736 = vld [vmem:[#allocation2 + $0x18] sm:$0xff]
        %v737 = vld [vmem:[#allocation2 + $0x20] sm:$0xff]
        %v738 = vld [vmem:[#allocation2 + $0x28] sm:$0xff]
        %v739 = vld [vmem:[#allocation2 + $0x30] sm:$0xff]
        %v740 = vld [vmem:[#allocation2 + $0x38] sm:$0xff]
        %v741 = vld [vmem:[#allocation2 + $0x40] sm:$0xff]
        %v742 = vld [vmem:[#allocation2 + $0x48] sm:$0xff]
        %v743 = vld [vmem:[#allocation2 + $0x50] sm:$0xff]
        %v744 = vld [vmem:[#allocation2 + $0x58] sm:$0xff]
        %v745 = vld [vmem:[#allocation2 + $0x60] sm:$0xff]
        %v746 = vld [vmem:[#allocation2 + $0x68] sm:$0xff]
        %v747 = vld [vmem:[#allocation2 + $0x70] sm:$0xff]
        %v748 = vld [vmem:[#allocation2 + $0x78] sm:$0xff]
        %v749 = vld [vmem:[#allocation2 + $0x80] sm:$0xff]
        %v750 = vld [vmem:[#allocation2 + $0x88] sm:$0xff]
        %v751 = vld [vmem:[#allocation2 + $0x90] sm:$0xff]
        %v752 = vld [vmem:[#allocation2 + $0x98] sm:$0xff]
        %v753 = vld [vmem:[#allocation2 + $0xa0] sm:$0xff]
        %v754 = vld [vmem:[#allocation2 + $0xa8] sm:$0xff]
        %v755 = vld [vmem:[#allocation2 + $0xb0] sm:$0xff]
        %v756 = vld [vmem:[#allocation2 + $0xb8] sm:$0xff]
        %v757 = vld [vmem:[#allocation2 + $0xc0] sm:$0xff]
        %v758 = vld [vmem:[#allocation2 + $0xc8] sm:$0xff]
        %v759 = vld [vmem:[#allocation2 + $0xd0] sm:$0xff]
        %v760 = vld [vmem:[#allocation2 + $0xd8] sm:$0xff]
        %v761 = vld [vmem:[#allocation2 + $0xe0] sm:$0xff]
        %v762 = vld [vmem:[#allocation2 + $0xe8] sm:$0xff]
        %v763 = vld [vmem:[#allocation2 + $0xf0] sm:$0xff]
        %v764 = vld [vmem:[#allocation2 + $0xf8] sm:$0xff]
        %v765 = vld [vmem:[%s249] sm:$0x1]
        %v767 = vlaneseq
        %v768 = vshrl.u32 %v767, 7
        %v769 = vsub.s32 0, %v768
        %v770 = vrot.slane %v765, %v769
        %v772 = vadd.f32 %v733, %v770
        %v773 = vadd.f32 %v734, %v770
        %v774 = vadd.f32 %v735, %v770
        %v775 = vadd.f32 %v736, %v770
        %v776 = vadd.f32 %v737, %v770
        %v777 = vadd.f32 %v738, %v770
        %v778 = vadd.f32 %v739, %v770
        %v779 = vadd.f32 %v740, %v770
        %v780 = vadd.f32 %v741, %v770
        %v781 = vadd.f32 %v742, %v770
        %v782 = vadd.f32 %v743, %v770
        %v783 = vadd.f32 %v744, %v770
        %v784 = vadd.f32 %v745, %v770
        %v785 = vadd.f32 %v746, %v770
        %v786 = vadd.f32 %v747, %v770
        %v787 = vadd.f32 %v748, %v770
        %v788 = vadd.f32 %v749, %v770
        %v789 = vadd.f32 %v750, %v770
        %v790 = vadd.f32 %v751, %v770
        %v791 = vadd.f32 %v752, %v770
        %v792 = vadd.f32 %v753, %v770
        %v793 = vadd.f32 %v754, %v770
        %v794 = vadd.f32 %v755, %v770
        %v795 = vadd.f32 %v756, %v770
        %v796 = vadd.f32 %v757, %v770
        %v797 = vadd.f32 %v758, %v770
        %v798 = vadd.f32 %v759, %v770
        %v799 = vadd.f32 %v760, %v770
        %v800 = vadd.f32 %v761, %v770
        %v801 = vadd.f32 %v762, %v770
        %v802 = vadd.f32 %v763, %v770
        %v803 = vadd.f32 %v764, %v770
        %v804 = vmax.f32 %v772, 0.0
        %v805 = vmax.f32 %v773, 0.0
        %v806 = vmax.f32 %v774, 0.0
        %v807 = vmax.f32 %v775, 0.0
        %v808 = vmax.f32 %v776, 0.0
        %v809 = vmax.f32 %v777, 0.0
        %v810 = vmax.f32 %v778, 0.0
        %v811 = vmax.f32 %v779, 0.0
        %v812 = vmax.f32 %v780, 0.0
        %v813 = vmax.f32 %v781, 0.0
        %v814 = vmax.f32 %v782, 0.0
        %v815 = vmax.f32 %v783, 0.0
        %v816 = vmax.f32 %v784, 0.0
        %v817 = vmax.f32 %v785, 0.0
        %v818 = vmax.f32 %v786, 0.0
        %v819 = vmax.f32 %v787, 0.0
        %v820 = vmax.f32 %v788, 0.0
        %v821 = vmax.f32 %v789, 0.0
        %v822 = vmax.f32 %v790, 0.0
        %v823 = vmax.f32 %v791, 0.0
        %v824 = vmax.f32 %v792, 0.0
        %v825 = vmax.f32 %v793, 0.0
        %v826 = vmax.f32 %v794, 0.0
        %v827 = vmax.f32 %v795, 0.0
        %v828 = vmax.f32 %v796, 0.0
        %v829 = vmax.f32 %v797, 0.0
        %v830 = vmax.f32 %v798, 0.0
        %v831 = vmax.f32 %v799, 0.0
        %v832 = vmax.f32 %v800, 0.0
        %v833 = vmax.f32 %v801, 0.0
        %v834 = vmax.f32 %v802, 0.0
        %v835 = vmax.f32 %v803, 0.0
        %v836 = vpack.c.bf16 %v805, %v804
        %v837 = vpack.c.bf16 %v807, %v806
        %v838 = vpack.c.bf16 %v809, %v808
        %v839 = vpack.c.bf16 %v811, %v810
        %v840 = vpack.c.bf16 %v813, %v812
        %v841 = vpack.c.bf16 %v815, %v814
        %v842 = vpack.c.bf16 %v817, %v816
        %v843 = vpack.c.bf16 %v819, %v818
        %v844 = vpack.c.bf16 %v821, %v820
        %v845 = vpack.c.bf16 %v823, %v822
        %v846 = vpack.c.bf16 %v825, %v824
        %v847 = vpack.c.bf16 %v827, %v826
        %v848 = vpack.c.bf16 %v829, %v828
        %v849 = vpack.c.bf16 %v831, %v830
        %v850 = vpack.c.bf16 %v833, %v832
        %v851 = vpack.c.bf16 %v835, %v834
        %v868 = vunpack.c.l.b16 %v836
        %v869 = vunpack.c.h.b16 %v836
        %v870 = vunpack.c.l.b16 %v837
        %v871 = vunpack.c.h.b16 %v837
        %v872 = vunpack.c.l.b16 %v838
        %v873 = vunpack.c.h.b16 %v838
        %v874 = vunpack.c.l.b16 %v839
        %v875 = vunpack.c.h.b16 %v839
        %v876 = vunpack.c.l.b16 %v840
        %v877 = vunpack.c.h.b16 %v840
        %v878 = vunpack.c.l.b16 %v841
        %v879 = vunpack.c.h.b16 %v841
        %v880 = vunpack.c.l.b16 %v842
        %v881 = vunpack.c.h.b16 %v842
        %v882 = vunpack.c.l.b16 %v843
        %v883 = vunpack.c.h.b16 %v843
        %v884 = vunpack.c.l.b16 %v844
        %v885 = vunpack.c.h.b16 %v844
        %v886 = vunpack.c.l.b16 %v845
        %v887 = vunpack.c.h.b16 %v845
        %v888 = vunpack.c.l.b16 %v846
        %v889 = vunpack.c.h.b16 %v846
        %v890 = vunpack.c.l.b16 %v847
        %v891 = vunpack.c.h.b16 %v847
        %v892 = vunpack.c.l.b16 %v848
        %v893 = vunpack.c.h.b16 %v848
        %v894 = vunpack.c.l.b16 %v849
        %v895 = vunpack.c.h.b16 %v849
        %v896 = vunpack.c.l.b16 %v850
        %v897 = vunpack.c.h.b16 %v850
        %v898 = vunpack.c.l.b16 %v851
        %v899 = vunpack.c.h.b16 %v851
        %v900 = vpack.c.b16 %v868, %v868
        %v901 = vpack.c.b16 %v869, %v869
        %v902 = vpack.c.b16 %v870, %v870
        %v903 = vpack.c.b16 %v871, %v871
        %v904 = vpack.c.b16 %v872, %v872
        %v905 = vpack.c.b16 %v873, %v873
        %v906 = vpack.c.b16 %v874, %v874
        %v907 = vpack.c.b16 %v875, %v875
        %v908 = vpack.c.b16 %v876, %v876
        %v909 = vpack.c.b16 %v877, %v877
        %v910 = vpack.c.b16 %v878, %v878
        %v911 = vpack.c.b16 %v879, %v879
        %v912 = vpack.c.b16 %v880, %v880
        %v913 = vpack.c.b16 %v881, %v881
        %v914 = vpack.c.b16 %v882, %v882
        %v915 = vpack.c.b16 %v883, %v883
        %v916 = vpack.c.b16 %v884, %v884
        %v917 = vpack.c.b16 %v885, %v885
        %v918 = vpack.c.b16 %v886, %v886
        %v919 = vpack.c.b16 %v887, %v887
        %v920 = vpack.c.b16 %v888, %v888
        %v921 = vpack.c.b16 %v889, %v889
        %v922 = vpack.c.b16 %v890, %v890
        %v923 = vpack.c.b16 %v891, %v891
        %v924 = vpack.c.b16 %v892, %v892
        %v925 = vpack.c.b16 %v893, %v893
        %v926 = vpack.c.b16 %v894, %v894
        %v927 = vpack.c.b16 %v895, %v895
        %v928 = vpack.c.b16 %v896, %v896
        %v929 = vpack.c.b16 %v897, %v897
        %v930 = vpack.c.b16 %v898, %v898
        %v931 = vpack.c.b16 %v899, %v899
        %964 = vst [vmem:[%s257] sm:$0xf] %v900
        %965 = vst [vmem:[%s257 + $0x4] sm:$0xf] %v901
        %966 = vst [vmem:[%s257 + $0x8] sm:$0xf] %v902
        %967 = vst [vmem:[%s257 + $0xc] sm:$0xf] %v903
        %968 = vst [vmem:[%s257 + $0x10] sm:$0xf] %v904
        %969 = vst [vmem:[%s257 + $0x14] sm:$0xf] %v905
        %970 = vst [vmem:[%s257 + $0x18] sm:$0xf] %v906
        %971 = vst [vmem:[%s257 + $0x1c] sm:$0xf] %v907
        %972 = vst [vmem:[%s257 + $0x20] sm:$0xf] %v908
        %973 = vst [vmem:[%s257 + $0x24] sm:$0xf] %v909
        %974 = vst [vmem:[%s257 + $0x28] sm:$0xf] %v910
        %975 = vst [vmem:[%s257 + $0x2c] sm:$0xf] %v911
        %976 = vst [vmem:[%s257 + $0x30] sm:$0xf] %v912
        %977 = vst [vmem:[%s257 + $0x34] sm:$0xf] %v913
        %978 = vst [vmem:[%s257 + $0x38] sm:$0xf] %v914
        %979 = vst [vmem:[%s257 + $0x3c] sm:$0xf] %v915
        %980 = vst [vmem:[%s257 + $0x40] sm:$0xf] %v916
        %981 = vst [vmem:[%s257 + $0x44] sm:$0xf] %v917
        %982 = vst [vmem:[%s257 + $0x48] sm:$0xf] %v918
        %983 = vst [vmem:[%s257 + $0x4c] sm:$0xf] %v919
        %984 = vst [vmem:[%s257 + $0x50] sm:$0xf] %v920
        %985 = vst [vmem:[%s257 + $0x54] sm:$0xf] %v921
        %986 = vst [vmem:[%s257 + $0x58] sm:$0xf] %v922
        %987 = vst [vmem:[%s257 + $0x5c] sm:$0xf] %v923
        %988 = vst [vmem:[%s257 + $0x60] sm:$0xf] %v924
        %989 = vst [vmem:[%s257 + $0x64] sm:$0xf] %v925
        %990 = vst [vmem:[%s257 + $0x68] sm:$0xf] %v926
        %991 = vst [vmem:[%s257 + $0x6c] sm:$0xf] %v927
        %992 = vst [vmem:[%s257 + $0x70] sm:$0xf] %v928
        %993 = vst [vmem:[%s257 + $0x74] sm:$0xf] %v929
        %994 = vst [vmem:[%s257 + $0x78] sm:$0xf] %v930
        %995 = vst [vmem:[%s257 + $0x7c] sm:$0xf] %v931
      $region40: #{cnn_gru_forward.7} parent=31 // pred_fallthru
        _
      %s996 = smul.u32 32, %s19
      %p997 = scmp.lt.s32.totalorder %s996, 255
      %s998 = scalar_select %p997, %s996, 255
      %p999 = scmp.lt.s32.totalorder %s20, 0
      %s1000 = scalar_select %p999, %s20, 0
      %s1001 = sadd.s32 %s1000, %s998
      %s1002 = smul.addr %s1001, 4
      %s1003 = scalar_lea.vmem %s3, %s1002
      // Predicated region
      $region41: #{cnn_gru_forward.7} parent=31 // pred_check
        %p1004 = pneg %p135
      $region42: #{cnn_gru_forward.7} parent=31 // pred_check_branch
        %1006 = sbr.rel (%p1004) target = $region44
      $region43: #{cnn_gru_forward.7} parent=31 // pred_region
        %s1007 = smul.u32 32, %s19
      $region44: #{cnn_gru_forward.7} parent=31 // pred_fallthru
        _
    $region32: #{cnn_gru_forward.7} parent=5 // pred_fallthru
      _
    %p1008 = scmp.le.s32.totalorder 2, %s9
    // Predicated region
    $region45: #{cnn_gru_forward.7} parent=5 // pred_check
      %p1009 = pneg %p1008
    $region46: #{cnn_gru_forward.7} parent=5 // pred_check_branch
      %1011 = sbr.rel (%p1009) target = $region48
    $region47: #{cnn_gru_forward.7} parent=5 // pred_region
      %s1012 = ssub.s32 %s9, 2
      // Predicated region
      $region49: #{cnn_gru_forward.7} parent=47 // pred_check
        %p1013 = pneg %p141
      $region50: #{cnn_gru_forward.7} parent=47 // pred_check_branch
        %1015 = sbr.rel (%p1013) target = $region52
      $region51: #{cnn_gru_forward.7} parent=47 // pred_region
        %s1016 = smul.u32 32, %s22
        %p1017 = scmp.lt.s32.totalorder %s1016, 255
        %s1018 = scalar_select %p1017, %s1016, 255
        %p1019 = scmp.lt.s32.totalorder %s23, 0
        %s1020 = scalar_select %p1019, %s23, 0
        %s1021 = sadd.s32 %s1020, %s1018
        %s1022 = smul.addr %s1021, 4
        %s1023 = scalar_lea.vmem %s3, %s1022
      $region52: #{cnn_gru_forward.7} parent=47 // pred_fallthru
        _
    $region48: #{cnn_gru_forward.7} parent=5 // pred_fallthru
      _
  $region6: #{cnn_gru_forward.7} parent=0 // loop_footer
    %s13 = sadd.s32 1, %s9
  $region7: #{cnn_gru_forward.7} parent=0 // loop_footer_branch
    %8 = sbr.rel target = $region3
  $region8: #{cnn_gru_forward.7} parent=0 // loop_exit
    _

// kernel: cnn_gru_forward.9
$region0: #{cnn_gru_forward.9}
  #allocation0 [shape = 'u32[]', space=smem, size = 0x4, offset = 0x4, fixed_abs, tag = 'smem constant byte address 0x4 - core index']
  #allocation1 [shape = 'u32[144,128]{1,0:T(1,128)}', space=vmem, size = 0x12000, scoped, tag = 'internal scratch']
  #allocation2 [shape = 'f32[32,384]{1,0:T(8,128)}', space=vmem, size = 0xc000, scoped, tag = 'scratch operand']
  %s0 = inlined_call_operand.vmem [shape: bf16[32,128], index: 0, kind: input, shape index: {}]
  %s1 = inlined_call_operand.vmem [shape: bf16[128,384], index: 1, kind: input, shape index: {}]
  %s2 = inlined_call_operand.vmem [shape: f32[1,384], index: 2, kind: input, shape index: {}]
  %s3 = inlined_call_operand.vmem [shape: bf16[32,384], index: 3, kind: output, shape index: {}]
  %s4 = sld [smem:[#allocation0]]
  $region30: #{cnn_gru_forward.9} parent=0
    _
  %s6 = ssub.s32 1, %s4
  %s7 = scalar_select 0, %s6, %s4
  // Predicated region
  $region2: #{cnn_gru_forward.9} parent=0 // pred_check
    _
  $region3: #{cnn_gru_forward.9} parent=0 // pred_check_branch
    %9 = sbr.rel (0) target = $region5
  $region4: #{cnn_gru_forward.9} parent=0 // pred_region
    _
  $region5: #{cnn_gru_forward.9} parent=0 // pred_fallthru
    _
  // Predicated region
  $region6: #{cnn_gru_forward.9} parent=0 // pred_check
    _
  $region7: #{cnn_gru_forward.9} parent=0 // pred_check_branch
    %11 = sbr.rel (0) target = $region9
  $region8: #{cnn_gru_forward.9} parent=0 // pred_region
    _
  $region9: #{cnn_gru_forward.9} parent=0 // pred_fallthru
    _
  // Predicated region
  $region10: #{cnn_gru_forward.9} parent=0 // pred_check
    _
  $region11: #{cnn_gru_forward.9} parent=0 // pred_check_branch
    %13 = sbr.rel (0) target = $region13
  $region12: #{cnn_gru_forward.9} parent=0 // pred_region
    _
  $region13: #{cnn_gru_forward.9} parent=0 // pred_fallthru
    _
  %p15 = scmp.eq.s32.totalorder 0, 0
  // Predicated region
  $region14: #{cnn_gru_forward.9} parent=0 // pred_check
    %p16 = pneg %p15
  $region15: #{cnn_gru_forward.9} parent=0 // pred_check_branch
    %18 = sbr.rel (%p16) target = $region17
  $region16: #{cnn_gru_forward.9} parent=0 // pred_region
    %19 = vst [vmem:[#allocation2] sm:$0xff] 0.0
    %20 = vst [vmem:[#allocation2 + $0x8] sm:$0xff] 0.0
    %21 = vst [vmem:[#allocation2 + $0x10] sm:$0xff] 0.0
    %22 = vst [vmem:[#allocation2 + $0x18] sm:$0xff] 0.0
    %23 = vst [vmem:[#allocation2 + $0x20] sm:$0xff] 0.0
    %24 = vst [vmem:[#allocation2 + $0x28] sm:$0xff] 0.0
    %25 = vst [vmem:[#allocation2 + $0x30] sm:$0xff] 0.0
    %26 = vst [vmem:[#allocation2 + $0x38] sm:$0xff] 0.0
    %27 = vst [vmem:[#allocation2 + $0x40] sm:$0xff] 0.0
    %28 = vst [vmem:[#allocation2 + $0x48] sm:$0xff] 0.0
    %29 = vst [vmem:[#allocation2 + $0x50] sm:$0xff] 0.0
    %30 = vst [vmem:[#allocation2 + $0x58] sm:$0xff] 0.0
  $region17: #{cnn_gru_forward.9} parent=0 // pred_fallthru
    _
  %v31 = vld [vmem:[#allocation2] sm:$0xff]
  %v32 = vld [vmem:[#allocation2 + $0x8] sm:$0xff]
  %v33 = vld [vmem:[#allocation2 + $0x10] sm:$0xff]
  %v34 = vld [vmem:[#allocation2 + $0x18] sm:$0xff]
  %v35 = vld [vmem:[#allocation2 + $0x20] sm:$0xff]
  %v36 = vld [vmem:[#allocation2 + $0x28] sm:$0xff]
  %v37 = vld [vmem:[#allocation2 + $0x30] sm:$0xff]
  %v38 = vld [vmem:[#allocation2 + $0x38] sm:$0xff]
  %v39 = vld [vmem:[#allocation2 + $0x40] sm:$0xff]
  %v40 = vld [vmem:[#allocation2 + $0x48] sm:$0xff]
  %v41 = vld [vmem:[#allocation2 + $0x50] sm:$0xff]
  %v42 = vld [vmem:[#allocation2 + $0x58] sm:$0xff]
  %v43 = vld [vmem:[%s0] sm:$0xf]
  %v44 = vld [vmem:[%s0 + $0x4] sm:$0xf]
  %v45 = vld [vmem:[%s0 + $0x8] sm:$0xf]
  %v46 = vld [vmem:[%s0 + $0xc] sm:$0xf]
  %v47 = vld [vmem:[%s1] sm:$0xff]
  %v48 = vld [vmem:[%s1 + $0x8] sm:$0xf]
  %v49 = vld [vmem:[%s1 + $0xc] sm:$0xff]
  %v50 = vld [vmem:[%s1 + $0x14] sm:$0xf]
  %v51 = vld [vmem:[%s1 + $0x18] sm:$0xff]
  %v52 = vld [vmem:[%s1 + $0x20] sm:$0xf]
  %v53 = vld [vmem:[%s1 + $0x24] sm:$0xff]
  %v54 = vld [vmem:[%s1 + $0x2c] sm:$0xf]
  %v55 = vld [vmem:[%s1 + $0x30] sm:$0xff]
  %v56 = vld [vmem:[%s1 + $0x38] sm:$0xf]
  %v57 = vld [vmem:[%s1 + $0x3c] sm:$0xff]
  %v58 = vld [vmem:[%s1 + $0x44] sm:$0xf]
  %v59 = vld [vmem:[%s1 + $0x48] sm:$0xff]
  %v60 = vld [vmem:[%s1 + $0x50] sm:$0xf]
  %v61 = vld [vmem:[%s1 + $0x54] sm:$0xff]
  %v62 = vld [vmem:[%s1 + $0x5c] sm:$0xf]
  %v63 = vld [vmem:[%s1 + $0x60] sm:$0xff]
  %v64 = vld [vmem:[%s1 + $0x68] sm:$0xf]
  %v65 = vld [vmem:[%s1 + $0x6c] sm:$0xff]
  %v66 = vld [vmem:[%s1 + $0x74] sm:$0xf]
  %v67 = vld [vmem:[%s1 + $0x78] sm:$0xff]
  %v68 = vld [vmem:[%s1 + $0x80] sm:$0xf]
  %v69 = vld [vmem:[%s1 + $0x84] sm:$0xff]
  %v70 = vld [vmem:[%s1 + $0x8c] sm:$0xf]
  %v71 = vld [vmem:[%s1 + $0x90] sm:$0xff]
  %v72 = vld [vmem:[%s1 + $0x98] sm:$0xf]
  %v73 = vld [vmem:[%s1 + $0x9c] sm:$0xff]
  %v74 = vld [vmem:[%s1 + $0xa4] sm:$0xf]
  %v75 = vld [vmem:[%s1 + $0xa8] sm:$0xff]
  %v76 = vld [vmem:[%s1 + $0xb0] sm:$0xf]
  %v77 = vld [vmem:[%s1 + $0xb4] sm:$0xff]
  %v78 = vld [vmem:[%s1 + $0xbc] sm:$0xf]
  %v83 = vunpack.c.l.b16 %v43
  %v84 = vunpack.c.l.b16 %v44
  %v85 = vunpack.c.l.b16 %v45
  %v86 = vunpack.c.l.b16 %v46
  %v87 = vpack.c.b16 %v84, %v83
  %v88 = vpack.c.b16 %v86, %v85
  %v123 = vunpack.c.l.b16 %v47
  %v124 = vunpack.c.h.b16 %v47
  %v125 = vunpack.c.l.b16 %v48
  %v126 = vunpack.c.l.b16 %v49
  %v127 = vunpack.c.h.b16 %v49
  %v128 = vunpack.c.l.b16 %v50
  %v129 = vunpack.c.l.b16 %v51
  %v130 = vunpack.c.h.b16 %v51
  %v131 = vunpack.c.l.b16 %v52
  %v132 = vunpack.c.l.b16 %v53
  %v133 = vunpack.c.h.b16 %v53
  %v134 = vunpack.c.l.b16 %v54
  %v135 = vunpack.c.l.b16 %v55
  %v136 = vunpack.c.h.b16 %v55
  %v137 = vunpack.c.l.b16 %v56
  %v138 = vunpack.c.l.b16 %v57
  %v139 = vunpack.c.h.b16 %v57
  %v140 = vunpack.c.l.b16 %v58
  %v141 = vunpack.c.l.b16 %v59
  %v142 = vunpack.c.h.b16 %v59
  %v143 = vunpack.c.l.b16 %v60
  %v144 = vunpack.c.l.b16 %v61
  %v145 = vunpack.c.h.b16 %v61
  %v146 = vunpack.c.l.b16 %v62
  %v147 = vunpack.c.l.b16 %v63
  %v148 = vunpack.c.h.b16 %v63
  %v149 = vunpack.c.l.b16 %v64
  %v150 = vunpack.c.l.b16 %v65
  %v151 = vunpack.c.h.b16 %v65
  %v152 = vunpack.c.l.b16 %v66
  %v153 = vunpack.c.l.b16 %v67
  %v154 = vunpack.c.h.b16 %v67
  %v155 = vunpack.c.l.b16 %v68
  %v156 = vunpack.c.l.b16 %v69
  %v157 = vunpack.c.h.b16 %v69
  %v158 = vunpack.c.l.b16 %v70
  %v159 = vunpack.c.l.b16 %v71
  %v160 = vunpack.c.h.b16 %v71
  %v161 = vunpack.c.l.b16 %v72
  %v162 = vunpack.c.l.b16 %v73
  %v163 = vunpack.c.h.b16 %v73
  %v164 = vunpack.c.l.b16 %v74
  %v165 = vunpack.c.l.b16 %v75
  %v166 = vunpack.c.h.b16 %v75
  %v167 = vunpack.c.l.b16 %v76
  %v168 = vunpack.c.l.b16 %v77
  %v169 = vunpack.c.h.b16 %v77
  %v170 = vunpack.c.l.b16 %v78
  %v171 = vpack.c.b16 %v126, %v123
  %v172 = vpack.c.b16 %v127, %v124
  %v173 = vpack.c.b16 %v128, %v125
  %v174 = vpack.c.b16 %v132, %v129
  %v175 = vpack.c.b16 %v133, %v130
  %v176 = vpack.c.b16 %v134, %v131
  %v177 = vpack.c.b16 %v138, %v135
  %v178 = vpack.c.b16 %v139, %v136
  %v179 = vpack.c.b16 %v140, %v137
  %v180 = vpack.c.b16 %v144, %v141
  %v181 = vpack.c.b16 %v145, %v142
  %v182 = vpack.c.b16 %v146, %v143
  %v183 = vpack.c.b16 %v150, %v147
  %v184 = vpack.c.b16 %v151, %v148
  %v185 = vpack.c.b16 %v152, %v149
  %v186 = vpack.c.b16 %v156, %v153
  %v187 = vpack.c.b16 %v157, %v154
  %v188 = vpack.c.b16 %v158, %v155
  %v189 = vpack.c.b16 %v162, %v159
  %v190 = vpack.c.b16 %v163, %v160
  %v191 = vpack.c.b16 %v164, %v161
  %v192 = vpack.c.b16 %v168, %v165
  %v193 = vpack.c.b16 %v169, %v166
  %v194 = vpack.c.b16 %v170, %v167
  %219 = vmatprep.subr.bf16.mxu0 %v193
  %220 = vmatpush1.bf16.msra.mxu0 %v192
  %221 = vmatprep.subr.bf16.mxu0 %v190
  %222 = vmatpush1.bf16.msra.mxu0 %v189
  %223 = vmatprep.subr.bf16.mxu0 %v187
  %224 = vmatpush1.bf16.msra.mxu0 %v186
  %225 = vmatprep.subr.bf16.mxu0 %v184
  %226 = vmatpush1.bf16.msra.mxu0 %v183
  %227 = vmatprep.subr.bf16.mxu0 %v181
  %228 = vmatpush1.bf16.msra.mxu0 %v180
  %229 = vmatprep.subr.bf16.mxu0 %v178
  %230 = vmatpush1.bf16.msra.mxu0 %v177
  %231 = vmatprep.subr.bf16.mxu0 %v175
  %232 = vmatpush1.bf16.msra.mxu0 %v174
  %233 = vmatprep.subr.bf16.mxu0 %v172
  %234 = vmatpush1.bf16.msra.mxu0 %v171
  %235 = vmatprep.subr.bf16.mxu0 0
  %236 = vmatpush2.bf16.msra.mxu0 0
  %237 = vmatprep.subr.bf16.mxu0 0
  %238 = vmatpush2.bf16.msra.mxu0 0
  %239 = vmatprep.subr.bf16.mxu0 0
  %240 = vmatpush2.bf16.msra.mxu0 0
  %241 = vmatprep.subr.bf16.mxu0 0
  %242 = vmatpush2.bf16.msra.mxu0 0
  %243 = vmatprep.subr.bf16.mxu0 0
  %244 = vmatpush2.bf16.msra.mxu0 0
  %245 = vmatprep.subr.bf16.mxu0 0
  %246 = vmatpush2.bf16.msra.mxu0 0
  %247 = vmatprep.subr.bf16.mxu0 0
  %248 = vmatpush2.bf16.msra.mxu0 0
  %249 = vmatprep.subr.bf16.mxu0 0
  %250 = vmatpush2.bf16.msra.mxu0 0
  %251 = vmatprep.mubr.bf16.mxu0 0
  %252 = vmatmul.mubr.bf16.gmra.mxu0 %v87
  %v253 = vpop.f32.mrf.mxu0
  %v254 = vadd.f32 0.0, %v253
  %v255 = vpop.f32.mrf.mxu0
  %v256 = vadd.f32 0.0, %v255
  %v257 = vpop.f32.mrf.mxu0
  %v258 = vadd.f32 0.0, %v257
  %v259 = vpop.f32.mrf.mxu0
  %v260 = vadd.f32 0.0, %v259
  %261 = vmatprep.mubr.bf16.mxu0 0
  %262 = vmatmul.mubr.bf16.gmra.mxu0 %v88
  %v263 = vpop.f32.mrf.mxu0
  %v264 = vadd.f32 0.0, %v263
  %v265 = vpop.f32.mrf.mxu0
  %v266 = vadd.f32 0.0, %v265
  %v267 = vpop.f32.mrf.mxu0
  %v268 = vadd.f32 0.0, %v267
  %v269 = vpop.f32.mrf.mxu0
  %v270 = vadd.f32 0.0, %v269
  %271 = vdwg.mxu0
  %272 = vmatprep.subr.bf16.mxu0 0
  %273 = vmatpush1.bf16.msra.mxu0 %v194
  %274 = vmatprep.subr.bf16.mxu0 0
  %275 = vmatpush1.bf16.msra.mxu0 %v191
  %276 = vmatprep.subr.bf16.mxu0 0
  %277 = vmatpush1.bf16.msra.mxu0 %v188
  %278 = vmatprep.subr.bf16.mxu0 0
  %279 = vmatpush1.bf16.msra.mxu0 %v185
  %280 = vmatprep.subr.bf16.mxu0 0
  %281 = vmatpush1.bf16.msra.mxu0 %v182
  %282 = vmatprep.subr.bf16.mxu0 0
  %283 = vmatpush1.bf16.msra.mxu0 %v179
  %284 = vmatprep.subr.bf16.mxu0 0
  %285 = vmatpush1.bf16.msra.mxu0 %v176
  %286 = vmatprep.subr.bf16.mxu0 0
  %287 = vmatpush1.bf16.msra.mxu0 %v173
  %288 = vmatprep.subr.bf16.mxu0 0
  %289 = vmatpush2.bf16.msra.mxu0 0
  %290 = vmatprep.subr.bf16.mxu0 0
  %291 = vmatpush2.bf16.msra.mxu0 0
  %292 = vmatprep.subr.bf16.mxu0 0
  %293 = vmatpush2.bf16.msra.mxu0 0
  %294 = vmatprep.subr.bf16.mxu0 0
  %295 = vmatpush2.bf16.msra.mxu0 0
  %296 = vmatprep.subr.bf16.mxu0 0
  %297 = vmatpush2.bf16.msra.mxu0 0
  %298 = vmatprep.subr.bf16.mxu0 0
  %299 = vmatpush2.bf16.msra.mxu0 0
  %300 = vmatprep.subr.bf16.mxu0 0
  %301 = vmatpush2.bf16.msra.mxu0 0
  %302 = vmatprep.subr.bf16.mxu0 0
  %303 = vmatpush2.bf16.msra.mxu0 0
  %304 = vmatprep.mubr.bf16.mxu0 0
  %305 = vmatmul.mubr.bf16.gmra.mxu0 %v87
  %v306 = vpop.f32.mrf.mxu0
  %v307 = vadd.f32 0.0, %v306
  %v308 = vpop.f32.mrf.mxu0
  %v309 = vpop.f32.mrf.mxu0
  %v310 = vadd.f32 0.0, %v309
  %v311 = vpop.f32.mrf.mxu0
  %312 = vmatprep.mubr.bf16.mxu0 0
  %313 = vmatmul.mubr.bf16.gmra.mxu0 %v88
  %v314 = vpop.f32.mrf.mxu0
  %v315 = vadd.f32 0.0, %v314
  %v316 = vpop.f32.mrf.mxu0
  %v317 = vpop.f32.mrf.mxu0
  %v318 = vadd.f32 0.0, %v317
  %v319 = vpop.f32.mrf.mxu0
  %320 = vdwg.mxu0
  %v321 = vadd.f32 %v31, %v254
  %v322 = vadd.f32 %v32, %v256
  %v323 = vadd.f32 %v33, %v307
  %v324 = vadd.f32 %v34, %v258
  %v325 = vadd.f32 %v35, %v260
  %v326 = vadd.f32 %v36, %v310
  %v327 = vadd.f32 %v37, %v264
  %v328 = vadd.f32 %v38, %v266
  %v329 = vadd.f32 %v39, %v315
  %v330 = vadd.f32 %v40, %v268
  %v331 = vadd.f32 %v41, %v270
  %v332 = vadd.f32 %v42, %v318
  %333 = vst [vmem:[#allocation2] sm:$0xff] %v321
  %334 = vst [vmem:[#allocation2 + $0x8] sm:$0xff] %v322
  %335 = vst [vmem:[#allocation2 + $0x10] sm:$0xff] %v323
  %336 = vst [vmem:[#allocation2 + $0x18] sm:$0xff] %v324
  %337 = vst [vmem:[#allocation2 + $0x20] sm:$0xff] %v325
  %338 = vst [vmem:[#allocation2 + $0x28] sm:$0xff] %v326
  %339 = vst [vmem:[#allocation2 + $0x30] sm:$0xff] %v327
  %340 = vst [vmem:[#allocation2 + $0x38] sm:$0xff] %v328
  %341 = vst [vmem:[#allocation2 + $0x40] sm:$0xff] %v329
  %342 = vst [vmem:[#allocation2 + $0x48] sm:$0xff] %v330
  %343 = vst [vmem:[#allocation2 + $0x50] sm:$0xff] %v331
  %344 = vst [vmem:[#allocation2 + $0x58] sm:$0xff] %v332
  // Predicated region
  $region18: #{cnn_gru_forward.9} parent=0 // pred_check
    %p345 = pneg %p15
  $region19: #{cnn_gru_forward.9} parent=0 // pred_check_branch
    %347 = sbr.rel (%p345) target = $region21
  $region20: #{cnn_gru_forward.9} parent=0 // pred_region
    %v348 = vld [vmem:[#allocation2] sm:$0xff]
    %v349 = vld [vmem:[#allocation2 + $0x8] sm:$0xff]
    %v350 = vld [vmem:[#allocation2 + $0x10] sm:$0xff]
    %v351 = vld [vmem:[#allocation2 + $0x18] sm:$0xff]
    %v352 = vld [vmem:[#allocation2 + $0x20] sm:$0xff]
    %v353 = vld [vmem:[#allocation2 + $0x28] sm:$0xff]
    %v354 = vld [vmem:[#allocation2 + $0x30] sm:$0xff]
    %v355 = vld [vmem:[#allocation2 + $0x38] sm:$0xff]
    %v356 = vld [vmem:[#allocation2 + $0x40] sm:$0xff]
    %v357 = vld [vmem:[#allocation2 + $0x48] sm:$0xff]
    %v358 = vld [vmem:[#allocation2 + $0x50] sm:$0xff]
    %v359 = vld [vmem:[#allocation2 + $0x58] sm:$0xff]
    %v360 = vld [vmem:[%s2] sm:$0x7]
    %v362 = vlaneseq
    %v363 = vshrl.u32 %v362, 7
    %v364 = vsub.s32 0, %v363
    %v365 = vrot.slane %v360, %v364
    %v366 = vlaneseq
    %v367 = vshrl.u32 %v366, 7
    %v368 = vsub.s32 1, %v367
    %v369 = vrot.slane %v360, %v368
    %v370 = vlaneseq
    %v371 = vshrl.u32 %v370, 7
    %v372 = vsub.s32 2, %v371
    %v373 = vrot.slane %v360, %v372
    %v377 = vadd.f32 %v348, %v365
    %v378 = vadd.f32 %v349, %v369
    %v379 = vadd.f32 %v350, %v373
    %v380 = vadd.f32 %v351, %v365
    %v381 = vadd.f32 %v352, %v369
    %v382 = vadd.f32 %v353, %v373
    %v383 = vadd.f32 %v354, %v365
    %v384 = vadd.f32 %v355, %v369
    %v385 = vadd.f32 %v356, %v373
    %v386 = vadd.f32 %v357, %v365
    %v387 = vadd.f32 %v358, %v369
    %v388 = vadd.f32 %v359, %v373
    %v389 = vpack.c.bf16 %v380, %v377
    %v390 = vpack.c.bf16 %v381, %v378
    %v391 = vpack.c.bf16 %v382, %v379
    %v392 = vpack.c.bf16 %v386, %v383
    %v393 = vpack.c.bf16 %v387, %v384
    %v394 = vpack.c.bf16 %v388, %v385
    %v401 = vunpack.c.l.b16 %v389
    %v402 = vunpack.c.l.b16 %v390
    %v403 = vunpack.c.l.b16 %v391
    %v404 = vunpack.c.h.b16 %v389
    %v405 = vunpack.c.h.b16 %v390
    %v406 = vunpack.c.h.b16 %v391
    %v407 = vunpack.c.l.b16 %v392
    %v408 = vunpack.c.l.b16 %v393
    %v409 = vunpack.c.l.b16 %v394
    %v410 = vunpack.c.h.b16 %v392
    %v411 = vunpack.c.h.b16 %v393
    %v412 = vunpack.c.h.b16 %v394
    %v413 = vpack.c.b16 %v402, %v401
    %v414 = vpack.c.b16 %v403, %v403
    %v415 = vpack.c.b16 %v405, %v404
    %v416 = vpack.c.b16 %v406, %v406
    %v417 = vpack.c.b16 %v408, %v407
    %v418 = vpack.c.b16 %v409, %v409
    %v419 = vpack.c.b16 %v411, %v410
    %v420 = vpack.c.b16 %v412, %v412
    %429 = vst [vmem:[%s3] sm:$0xff] %v413
    %430 = vst [vmem:[%s3 + $0x8] sm:$0xf] %v414
    %431 = vst [vmem:[%s3 + $0xc] sm:$0xff] %v415
    %432 = vst [vmem:[%s3 + $0x14] sm:$0xf] %v416
    %433 = vst [vmem:[%s3 + $0x18] sm:$0xff] %v417
    %434 = vst [vmem:[%s3 + $0x20] sm:$0xf] %v418
    %435 = vst [vmem:[%s3 + $0x24] sm:$0xff] %v419
    %436 = vst [vmem:[%s3 + $0x2c] sm:$0xf] %v420
  $region21: #{cnn_gru_forward.9} parent=0 // pred_fallthru
    _
  // Predicated region
  $region22: #{cnn_gru_forward.9} parent=0 // pred_check
    _
  $region23: #{cnn_gru_forward.9} parent=0 // pred_check_branch
    %438 = sbr.rel (0) target = $region25
  $region24: #{cnn_gru_forward.9} parent=0 // pred_region
    _
  $region25: #{cnn_gru_forward.9} parent=0 // pred_fallthru
    _
  // Predicated region
  $region26: #{cnn_gru_forward.9} parent=0 // pred_check
    _
  $region27: #{cnn_gru_forward.9} parent=0 // pred_check_branch
    %440 = sbr.rel (0) target = $region29
  $region28: #{cnn_gru_forward.9} parent=0 // pred_region
    _
  $region29: #{cnn_gru_forward.9} parent=0 // pred_fallthru
    _

// kernel: cnn_gru_forward.10
$region0: #{cnn_gru_forward.10}
  #allocation0 [shape = 'u32[]', space=smem, size = 0x4, offset = 0x4, fixed_abs, tag = 'smem constant byte address 0x4 - core index']
  #allocation1 [shape = 'u32[144,128]{1,0:T(1,128)}', space=vmem, size = 0x12000, scoped, tag = 'internal scratch']
  #allocation2 [shape = 'f32[8,128]{1,0:T(8,128)}', space=vmem, size = 0x1000, scoped, tag = 'scratch operand']
  %s0 = inlined_call_operand.vmem [shape: bf16[4,8,384], index: 0, kind: input, shape index: {}]
  %s1 = inlined_call_operand.vmem [shape: bf16[128,384], index: 1, kind: input, shape index: {}]
  %s2 = inlined_call_operand.vmem [shape: f32[1,128], index: 2, kind: input, shape index: {}]
  %s3 = inlined_call_operand.vmem [shape: f32[4,8,128], index: 3, kind: output, shape index: {}]
  %s4 = sld [smem:[#allocation0]]
  $region49: #{cnn_gru_forward.10} parent=0
    _
  %s6 = ssub.s32 1, %s4
  %s7 = scalar_select 0, %s6, %s4
  loop: start=0, step=1, limit=6
  $region2: #{cnn_gru_forward.10} parent=0 // loop_pre_header
    _
  $region3: #{cnn_gru_forward.10} parent=0 // loop_header
    %s9 = sphi 0, %s13
    %p10 = scmp.ge.s32.totalorder %s9, 6
    %s19 = sphi 0, %s21
    %s22 = sphi 0, %s19
    %s23 = sphi 0, %s22
    %s39 = sphi 0, %s23
    %s43 = sphi 0, %s43
    %s45 = sphi 0, %s43
    %s46 = sphi 0, %s45
    %s60 = sphi 0, %s46
    %s64 = sphi 0, %s64
    %s66 = sphi 0, %s64
    %s67 = sphi 0, %s66
    %s81 = sphi 0, %s67
    %s87 = sphi 0, %s89
    %s90 = sphi 0, %s87
    %s91 = sphi 0, %s90
    %s107 = sphi 0, %s91
  $region4: #{cnn_gru_forward.10} parent=0 // loop_header_branch
    %12 = sbr.rel (%p10) target = $region8
  $region5: #{cnn_gru_forward.10} parent=0 // loop_body
    %s14 = ssub.s32 %s9, 1
    %s15 = ssub.s32 %s9, 2
    %s16 = sadd.s32 %s9, 1
    %s17 = ssub.s32 %s9, %s16
    %p18 = scmp.eq.s32.totalorder %s17, 0
    %s20 = sadd.s32 %s19, 1
    %s21 = scalar_select %p18, %s19, %s20
    %p24 = pneg %p18
    %p25 = scmp.eq.s32.totalorder %s9, 3
    %p26 = por %p24, %p25
    %p27 = scmp.ne.s32.totalorder %s19, %s22
    %p28 = scmp.eq.s32.totalorder %s9, 0
    %p29 = por %p27, %p28
    %p30 = scmp.ne.s32.totalorder %s19, %s22
    %p31 = scmp.eq.s32.totalorder %s14, 3
    %p32 = por %p30, %p31
    %p33 = scmp.ne.s32.totalorder %s22, %s23
    %p34 = scmp.eq.s32.totalorder %s14, 0
    %p35 = por %p33, %p34
    %p36 = scmp.ne.s32.totalorder %s22, %s23
    %p37 = scmp.eq.s32.totalorder %s15, 3
    %p38 = por %p36, %p37
    %p40 = scmp.ne.s32.totalorder %s23, %s39
    %p41 = scmp.eq.s32.totalorder %s15, 0
    %p42 = por %p40, %p41
    %s44 = sadd.s32 %s43, 1
    %p47 = scmp.eq.s32.totalorder %s9, 3
    %p48 = scmp.ne.s32.totalorder %s43, %s45
    %p49 = scmp.eq.s32.totalorder %s9, 0
    %p50 = por %p48, %p49
    %p51 = scmp.ne.s32.totalorder %s43, %s45
    %p52 = scmp.eq.s32.totalorder %s14, 3
    %p53 = por %p51, %p52
    %p54 = scmp.ne.s32.totalorder %s45, %s46
    %p55 = scmp.eq.s32.totalorder %s14, 0
    %p56 = por %p54, %p55
    %p57 = scmp.ne.s32.totalorder %s45, %s46
    %p58 = scmp.eq.s32.totalorder %s15, 3
    %p59 = por %p57, %p58
    %p61 = scmp.ne.s32.totalorder %s46, %s60
    %p62 = scmp.eq.s32.totalorder %s15, 0
    %p63 = por %p61, %p62
    %s65 = sadd.s32 %s64, 1
    %p68 = scmp.eq.s32.totalorder %s9, 3
    %p69 = scmp.ne.s32.totalorder %s64, %s66
    %p70 = scmp.eq.s32.totalorder %s9, 0
    %p71 = por %p69, %p70
    %p72 = scmp.ne.s32.totalorder %s64, %s66
    %p73 = scmp.eq.s32.totalorder %s14, 3
    %p74 = por %p72, %p73
    %p75 = scmp.ne.s32.totalorder %s66, %s67
    %p76 = scmp.eq.s32.totalorder %s14, 0
    %p77 = por %p75, %p76
    %p78 = scmp.ne.s32.totalorder %s66, %s67
    %p79 = scmp.eq.s32.totalorder %s15, 3
    %p80 = por %p78, %p79
    %p82 = scmp.ne.s32.totalorder %s67, %s81
    %p83 = scmp.eq.s32.totalorder %s15, 0
    %p84 = por %p82, %p83
    %s85 = ssub.s32 %s9, %s16
    %p86 = scmp.eq.s32.totalorder %s85, 0
    %s88 = sadd.s32 %s87, 1
    %s89 = scalar_select %p86, %s87, %s88
    %p92 = pneg %p86
    %p93 = scmp.eq.s32.totalorder %s9, 3
    %p94 = por %p92, %p93
    %p95 = scmp.ne.s32.totalorder %s87, %s90
    %p96 = scmp.eq.s32.totalorder %s9, 0
    %p97 = por %p95, %p96
    %p98 = scmp.ne.s32.totalorder %s87, %s90
    %p99 = scmp.eq.s32.totalorder %s14, 3
    %p100 = por %p98, %p99
    %p101 = scmp.ne.s32.totalorder %s90, %s91
    %p102 = scmp.eq.s32.totalorder %s14, 0
    %p103 = por %p101, %p102
    %p104 = scmp.ne.s32.totalorder %s90, %s91
    %p105 = scmp.eq.s32.totalorder %s15, 3
    %p106 = por %p104, %p105
    %p108 = scmp.ne.s32.totalorder %s91, %s107
    %p109 = scmp.eq.s32.totalorder %s15, 0
    %p110 = por %p108, %p109
    %p111 = scmp.le.s32.totalorder 1, %s9
    %p112 = scmp.lt.s32.totalorder %s9, 5
    %p113 = pnand %p111, %p112
    %p114 = pneg %p113
    // Predicated region
    $region9: #{cnn_gru_forward.10} parent=5 // pred_check
      _
    $region10: #{cnn_gru_forward.10} parent=5 // pred_check_branch
      %116 = sbr.rel (%p113) target = $region12
    $region11: #{cnn_gru_forward.10} parent=5 // pred_region
      %s117 = ssub.s32 %s9, 1
      // Predicated region
      $region13: #{cnn_gru_forward.10} parent=11 // pred_check
        %p118 = pneg %p56
      $region14: #{cnn_gru_forward.10} parent=11 // pred_check_branch
        %120 = sbr.rel (%p118) target = $region16
      $region15: #{cnn_gru_forward.10} parent=11 // pred_region
        _
      $region16: #{cnn_gru_forward.10} parent=11 // pred_fallthru
        _
      // Predicated region
      $region17: #{cnn_gru_forward.10} parent=11 // pred_check
        %p121 = pneg %p77
      $region18: #{cnn_gru_forward.10} parent=11 // pred_check_branch
        %123 = sbr.rel (%p121) target = $region20
      $region19: #{cnn_gru_forward.10} parent=11 // pred_region
        _
      $region20: #{cnn_gru_forward.10} parent=11 // pred_fallthru
        _
    $region12: #{cnn_gru_forward.10} parent=5 // pred_fallthru
      _
    %p124 = scmp.lt.s32.totalorder %s9, 4
    // Predicated region
    $region21: #{cnn_gru_forward.10} parent=5 // pred_check
      %p125 = pneg %p124
    $region22: #{cnn_gru_forward.10} parent=5 // pred_check_branch
      %127 = sbr.rel (%p125) target = $region24
    $region23: #{cnn_gru_forward.10} parent=5 // pred_region
      // Predicated region
      $region25: #{cnn_gru_forward.10} parent=23 // pred_check
        %p128 = pneg %p29
      $region26: #{cnn_gru_forward.10} parent=23 // pred_check_branch
        %130 = sbr.rel (%p128) target = $region28
      $region27: #{cnn_gru_forward.10} parent=23 // pred_region
        %p131 = scmp.lt.s32.totalorder %s9, 3
        %s132 = scalar_select %p131, %s9, 3
        %s133 = smul.addr %s132, 3
        %s134 = smul.addr %s133, 4
        %s135 = scalar_lea.vmem %s0, %s134
      $region28: #{cnn_gru_forward.10} parent=23 // pred_fallthru
        _
    $region24: #{cnn_gru_forward.10} parent=5 // pred_fallthru
      _
    %p136 = scmp.le.s32.totalorder 1, %s9
    %p137 = scmp.lt.s32.totalorder %s9, 5
    %p138 = pnand %p136, %p137
    %p139 = pneg %p138
    // Predicated region
    $region29: #{cnn_gru_forward.10} parent=5 // pred_check
      _
    $region30: #{cnn_gru_forward.10} parent=5 // pred_check_branch
      %141 = sbr.rel (%p138) target = $region32
    $region31: #{cnn_gru_forward.10} parent=5 // pred_region
      %s142 = ssub.s32 %s9, 1
      %p143 = scmp.lt.s32.totalorder %s14, 3
      %s144 = scalar_select %p143, %s14, 3
      %s145 = smul.addr %s144, 3
      %s146 = smul.addr %s145, 4
      %s147 = scalar_lea.vmem %s0, %s146
      %p148 = pneg %p35
      %p149 = pneg %p32
      %p150 = pneg %p56
      %p151 = pneg %p53
      %p152 = pneg %p77
      %p153 = pneg %p74
      %p154 = pneg %p103
      %p155 = pneg %p100
      %p156 = scmp.lt.s32.totalorder %s14, 3
      %s157 = scalar_select %p156, %s14, 3
      %s158 = smul.addr %s157, 8
      %s159 = scalar_lea.vmem %s3, %s158
      %p160 = scmp.lt.s32.totalorder %s14, 3
      %s161 = scalar_select %p160, %s14, 3
      %s162 = smul.addr %s161, 3
      %s163 = smul.addr %s162, 4
      %s164 = scalar_lea.vmem %s0, %s163
      %p165 = scmp.lt.s32.totalorder %s14, 3
      %s166 = scalar_select %p165, %s14, 3
      %s167 = smul.addr %s166, 8
      %s168 = scalar_lea.vmem %s3, %s167
      %p170 = scmp.eq.s32.totalorder %s14, 0
      // Predicated region
      $region33: #{cnn_gru_forward.10} parent=31 // pred_check
        %p171 = pneg %p170
      $region34: #{cnn_gru_forward.10} parent=31 // pred_check_branch
        %173 = sbr.rel (%p171) target = $region36
      $region35: #{cnn_gru_forward.10} parent=31 // pred_region
        %174 = vst [vmem:[#allocation2] sm:$0xff] 0.0
      $region36: #{cnn_gru_forward.10} parent=31 // pred_fallthru
        _
      %v175 = vld [vmem:[#allocation2] sm:$0xff]
      %v176 = vld [vmem:[%s164] sm:$0xff]
      %v177 = vld [vmem:[%s164 + $0x8] sm:$0xf]
      %v178 = vunpack.c.l.bf16 %v176
      %v179 = vunpack.c.h.bf16 %v176
      %v180 = vunpack.c.l.bf16 %v177
      %v181 = vpack.c.bf16 %v175, %v175
      %v182 = vld [vmem:[%s1] sm:$0xff]
      %v183 = vld [vmem:[%s1 + $0x8] sm:$0xf]
      %v184 = vld [vmem:[%s1 + $0xc] sm:$0xff]
      %v185 = vld [vmem:[%s1 + $0x14] sm:$0xf]
      %v186 = vld [vmem:[%s1 + $0x18] sm:$0xff]
      %v187 = vld [vmem:[%s1 + $0x20] sm:$0xf]
      %v188 = vld [vmem:[%s1 + $0x24] sm:$0xff]
      %v189 = vld [vmem:[%s1 + $0x2c] sm:$0xf]
      %v190 = vld [vmem:[%s1 + $0x30] sm:$0xff]
      %v191 = vld [vmem:[%s1 + $0x38] sm:$0xf]
      %v192 = vld [vmem:[%s1 + $0x3c] sm:$0xff]
      %v193 = vld [vmem:[%s1 + $0x44] sm:$0xf]
      %v194 = vld [vmem:[%s1 + $0x48] sm:$0xff]
      %v195 = vld [vmem:[%s1 + $0x50] sm:$0xf]
      %v196 = vld [vmem:[%s1 + $0x54] sm:$0xff]
      %v197 = vld [vmem:[%s1 + $0x5c] sm:$0xf]
      %v198 = vld [vmem:[%s1 + $0x60] sm:$0xff]
      %v199 = vld [vmem:[%s1 + $0x68] sm:$0xf]
      %v200 = vld [vmem:[%s1 + $0x6c] sm:$0xff]
      %v201 = vld [vmem:[%s1 + $0x74] sm:$0xf]
      %v202 = vld [vmem:[%s1 + $0x78] sm:$0xff]
      %v203 = vld [vmem:[%s1 + $0x80] sm:$0xf]
      %v204 = vld [vmem:[%s1 + $0x84] sm:$0xff]
      %v205 = vld [vmem:[%s1 + $0x8c] sm:$0xf]
      %v206 = vld [vmem:[%s1 + $0x90] sm:$0xff]
      %v207 = vld [vmem:[%s1 + $0x98] sm:$0xf]
      %v208 = vld [vmem:[%s1 + $0x9c] sm:$0xff]
      %v209 = vld [vmem:[%s1 + $0xa4] sm:$0xf]
      %v210 = vld [vmem:[%s1 + $0xa8] sm:$0xff]
      %v211 = vld [vmem:[%s1 + $0xb0] sm:$0xf]
      %v212 = vld [vmem:[%s1 + $0xb4] sm:$0xff]
      %v213 = vld [vmem:[%s1 + $0xbc] sm:$0xf]
      %v246 = vunpack.c.l.b16 %v182
      %v247 = vunpack.c.h.b16 %v182
      %v248 = vunpack.c.l.b16 %v183
      %v249 = vunpack.c.l.b16 %v184
      %v250 = vunpack.c.h.b16 %v184
      %v251 = vunpack.c.l.b16 %v185
      %v252 = vunpack.c.l.b16 %v186
      %v253 = vunpack.c.h.b16 %v186
      %v254 = vunpack.c.l.b16 %v187
      %v255 = vunpack.c.l.b16 %v188
      %v256 = vunpack.c.h.b16 %v188
      %v257 = vunpack.c.l.b16 %v189
      %v258 = vunpack.c.l.b16 %v190
      %v259 = vunpack.c.h.b16 %v190
      %v260 = vunpack.c.l.b16 %v191
      %v261 = vunpack.c.l.b16 %v192
      %v262 = vunpack.c.h.b16 %v192
      %v263 = vunpack.c.l.b16 %v193
      %v264 = vunpack.c.l.b16 %v194
      %v265 = vunpack.c.h.b16 %v194
      %v266 = vunpack.c.l.b16 %v195
      %v267 = vunpack.c.l.b16 %v196
      %v268 = vunpack.c.h.b16 %v196
      %v269 = vunpack.c.l.b16 %v197
      %v270 = vunpack.c.l.b16 %v198
      %v271 = vunpack.c.h.b16 %v198
      %v272 = vunpack.c.l.b16 %v199
      %v273 = vunpack.c.l.b16 %v200
      %v274 = vunpack.c.h.b16 %v200
      %v275 = vunpack.c.l.b16 %v201
      %v276 = vunpack.c.l.b16 %v202
      %v277 = vunpack.c.h.b16 %v202
      %v278 = vunpack.c.l.b16 %v203
      %v279 = vunpack.c.l.b16 %v204
      %v280 = vunpack.c.h.b16 %v204
      %v281 = vunpack.c.l.b16 %v205
      %v282 = vunpack.c.l.b16 %v206
      %v283 = vunpack.c.h.b16 %v206
      %v284 = vunpack.c.l.b16 %v207
      %v285 = vunpack.c.l.b16 %v208
      %v286 = vunpack.c.h.b16 %v208
      %v287 = vunpack.c.l.b16 %v209
      %v288 = vunpack.c.l.b16 %v210
      %v289 = vunpack.c.h.b16 %v210
      %v290 = vunpack.c.l.b16 %v211
      %v291 = vunpack.c.l.b16 %v212
      %v292 = vunpack.c.h.b16 %v212
      %v293 = vunpack.c.l.b16 %v213
      %v294 = vpack.c.b16 %v249, %v246
      %v295 = vpack.c.b16 %v250, %v247
      %v296 = vpack.c.b16 %v251, %v248
      %v297 = vpack.c.b16 %v255, %v252
      %v298 = vpack.c.b16 %v256, %v253
      %v299 = vpack.c.b16 %v257, %v254
      %v300 = vpack.c.b16 %v261, %v258
      %v301 = vpack.c.b16 %v262, %v259
      %v302 = vpack.c.b16 %v263, %v260
      %v303 = vpack.c.b16 %v267, %v264
      %v304 = vpack.c.b16 %v268, %v265
      %v305 = vpack.c.b16 %v269, %v266
      %v306 = vpack.c.b16 %v273, %v270
      %v307 = vpack.c.b16 %v274, %v271
      %v308 = vpack.c.b16 %v275, %v272
      %v309 = vpack.c.b16 %v279, %v276
      %v310 = vpack.c.b16 %v280, %v277
      %v311 = vpack.c.b16 %v281, %v278
      %v312 = vpack.c.b16 %v285, %v282
      %v313 = vpack.c.b16 %v286, %v283
      %v314 = vpack.c.b16 %v287, %v284
      %v315 = vpack.c.b16 %v291, %v288
      %v316 = vpack.c.b16 %v292, %v289
      %v317 = vpack.c.b16 %v293, %v290
      %342 = vmatprep.subr.bf16.mxu0 %v316
      %343 = vmatpush1.bf16.msra.mxu0 %v315
      %344 = vmatprep.subr.bf16.mxu0 %v313
      %345 = vmatpush1.bf16.msra.mxu0 %v312
      %346 = vmatprep.subr.bf16.mxu0 %v310
      %347 = vmatpush1.bf16.msra.mxu0 %v309
      %348 = vmatprep.subr.bf16.mxu0 %v307
      %349 = vmatpush1.bf16.msra.mxu0 %v306
      %350 = vmatprep.subr.bf16.mxu0 %v304
      %351 = vmatpush1.bf16.msra.mxu0 %v303
      %352 = vmatprep.subr.bf16.mxu0 %v301
      %353 = vmatpush1.bf16.msra.mxu0 %v300
      %354 = vmatprep.subr.bf16.mxu0 %v298
      %355 = vmatpush1.bf16.msra.mxu0 %v297
      %356 = vmatprep.subr.bf16.mxu0 %v295
      %357 = vmatpush1.bf16.msra.mxu0 %v294
      %358 = vmatprep.subr.bf16.mxu0 0
      %359 = vmatpush2.bf16.msra.mxu0 0
      %360 = vmatprep.subr.bf16.mxu0 0
      %361 = vmatpush2.bf16.msra.mxu0 0
      %362 = vmatprep.subr.bf16.mxu0 0
      %363 = vmatpush2.bf16.msra.mxu0 0
      %364 = vmatprep.subr.bf16.mxu0 0
      %365 = vmatpush2.bf16.msra.mxu0 0
      %366 = vmatprep.subr.bf16.mxu0 0
      %367 = vmatpush2.bf16.msra.mxu0 0
      %368 = vmatprep.subr.bf16.mxu0 0
      %369 = vmatpush2.bf16.msra.mxu0 0
      %370 = vmatprep.subr.bf16.mxu0 0
      %371 = vmatpush2.bf16.msra.mxu0 0
      %372 = vmatprep.subr.bf16.mxu0 0
      %373 = vmatpush2.bf16.msra.mxu0 0
      %374 = vmatprep.mubr.bf16.mxu0 0
      %375 = vmatmul.mubr.bf16.gmra.mxu0 %v181
      %v376 = vpop.f32.mrf.mxu0
      %v377 = vadd.f32 0.0, %v376
      %v378 = vpop.f32.mrf.mxu0
      %v379 = vadd.f32 0.0, %v378
      %v380 = vpop.f32.mrf.mxu0
      %v381 = vpop.f32.mrf.mxu0
      %382 = vdwg.mxu0
      %383 = vmatprep.subr.bf16.mxu0 0
      %384 = vmatpush1.bf16.msra.mxu0 %v317
      %385 = vmatprep.subr.bf16.mxu0 0
      %386 = vmatpush1.bf16.msra.mxu0 %v314
      %387 = vmatprep.subr.bf16.mxu0 0
      %388 = vmatpush1.bf16.msra.mxu0 %v311
      %389 = vmatprep.subr.bf16.mxu0 0
      %390 = vmatpush1.bf16.msra.mxu0 %v308
      %391 = vmatprep.subr.bf16.mxu0 0
      %392 = vmatpush1.bf16.msra.mxu0 %v305
      %393 = vmatprep.subr.bf16.mxu0 0
      %394 = vmatpush1.bf16.msra.mxu0 %v302
      %395 = vmatprep.subr.bf16.mxu0 0
      %396 = vmatpush1.bf16.msra.mxu0 %v299
      %397 = vmatprep.subr.bf16.mxu0 0
      %398 = vmatpush1.bf16.msra.mxu0 %v296
      %399 = vmatprep.subr.bf16.mxu0 0
      %400 = vmatpush2.bf16.msra.mxu0 0
      %401 = vmatprep.subr.bf16.mxu0 0
      %402 = vmatpush2.bf16.msra.mxu0 0
      %403 = vmatprep.subr.bf16.mxu0 0
      %404 = vmatpush2.bf16.msra.mxu0 0
      %405 = vmatprep.subr.bf16.mxu0 0
      %406 = vmatpush2.bf16.msra.mxu0 0
      %407 = vmatprep.subr.bf16.mxu0 0
      %408 = vmatpush2.bf16.msra.mxu0 0
      %409 = vmatprep.subr.bf16.mxu0 0
      %410 = vmatpush2.bf16.msra.mxu0 0
      %411 = vmatprep.subr.bf16.mxu0 0
      %412 = vmatpush2.bf16.msra.mxu0 0
      %413 = vmatprep.subr.bf16.mxu0 0
      %414 = vmatpush2.bf16.msra.mxu0 0
      %415 = vmatprep.mubr.bf16.mxu0 0
      %416 = vmatmul.mubr.bf16.gmra.mxu0 %v181
      %v417 = vpop.f32.mrf.mxu0
      %v418 = vadd.f32 0.0, %v417
      %v419 = vpop.f32.mrf.mxu0
      %v420 = vpop.f32.mrf.mxu0
      %v421 = vpop.f32.mrf.mxu0
      %422 = vdwg.mxu0
      %v423 = vadd.f32 %v178, %v377
      %v424 = vxor.u32 %v423, 2147483648
      %v425 = vmul.f32 %v424, 1.442695
      %v426 = vpow.pop %v425
      %v427 = vadd.f32 %v426, 1.0
      %v428 = vrcp.pop %v427
      %v429 = vmul.f32 1.0, %v428
      %v430 = vadd.f32 %v179, %v379
      %v431 = vxor.u32 %v430, 2147483648
      %v432 = vmul.f32 %v431, 1.442695
      %v433 = vpow.pop %v432
      %v434 = vadd.f32 %v433, 1.0
      %v435 = vrcp.pop %v434
      %v436 = vmul.f32 1.0, %v435
      %v437 = vld [vmem:[%s2] sm:$0x1]
      %v439 = vlaneseq
      %v440 = vshrl.u32 %v439, 7
      %v441 = vsub.s32 0, %v440
      %v442 = vrot.slane %v437, %v441
      %v444 = vadd.f32 %v418, %v442
      %v445 = vmul.f32 %v429, %v444
      %v446 = vadd.f32 %v180, %v445
      %v447 = vtanh.pop %v446
      %v448 = vsub.f32 1.0, %v436
      %v449 = vmul.f32 %v448, %v447
      %v450 = vmul.f32 %v436, %v175
      %v451 = vadd.f32 %v449, %v450
      %452 = vst [vmem:[#allocation2] sm:$0xff] %v451
      %453 = vst [vmem:[%s168] sm:$0xff] %v451
      %p454 = scmp.lt.s32.totalorder %s14, 3
      %s455 = scalar_select %p454, %s14, 3
      %s456 = smul.addr %s455, 8
      %s457 = scalar_lea.vmem %s3, %s456
      // Predicated region
      $region37: #{cnn_gru_forward.10} parent=31 // pred_check
        %p458 = pneg %p100
      $region38: #{cnn_gru_forward.10} parent=31 // pred_check_branch
        %460 = sbr.rel (%p458) target = $region40
      $region39: #{cnn_gru_forward.10} parent=31 // pred_region
        _
      $region40: #{cnn_gru_forward.10} parent=31 // pred_fallthru
        _
    $region32: #{cnn_gru_forward.10} parent=5 // pred_fallthru
      _
    %p461 = scmp.le.s32.totalorder 2, %s9
    // Predicated region
    $region41: #{cnn_gru_forward.10} parent=5 // pred_check
      %p462 = pneg %p461
    $region42: #{cnn_gru_forward.10} parent=5 // pred_check_branch
      %464 = sbr.rel (%p462) target = $region44
    $region43: #{cnn_gru_forward.10} parent=5 // pred_region
      %s465 = ssub.s32 %s9, 2
      // Predicated region
      $region45: #{cnn_gru_forward.10} parent=43 // pred_check
        %p466 = pneg %p106
      $region46: #{cnn_gru_forward.10} parent=43 // pred_check_branch
        %468 = sbr.rel (%p466) target = $region48
      $region47: #{cnn_gru_forward.10} parent=43 // pred_region
        %p469 = scmp.lt.s32.totalorder %s15, 3
        %s470 = scalar_select %p469, %s15, 3
        %s471 = smul.addr %s470, 8
        %s472 = scalar_lea.vmem %s3, %s471
      $region48: #{cnn_gru_forward.10} parent=43 // pred_fallthru
        _
    $region44: #{cnn_gru_forward.10} parent=5 // pred_fallthru
      _
  $region6: #{cnn_gru_forward.10} parent=0 // loop_footer
    %s13 = sadd.s32 1, %s9
  $region7: #{cnn_gru_forward.10} parent=0 // loop_footer_branch
    %8 = sbr.rel target = $region3
  $region8: #{cnn_gru_forward.10} parent=0 // loop_exit
    _

// kernel: cnn_gru_forward.13
$region0: #{cnn_gru_forward.13}
  #allocation0 [shape = 'u32[]', space=smem, size = 0x4, offset = 0x4, fixed_abs, tag = 'smem constant byte address 0x4 - core index']
  #allocation1 [shape = 'u32[144,128]{1,0:T(1,128)}', space=vmem, size = 0x12000, scoped, tag = 'internal scratch']
  #allocation2 [shape = 'f32[8,128]{1,0:T(8,128)}', space=vmem, size = 0x1000, scoped, tag = 'scratch operand']
  %s0 = inlined_call_operand.vmem [shape: bf16[8,128], index: 0, kind: input, shape index: {}]
  %s1 = inlined_call_operand.vmem [shape: bf16[128,128], index: 1, kind: input, shape index: {}]
  %s2 = inlined_call_operand.vmem [shape: f32[1,128], index: 2, kind: input, shape index: {}]
  %s3 = inlined_call_operand.vmem [shape: f32[8,128], index: 3, kind: output, shape index: {}]
  %s4 = sld [smem:[#allocation0]]
  $region30: #{cnn_gru_forward.13} parent=0
    _
  %s6 = ssub.s32 1, %s4
  %s7 = scalar_select 0, %s6, %s4
  // Predicated region
  $region2: #{cnn_gru_forward.13} parent=0 // pred_check
    _
  $region3: #{cnn_gru_forward.13} parent=0 // pred_check_branch
    %9 = sbr.rel (0) target = $region5
  $region4: #{cnn_gru_forward.13} parent=0 // pred_region
    _
  $region5: #{cnn_gru_forward.13} parent=0 // pred_fallthru
    _
  // Predicated region
  $region6: #{cnn_gru_forward.13} parent=0 // pred_check
    _
  $region7: #{cnn_gru_forward.13} parent=0 // pred_check_branch
    %11 = sbr.rel (0) target = $region9
  $region8: #{cnn_gru_forward.13} parent=0 // pred_region
    _
  $region9: #{cnn_gru_forward.13} parent=0 // pred_fallthru
    _
  // Predicated region
  $region10: #{cnn_gru_forward.13} parent=0 // pred_check
    _
  $region11: #{cnn_gru_forward.13} parent=0 // pred_check_branch
    %13 = sbr.rel (0) target = $region13
  $region12: #{cnn_gru_forward.13} parent=0 // pred_region
    _
  $region13: #{cnn_gru_forward.13} parent=0 // pred_fallthru
    _
  %p15 = scmp.eq.s32.totalorder 0, 0
  // Predicated region
  $region14: #{cnn_gru_forward.13} parent=0 // pred_check
    %p16 = pneg %p15
  $region15: #{cnn_gru_forward.13} parent=0 // pred_check_branch
    %18 = sbr.rel (%p16) target = $region17
  $region16: #{cnn_gru_forward.13} parent=0 // pred_region
    %19 = vst [vmem:[#allocation2] sm:$0xff] 0.0
  $region17: #{cnn_gru_forward.13} parent=0 // pred_fallthru
    _
  %v20 = vld [vmem:[#allocation2] sm:$0xff]
  %v21 = vld [vmem:[%s0] sm:$0xf]
  %v22 = vld [vmem:[%s1] sm:$0xf]
  %v23 = vld [vmem:[%s1 + $0x4] sm:$0xf]
  %v24 = vld [vmem:[%s1 + $0x8] sm:$0xf]
  %v25 = vld [vmem:[%s1 + $0xc] sm:$0xf]
  %v26 = vld [vmem:[%s1 + $0x10] sm:$0xf]
  %v27 = vld [vmem:[%s1 + $0x14] sm:$0xf]
  %v28 = vld [vmem:[%s1 + $0x18] sm:$0xf]
  %v29 = vld [vmem:[%s1 + $0x1c] sm:$0xf]
  %v30 = vld [vmem:[%s1 + $0x20] sm:$0xf]
  %v31 = vld [vmem:[%s1 + $0x24] sm:$0xf]
  %v32 = vld [vmem:[%s1 + $0x28] sm:$0xf]
  %v33 = vld [vmem:[%s1 + $0x2c] sm:$0xf]
  %v34 = vld [vmem:[%s1 + $0x30] sm:$0xf]
  %v35 = vld [vmem:[%s1 + $0x34] sm:$0xf]
  %v36 = vld [vmem:[%s1 + $0x38] sm:$0xf]
  %v37 = vld [vmem:[%s1 + $0x3c] sm:$0xf]
  %v54 = vunpack.c.l.b16 %v22
  %v55 = vunpack.c.l.b16 %v23
  %v56 = vunpack.c.l.b16 %v24
  %v57 = vunpack.c.l.b16 %v25
  %v58 = vunpack.c.l.b16 %v26
  %v59 = vunpack.c.l.b16 %v27
  %v60 = vunpack.c.l.b16 %v28
  %v61 = vunpack.c.l.b16 %v29
  %v62 = vunpack.c.l.b16 %v30
  %v63 = vunpack.c.l.b16 %v31
  %v64 = vunpack.c.l.b16 %v32
  %v65 = vunpack.c.l.b16 %v33
  %v66 = vunpack.c.l.b16 %v34
  %v67 = vunpack.c.l.b16 %v35
  %v68 = vunpack.c.l.b16 %v36
  %v69 = vunpack.c.l.b16 %v37
  %v70 = vpack.c.b16 %v55, %v54
  %v71 = vpack.c.b16 %v57, %v56
  %v72 = vpack.c.b16 %v59, %v58
  %v73 = vpack.c.b16 %v61, %v60
  %v74 = vpack.c.b16 %v63, %v62
  %v75 = vpack.c.b16 %v65, %v64
  %v76 = vpack.c.b16 %v67, %v66
  %v77 = vpack.c.b16 %v69, %v68
  %86 = vmatprep.subr.bf16.mxu0 0
  %87 = vmatpush1.bf16.msra.mxu0 %v77
  %88 = vmatprep.subr.bf16.mxu0 0
  %89 = vmatpush1.bf16.msra.mxu0 %v76
  %90 = vmatprep.subr.bf16.mxu0 0
  %91 = vmatpush1.bf16.msra.mxu0 %v75
  %92 = vmatprep.subr.bf16.mxu0 0
  %93 = vmatpush1.bf16.msra.mxu0 %v74
  %94 = vmatprep.subr.bf16.mxu0 0
  %95 = vmatpush1.bf16.msra.mxu0 %v73
  %96 = vmatprep.subr.bf16.mxu0 0
  %97 = vmatpush1.bf16.msra.mxu0 %v72
  %98 = vmatprep.subr.bf16.mxu0 0
  %99 = vmatpush1.bf16.msra.mxu0 %v71
  %100 = vmatprep.subr.bf16.mxu0 0
  %101 = vmatpush1.bf16.msra.mxu0 %v70
  %102 = vmatprep.subr.bf16.mxu0 0
  %103 = vmatpush2.bf16.msra.mxu0 0
  %104 = vmatprep.subr.bf16.mxu0 0
  %105 = vmatpush2.bf16.msra.mxu0 0
  %106 = vmatprep.subr.bf16.mxu0 0
  %107 = vmatpush2.bf16.msra.mxu0 0
  %108 = vmatprep.subr.bf16.mxu0 0
  %109 = vmatpush2.bf16.msra.mxu0 0
  %110 = vmatprep.subr.bf16.mxu0 0
  %111 = vmatpush2.bf16.msra.mxu0 0
  %112 = vmatprep.subr.bf16.mxu0 0
  %113 = vmatpush2.bf16.msra.mxu0 0
  %114 = vmatprep.subr.bf16.mxu0 0
  %115 = vmatpush2.bf16.msra.mxu0 0
  %116 = vmatprep.subr.bf16.mxu0 0
  %117 = vmatpush2.bf16.msra.mxu0 0
  %118 = vmatprep.mubr.bf16.mxu0 0
  %119 = vmatmul.mubr.bf16.gmra.mxu0 %v21
  %v120 = vpop.f32.mrf.mxu0
  %v121 = vadd.f32 0.0, %v120
  %v122 = vpop.f32.mrf.mxu0
  %v123 = vpop.f32.mrf.mxu0
  %v124 = vpop.f32.mrf.mxu0
  %125 = vdwg.mxu0
  %v126 = vadd.f32 %v20, %v121
  %127 = vst [vmem:[#allocation2] sm:$0xff] %v126
  // Predicated region
  $region18: #{cnn_gru_forward.13} parent=0 // pred_check
    %p128 = pneg %p15
  $region19: #{cnn_gru_forward.13} parent=0 // pred_check_branch
    %130 = sbr.rel (%p128) target = $region21
  $region20: #{cnn_gru_forward.13} parent=0 // pred_region
    %v131 = vld [vmem:[#allocation2] sm:$0xff]
    %v132 = vld [vmem:[%s2] sm:$0x1]
    %v134 = vlaneseq
    %v135 = vshrl.u32 %v134, 7
    %v136 = vsub.s32 0, %v135
    %v137 = vrot.slane %v132, %v136
    %v139 = vadd.f32 %v131, %v137
    %140 = vst [vmem:[%s3] sm:$0xff] %v139
  $region21: #{cnn_gru_forward.13} parent=0 // pred_fallthru
    _
  // Predicated region
  $region22: #{cnn_gru_forward.13} parent=0 // pred_check
    _
  $region23: #{cnn_gru_forward.13} parent=0 // pred_check_branch
    %142 = sbr.rel (0) target = $region25
  $region24: #{cnn_gru_forward.13} parent=0 // pred_region
    _
  $region25: #{cnn_gru_forward.13} parent=0 // pred_fallthru
    _
  // Predicated region
  $region26: #{cnn_gru_forward.13} parent=0 // pred_check
    _
  $region27: #{cnn_gru_forward.13} parent=0 // pred_check_branch
    %144 = sbr.rel (0) target = $region29
  $region28: #{cnn_gru_forward.13} parent=0 // pred_region
    _
  $region29: #{cnn_gru_forward.13} parent=0 // pred_fallthru
    _

// kernel: cnn_gru_forward.8
$region0: #{cnn_gru_forward.8}
  #allocation0 [shape = 'u32[]', space=smem, size = 0x4, offset = 0x4, fixed_abs, tag = 'smem constant byte address 0x4 - core index']
  #allocation1 [shape = 'u32[144,128]{1,0:T(1,128)}', space=vmem, size = 0x12000, scoped, tag = 'internal scratch']
  #allocation2 [shape = 'f32[8,128]{1,0:T(8,128)}', space=vmem, size = 0x1000, scoped, tag = 'scratch operand']
  %s0 = inlined_call_operand.vmem [shape: bf16[8,32768], index: 0, kind: input, shape index: {}]
  %s1 = inlined_call_operand.vmem [shape: bf16[32768,128], index: 1, kind: input, shape index: {}]
  %s2 = inlined_call_operand.vmem [shape: f32[1,128], index: 2, kind: input, shape index: {}]
  %s3 = inlined_call_operand.vmem [shape: bf16[8,128], index: 3, kind: output, shape index: {}]
  %s4 = sld [smem:[#allocation0]]
  $region53: #{cnn_gru_forward.8} parent=0
    _
  %s6 = ssub.s32 1, %s4
  %s7 = scalar_select 0, %s6, %s4
  loop: start=0, step=1, limit=10
  $region2: #{cnn_gru_forward.8} parent=0 // loop_pre_header
    _
  $region3: #{cnn_gru_forward.8} parent=0 // loop_header
    %s9 = sphi 0, %s13
    %p10 = scmp.ge.s32.totalorder %s9, 10
    %s16 = sphi 0, %s35
    %s17 = sphi 0, %s31
    %s18 = sphi 0, %s27
    %s19 = sphi 0, %s16
    %s20 = sphi 0, %s17
    %s21 = sphi 0, %s18
    %s22 = sphi 0, %s19
    %s23 = sphi 0, %s20
    %s24 = sphi 0, %s21
    %s40 = sphi 0, %s42
    %s43 = sphi 0, %s40
    %s44 = sphi 0, %s43
    %s60 = sphi 0, %s44
    %s68 = sphi 0, %s70
    %s71 = sphi 0, %s68
    %s72 = sphi 0, %s71
    %s88 = sphi 0, %s72
    %s94 = sphi 0, %s96
    %s97 = sphi 0, %s94
    %s98 = sphi 0, %s97
    %s114 = sphi 0, %s98
    %s122 = sphi 0, %s124
    %s125 = sphi 0, %s122
    %s126 = sphi 0, %s125
    %s142 = sphi 0, %s126
  $region4: #{cnn_gru_forward.8} parent=0 // loop_header_branch
    %12 = sbr.rel (%p10) target = $region8
  $region5: #{cnn_gru_forward.8} parent=0 // loop_body
    %s14 = ssub.s32 %s9, 1
    %s15 = ssub.s32 %s9, 2
    %s25 = sadd.s32 1, %s18
    %p26 = scmp.ge.s32.totalorder %s25, 8
    %s27 = scalar_select %p26, 0, %s25
    %s28 = sadd.s32 1, %s17
    %s29 = scalar_select %p26, %s28, %s17
    %p30 = scmp.ge.s32.totalorder %s29, 1
    %s31 = scalar_select %p30, 0, %s29
    %s32 = sadd.s32 1, %s16
    %s33 = scalar_select %p30, %s32, %s16
    %p34 = scmp.ge.s32.totalorder %s33, 1
    %s35 = scalar_select %p34, 0, %s33
    %s36 = ssub.s32 %s16, %s35
    %s37 = ssub.s32 %s18, %s27
    %s38 = sor.u32 %s36, %s37
    %p39 = scmp.eq.s32.totalorder %s38, 0
    %s41 = sadd.s32 %s40, 1
    %s42 = scalar_select %p39, %s40, %s41
    %p45 = pneg %p39
    %p46 = scmp.eq.s32.totalorder %s9, 7
    %p47 = por %p45, %p46
    %p48 = scmp.ne.s32.totalorder %s40, %s43
    %p49 = scmp.eq.s32.totalorder %s9, 0
    %p50 = por %p48, %p49
    %p51 = scmp.ne.s32.totalorder %s40, %s43
    %p52 = scmp.eq.s32.totalorder %s14, 7
    %p53 = por %p51, %p52
    %p54 = scmp.ne.s32.totalorder %s43, %s44
    %p55 = scmp.eq.s32.totalorder %s14, 0
    %p56 = por %p54, %p55
    %p57 = scmp.ne.s32.totalorder %s43, %s44
    %p58 = scmp.eq.s32.totalorder %s15, 7
    %p59 = por %p57, %p58
    %p61 = scmp.ne.s32.totalorder %s44, %s60
    %p62 = scmp.eq.s32.totalorder %s15, 0
    %p63 = por %p61, %p62
    %s64 = ssub.s32 %s18, %s27
    %s65 = ssub.s32 %s17, %s31
    %s66 = sor.u32 %s64, %s65
    %p67 = scmp.eq.s32.totalorder %s66, 0
    %s69 = sadd.s32 %s68, 1
    %s70 = scalar_select %p67, %s68, %s69
    %p73 = pneg %p67
    %p74 = scmp.eq.s32.totalorder %s9, 7
    %p75 = por %p73, %p74
    %p76 = scmp.ne.s32.totalorder %s68, %s71
    %p77 = scmp.eq.s32.totalorder %s9, 0
    %p78 = por %p76, %p77
    %p79 = scmp.ne.s32.totalorder %s68, %s71
    %p80 = scmp.eq.s32.totalorder %s14, 7
    %p81 = por %p79, %p80
    %p82 = scmp.ne.s32.totalorder %s71, %s72
    %p83 = scmp.eq.s32.totalorder %s14, 0
    %p84 = por %p82, %p83
    %p85 = scmp.ne.s32.totalorder %s71, %s72
    %p86 = scmp.eq.s32.totalorder %s15, 7
    %p87 = por %p85, %p86
    %p89 = scmp.ne.s32.totalorder %s72, %s88
    %p90 = scmp.eq.s32.totalorder %s15, 0
    %p91 = por %p89, %p90
    %s92 = ssub.s32 %s17, %s31
    %p93 = scmp.eq.s32.totalorder %s92, 0
    %s95 = sadd.s32 %s94, 1
    %s96 = scalar_select %p93, %s94, %s95
    %p99 = pneg %p93
    %p100 = scmp.eq.s32.totalorder %s9, 7
    %p101 = por %p99, %p100
    %p102 = scmp.ne.s32.totalorder %s94, %s97
    %p103 = scmp.eq.s32.totalorder %s9, 0
    %p104 = por %p102, %p103
    %p105 = scmp.ne.s32.totalorder %s94, %s97
    %p106 = scmp.eq.s32.totalorder %s14, 7
    %p107 = por %p105, %p106
    %p108 = scmp.ne.s32.totalorder %s97, %s98
    %p109 = scmp.eq.s32.totalorder %s14, 0
    %p110 = por %p108, %p109
    %p111 = scmp.ne.s32.totalorder %s97, %s98
    %p112 = scmp.eq.s32.totalorder %s15, 7
    %p113 = por %p111, %p112
    %p115 = scmp.ne.s32.totalorder %s98, %s114
    %p116 = scmp.eq.s32.totalorder %s15, 0
    %p117 = por %p115, %p116
    %s118 = ssub.s32 %s16, %s35
    %s119 = ssub.s32 %s17, %s31
    %s120 = sor.u32 %s118, %s119
    %p121 = scmp.eq.s32.totalorder %s120, 0
    %s123 = sadd.s32 %s122, 1
    %s124 = scalar_select %p121, %s122, %s123
    %p127 = pneg %p121
    %p128 = scmp.eq.s32.totalorder %s9, 7
    %p129 = por %p127, %p128
    %p130 = scmp.ne.s32.totalorder %s122, %s125
    %p131 = scmp.eq.s32.totalorder %s9, 0
    %p132 = por %p130, %p131
    %p133 = scmp.ne.s32.totalorder %s122, %s125
    %p134 = scmp.eq.s32.totalorder %s14, 7
    %p135 = por %p133, %p134
    %p136 = scmp.ne.s32.totalorder %s125, %s126
    %p137 = scmp.eq.s32.totalorder %s14, 0
    %p138 = por %p136, %p137
    %p139 = scmp.ne.s32.totalorder %s125, %s126
    %p140 = scmp.eq.s32.totalorder %s15, 7
    %p141 = por %p139, %p140
    %p143 = scmp.ne.s32.totalorder %s126, %s142
    %p144 = scmp.eq.s32.totalorder %s15, 0
    %p145 = por %p143, %p144
    %p146 = scmp.le.s32.totalorder 1, %s9
    %p147 = scmp.lt.s32.totalorder %s9, 9
    %p148 = pnand %p146, %p147
    %p149 = pneg %p148
    // Predicated region
    $region9: #{cnn_gru_forward.8} parent=5 // pred_check
      _
    $region10: #{cnn_gru_forward.8} parent=5 // pred_check_branch
      %151 = sbr.rel (%p148) target = $region12
    $region11: #{cnn_gru_forward.8} parent=5 // pred_region
      %s152 = ssub.s32 %s9, 1
      // Predicated region
      $region13: #{cnn_gru_forward.8} parent=11 // pred_check
        %p153 = pneg %p110
      $region14: #{cnn_gru_forward.8} parent=11 // pred_check_branch
        %155 = sbr.rel (%p153) target = $region16
      $region15: #{cnn_gru_forward.8} parent=11 // pred_region
        %p156 = scmp.lt.s32.totalorder %s20, 0
        %s157 = scalar_select %p156, %s20, 0
        %s158 = scalar_lea.vmem %s2, %s157
      $region16: #{cnn_gru_forward.8} parent=11 // pred_fallthru
        _
    $region12: #{cnn_gru_forward.8} parent=5 // pred_fallthru
      _
    %p159 = scmp.lt.s32.totalorder %s9, 8
    // Predicated region
    $region17: #{cnn_gru_forward.8} parent=5 // pred_check
      %p160 = pneg %p159
    $region18: #{cnn_gru_forward.8} parent=5 // pred_check_branch
      %162 = sbr.rel (%p160) target = $region20
    $region19: #{cnn_gru_forward.8} parent=5 // pred_region
      // Predicated region
      $region21: #{cnn_gru_forward.8} parent=19 // pred_check
        %p163 = pneg %p50
      $region22: #{cnn_gru_forward.8} parent=19 // pred_check_branch
        %165 = sbr.rel (%p163) target = $region24
      $region23: #{cnn_gru_forward.8} parent=19 // pred_region
        %s166 = smul.u32 32, %s18
        %p167 = scmp.lt.s32.totalorder %s16, 0
        %s168 = scalar_select %p167, %s16, 0
        %p169 = scmp.lt.s32.totalorder %s166, 255
        %s170 = scalar_select %p169, %s166, 255
        %s171 = smul.addr %s168, 256
        %s172 = sadd.s32 %s170, %s171
        %s173 = smul.addr %s172, 4
        %s174 = scalar_lea.vmem %s0, %s173
        %s175 = smul.u32 32, %s18
      $region24: #{cnn_gru_forward.8} parent=19 // pred_fallthru
        _
      // Predicated region
      $region25: #{cnn_gru_forward.8} parent=19 // pred_check
        %p176 = pneg %p78
      $region26: #{cnn_gru_forward.8} parent=19 // pred_check_branch
        %178 = sbr.rel (%p176) target = $region28
      $region27: #{cnn_gru_forward.8} parent=19 // pred_region
        %s179 = smul.u32 512, %s18
        %p180 = scmp.lt.s32.totalorder %s179, 4095
        %s181 = scalar_select %p180, %s179, 4095
        %p182 = scmp.lt.s32.totalorder %s17, 0
        %s183 = scalar_select %p182, %s17, 0
        %s184 = sadd.s32 %s183, %s181
        %s185 = smul.addr %s184, 4
        %s186 = scalar_lea.vmem %s1, %s185
        %s187 = smul.u32 512, %s18
      $region28: #{cnn_gru_forward.8} parent=19 // pred_fallthru
        _
    $region20: #{cnn_gru_forward.8} parent=5 // pred_fallthru
      _
    %p188 = scmp.le.s32.totalorder 1, %s9
    %p189 = scmp.lt.s32.totalorder %s9, 9
    %p190 = pnand %p188, %p189
    %p191 = pneg %p190
    // Predicated region
    $region29: #{cnn_gru_forward.8} parent=5 // pred_check
      _
    $region30: #{cnn_gru_forward.8} parent=5 // pred_check_branch
      %193 = sbr.rel (%p190) target = $region32
    $region31: #{cnn_gru_forward.8} parent=5 // pred_region
      %s194 = ssub.s32 %s9, 1
      %s195 = smul.u32 32, %s21
      %p196 = scmp.lt.s32.totalorder %s19, 0
      %s197 = scalar_select %p196, %s19, 0
      %p198 = scmp.lt.s32.totalorder %s195, 255
      %s199 = scalar_select %p198, %s195, 255
      %s200 = smul.addr %s197, 256
      %s201 = sadd.s32 %s199, %s200
      %s202 = smul.addr %s201, 4
      %s203 = scalar_lea.vmem %s0, %s202
      %p204 = pneg %p56
      %p205 = pneg %p53
      %s206 = smul.u32 512, %s21
      %p207 = scmp.lt.s32.totalorder %s206, 4095
      %s208 = scalar_select %p207, %s206, 4095
      %p209 = scmp.lt.s32.totalorder %s20, 0
      %s210 = scalar_select %p209, %s20, 0
      %s211 = sadd.s32 %s210, %s208
      %s212 = smul.addr %s211, 4
      %s213 = scalar_lea.vmem %s1, %s212
      %p214 = pneg %p84
      %p215 = pneg %p81
      %p216 = scmp.lt.s32.totalorder %s20, 0
      %s217 = scalar_select %p216, %s20, 0
      %s218 = scalar_lea.vmem %s2, %s217
      %p219 = pneg %p110
      %p220 = pneg %p107
      %p221 = pneg %p138
      %p222 = pneg %p135
      %p223 = scmp.lt.s32.totalorder %s19, 0
      %s224 = scalar_select %p223, %s19, 0
      %p225 = scmp.lt.s32.totalorder %s20, 0
      %s226 = scalar_select %p225, %s20, 0
      %s227 = sadd.s32 %s226, %s224
      %s228 = smul.addr %s227, 4
      %s229 = scalar_lea.vmem %s3, %s228
      %s230 = smul.u32 32, %s21
      %p231 = scmp.lt.s32.totalorder %s19, 0
      %s232 = scalar_select %p231, %s19, 0
      %p233 = scmp.lt.s32.totalorder %s230, 255
      %s234 = scalar_select %p233, %s230, 255
      %s235 = smul.addr %s232, 256
      %s236 = sadd.s32 %s234, %s235
      %s237 = smul.addr %s236, 4
      %s238 = scalar_lea.vmem %s0, %s237
      %s239 = smul.u32 32, %s21
      %s240 = smul.u32 512, %s21
      %p241 = scmp.lt.s32.totalorder %s240, 4095
      %s242 = scalar_select %p241, %s240, 4095
      %p243 = scmp.lt.s32.totalorder %s20, 0
      %s244 = scalar_select %p243, %s20, 0
      %s245 = sadd.s32 %s244, %s242
      %s246 = smul.addr %s245, 4
      %s247 = scalar_lea.vmem %s1, %s246
      %s248 = smul.u32 512, %s21
      %p249 = scmp.lt.s32.totalorder %s20, 0
      %s250 = scalar_select %p249, %s20, 0
      %s251 = scalar_lea.vmem %s2, %s250
      %p252 = scmp.lt.s32.totalorder %s19, 0
      %s253 = scalar_select %p252, %s19, 0
      %p254 = scmp.lt.s32.totalorder %s20, 0
      %s255 = scalar_select %p254, %s20, 0
      %s256 = sadd.s32 %s255, %s253
      %s257 = smul.addr %s256, 4
      %s258 = scalar_lea.vmem %s3, %s257
      %p260 = scmp.eq.s32.totalorder %s21, 0
      // Predicated region
      $region33: #{cnn_gru_forward.8} parent=31 // pred_check
        %p261 = pneg %p260
      $region34: #{cnn_gru_forward.8} parent=31 // pred_check_branch
        %263 = sbr.rel (%p261) target = $region36
      $region35: #{cnn_gru_forward.8} parent=31 // pred_region
        %264 = vst [vmem:[#allocation2] sm:$0xff] 0.0
      $region36: #{cnn_gru_forward.8} parent=31 // pred_fallthru
        _
      %v265 = vld [vmem:[#allocation2] sm:$0xff]
      %v266 = vld [vmem:[%s238] sm:$0xff]
      %v267 = vld [vmem:[%s238 + $0x8] sm:$0xff]
      %v268 = vld [vmem:[%s238 + $0x10] sm:$0xff]
      %v269 = vld [vmem:[%s238 + $0x18] sm:$0xff]
      %v270 = vld [vmem:[%s238 + $0x20] sm:$0xff]
      %v271 = vld [vmem:[%s238 + $0x28] sm:$0xff]
      %v272 = vld [vmem:[%s238 + $0x30] sm:$0xff]
      %v273 = vld [vmem:[%s238 + $0x38] sm:$0xff]
      %v274 = vld [vmem:[%s238 + $0x40] sm:$0xff]
      %v275 = vld [vmem:[%s238 + $0x48] sm:$0xff]
      %v276 = vld [vmem:[%s238 + $0x50] sm:$0xff]
      %v277 = vld [vmem:[%s238 + $0x58] sm:$0xff]
      %v278 = vld [vmem:[%s238 + $0x60] sm:$0xff]
      %v279 = vld [vmem:[%s238 + $0x68] sm:$0xff]
      %v280 = vld [vmem:[%s238 + $0x70] sm:$0xff]
      %v281 = vld [vmem:[%s238 + $0x78] sm:$0xff]
      %v282 = vld [vmem:[%s247] sm:$0xf]
      %v283 = vld [vmem:[%s247 + $0x4] sm:$0xf]
      %v284 = vld [vmem:[%s247 + $0x8] sm:$0xf]
      %v285 = vld [vmem:[%s247 + $0xc] sm:$0xf]
      %v286 = vld [vmem:[%s247 + $0x10] sm:$0xf]
      %v287 = vld [vmem:[%s247 + $0x14] sm:$0xf]
      %v288 = vld [vmem:[%s247 + $0x18] sm:$0xf]
      %v289 = vld [vmem:[%s247 + $0x1c] sm:$0xf]
      %v290 = vld [vmem:[%s247 + $0x20] sm:$0xf]
      %v291 = vld [vmem:[%s247 + $0x24] sm:$0xf]
      %v292 = vld [vmem:[%s247 + $0x28] sm:$0xf]
      %v293 = vld [vmem:[%s247 + $0x2c] sm:$0xf]
      %v294 = vld [vmem:[%s247 + $0x30] sm:$0xf]
      %v295 = vld [vmem:[%s247 + $0x34] sm:$0xf]
      %v296 = vld [vmem:[%s247 + $0x38] sm:$0xf]
      %v297 = vld [vmem:[%s247 + $0x3c] sm:$0xf]
      %v298 = vld [vmem:[%s247 + $0x40] sm:$0xf]
      %v299 = vld [vmem:[%s247 + $0x44] sm:$0xf]
      %v300 = vld [vmem:[%s247 + $0x48] sm:$0xf]
      %v301 = vld [vmem:[%s247 + $0x4c] sm:$0xf]
      %v302 = vld [vmem:[%s247 + $0x50] sm:$0xf]
      %v303 = vld [vmem:[%s247 + $0x54] sm:$0xf]
      %v304 = vld [vmem:[%s247 + $0x58] sm:$0xf]
      %v305 = vld [vmem:[%s247 + $0x5c] sm:$0xf]
      %v306 = vld [vmem:[%s247 + $0x60] sm:$0xf]
      %v307 = vld [vmem:[%s247 + $0x64] sm:$0xf]
      %v308 = vld [vmem:[%s247 + $0x68] sm:$0xf]
      %v309 = vld [vmem:[%s247 + $0x6c] sm:$0xf]
      %v310 = vld [vmem:[%s247 + $0x70] sm:$0xf]
      %v311 = vld [vmem:[%s247 + $0x74] sm:$0xf]
      %v312 = vld [vmem:[%s247 + $0x78] sm:$0xf]
      %v313 = vld [vmem:[%s247 + $0x7c] sm:$0xf]
      %v314 = vld [vmem:[%s247 + $0x80] sm:$0xf]
      %v315 = vld [vmem:[%s247 + $0x84] sm:$0xf]
      %v316 = vld [vmem:[%s247 + $0x88] sm:$0xf]
      %v317 = vld [vmem:[%s247 + $0x8c] sm:$0xf]
      %v318 = vld [vmem:[%s247 + $0x90] sm:$0xf]
      %v319 = vld [vmem:[%s247 + $0x94] sm:$0xf]
      %v320 = vld [vmem:[%s247 + $0x98] sm:$0xf]
      %v321 = vld [vmem:[%s247 + $0x9c] sm:$0xf]
      %v322 = vld [vmem:[%s247 + $0xa0] sm:$0xf]
      %v323 = vld [vmem:[%s247 + $0xa4] sm:$0xf]
      %v324 = vld [vmem:[%s247 + $0xa8] sm:$0xf]
      %v325 = vld [vmem:[%s247 + $0xac] sm:$0xf]
      %v326 = vld [vmem:[%s247 + $0xb0] sm:$0xf]
      %v327 = vld [vmem:[%s247 + $0xb4] sm:$0xf]
      %v328 = vld [vmem:[%s247 + $0xb8] sm:$0xf]
      %v329 = vld [vmem:[%s247 + $0xbc] sm:$0xf]
      %v330 = vld [vmem:[%s247 + $0xc0] sm:$0xf]
      %v331 = vld [vmem:[%s247 + $0xc4] sm:$0xf]
      %v332 = vld [vmem:[%s247 + $0xc8] sm:$0xf]
      %v333 = vld [vmem:[%s247 + $0xcc] sm:$0xf]
      %v334 = vld [vmem:[%s247 + $0xd0] sm:$0xf]
      %v335 = vld [vmem:[%s247 + $0xd4] sm:$0xf]
      %v336 = vld [vmem:[%s247 + $0xd8] sm:$0xf]
      %v337 = vld [vmem:[%s247 + $0xdc] sm:$0xf]
      %v338 = vld [vmem:[%s247 + $0xe0] sm:$0xf]
      %v339 = vld [vmem:[%s247 + $0xe4] sm:$0xf]
      %v340 = vld [vmem:[%s247 + $0xe8] sm:$0xf]
      %v341 = vld [vmem:[%s247 + $0xec] sm:$0xf]
      %v342 = vld [vmem:[%s247 + $0xf0] sm:$0xf]
      %v343 = vld [vmem:[%s247 + $0xf4] sm:$0xf]
      %v344 = vld [vmem:[%s247 + $0xf8] sm:$0xf]
      %v345 = vld [vmem:[%s247 + $0xfc] sm:$0xf]
      %v346 = vld [vmem:[%s247 + $0x100] sm:$0xf]
      %v347 = vld [vmem:[%s247 + $0x104] sm:$0xf]
      %v348 = vld [vmem:[%s247 + $0x108] sm:$0xf]
      %v349 = vld [vmem:[%s247 + $0x10c] sm:$0xf]
      %v350 = vld [vmem:[%s247 + $0x110] sm:$0xf]
      %v351 = vld [vmem:[%s247 + $0x114] sm:$0xf]
      %v352 = vld [vmem:[%s247 + $0x118] sm:$0xf]
      %v353 = vld [vmem:[%s247 + $0x11c] sm:$0xf]
      %v354 = vld [vmem:[%s247 + $0x120] sm:$0xf]
      %v355 = vld [vmem:[%s247 + $0x124] sm:$0xf]
      %v356 = vld [vmem:[%s247 + $0x128] sm:$0xf]
      %v357 = vld [vmem:[%s247 + $0x12c] sm:$0xf]
      %v358 = vld [vmem:[%s247 + $0x130] sm:$0xf]
      %v359 = vld [vmem:[%s247 + $0x134] sm:$0xf]
      %v360 = vld [vmem:[%s247 + $0x138] sm:$0xf]
      %v361 = vld [vmem:[%s247 + $0x13c] sm:$0xf]
      %v362 = vld [vmem:[%s247 + $0x140] sm:$0xf]
      %v363 = vld [vmem:[%s247 + $0x144] sm:$0xf]
      %v364 = vld [vmem:[%s247 + $0x148] sm:$0xf]
      %v365 = vld [vmem:[%s247 + $0x14c] sm:$0xf]
      %v366 = vld [vmem:[%s247 + $0x150] sm:$0xf]
      %v367 = vld [vmem:[%s247 + $0x154] sm:$0xf]
      %v368 = vld [vmem:[%s247 + $0x158] sm:$0xf]
      %v369 = vld [vmem:[%s247 + $0x15c] sm:$0xf]
      %v370 = vld [vmem:[%s247 + $0x160] sm:$0xf]
      %v371 = vld [vmem:[%s247 + $0x164] sm:$0xf]
      %v372 = vld [vmem:[%s247 + $0x168] sm:$0xf]
      %v373 = vld [vmem:[%s247 + $0x16c] sm:$0xf]
      %v374 = vld [vmem:[%s247 + $0x170] sm:$0xf]
      %v375 = vld [vmem:[%s247 + $0x174] sm:$0xf]
      %v376 = vld [vmem:[%s247 + $0x178] sm:$0xf]
      %v377 = vld [vmem:[%s247 + $0x17c] sm:$0xf]
      %v378 = vld [vmem:[%s247 + $0x180] sm:$0xf]
      %v379 = vld [vmem:[%s247 + $0x184] sm:$0xf]
      %v380 = vld [vmem:[%s247 + $0x188] sm:$0xf]
      %v381 = vld [vmem:[%s247 + $0x18c] sm:$0xf]
      %v382 = vld [vmem:[%s247 + $0x190] sm:$0xf]
      %v383 = vld [vmem:[%s247 + $0x194] sm:$0xf]
      %v384 = vld [vmem:[%s247 + $0x198] sm:$0xf]
      %v385 = vld [vmem:[%s247 + $0x19c] sm:$0xf]
      %v386 = vld [vmem:[%s247 + $0x1a0] sm:$0xf]
      %v387 = vld [vmem:[%s247 + $0x1a4] sm:$0xf]
      %v388 = vld [vmem:[%s247 + $0x1a8] sm:$0xf]
      %v389 = vld [vmem:[%s247 + $0x1ac] sm:$0xf]
      %v390 = vld [vmem:[%s247 + $0x1b0] sm:$0xf]
      %v391 = vld [vmem:[%s247 + $0x1b4] sm:$0xf]
      %v392 = vld [vmem:[%s247 + $0x1b8] sm:$0xf]
      %v393 = vld [vmem:[%s247 + $0x1bc] sm:$0xf]
      %v394 = vld [vmem:[%s247 + $0x1c0] sm:$0xf]
      %v395 = vld [vmem:[%s247 + $0x1c4] sm:$0xf]
      %v396 = vld [vmem:[%s247 + $0x1c8] sm:$0xf]
      %v397 = vld [vmem:[%s247 + $0x1cc] sm:$0xf]
      %v398 = vld [vmem:[%s247 + $0x1d0] sm:$0xf]
      %v399 = vld [vmem:[%s247 + $0x1d4] sm:$0xf]
      %v400 = vld [vmem:[%s247 + $0x1d8] sm:$0xf]
      %v401 = vld [vmem:[%s247 + $0x1dc] sm:$0xf]
      %v402 = vld [vmem:[%s247 + $0x1e0] sm:$0xf]
      %v403 = vld [vmem:[%s247 + $0x1e4] sm:$0xf]
      %v404 = vld [vmem:[%s247 + $0x1e8] sm:$0xf]
      %v405 = vld [vmem:[%s247 + $0x1ec] sm:$0xf]
      %v406 = vld [vmem:[%s247 + $0x1f0] sm:$0xf]
      %v407 = vld [vmem:[%s247 + $0x1f4] sm:$0xf]
      %v408 = vld [vmem:[%s247 + $0x1f8] sm:$0xf]
      %v409 = vld [vmem:[%s247 + $0x1fc] sm:$0xf]
      %v410 = vld [vmem:[%s247 + $0x200] sm:$0xf]
      %v411 = vld [vmem:[%s247 + $0x204] sm:$0xf]
      %v412 = vld [vmem:[%s247 + $0x208] sm:$0xf]
      %v413 = vld [vmem:[%s247 + $0x20c] sm:$0xf]
      %v414 = vld [vmem:[%s247 + $0x210] sm:$0xf]
      %v415 = vld [vmem:[%s247 + $0x214] sm:$0xf]
      %v416 = vld [vmem:[%s247 + $0x218] sm:$0xf]
      %v417 = vld [vmem:[%s247 + $0x21c] sm:$0xf]
      %v418 = vld [vmem:[%s247 + $0x220] sm:$0xf]
      %v419 = vld [vmem:[%s247 + $0x224] sm:$0xf]
      %v420 = vld [vmem:[%s247 + $0x228] sm:$0xf]
      %v421 = vld [vmem:[%s247 + $0x22c] sm:$0xf]
      %v422 = vld [vmem:[%s247 + $0x230] sm:$0xf]
      %v423 = vld [vmem:[%s247 + $0x234] sm:$0xf]
      %v424 = vld [vmem:[%s247 + $0x238] sm:$0xf]
      %v425 = vld [vmem:[%s247 + $0x23c] sm:$0xf]
      %v426 = vld [vmem:[%s247 + $0x240] sm:$0xf]
      %v427 = vld [vmem:[%s247 + $0x244] sm:$0xf]
      %v428 = vld [vmem:[%s247 + $0x248] sm:$0xf]
      %v429 = vld [vmem:[%s247 + $0x24c] sm:$0xf]
      %v430 = vld [vmem:[%s247 + $0x250] sm:$0xf]
      %v431 = vld [vmem:[%s247 + $0x254] sm:$0xf]
      %v432 = vld [vmem:[%s247 + $0x258] sm:$0xf]
      %v433 = vld [vmem:[%s247 + $0x25c] sm:$0xf]
      %v434 = vld [vmem:[%s247 + $0x260] sm:$0xf]
      %v435 = vld [vmem:[%s247 + $0x264] sm:$0xf]
      %v436 = vld [vmem:[%s247 + $0x268] sm:$0xf]
      %v437 = vld [vmem:[%s247 + $0x26c] sm:$0xf]
      %v438 = vld [vmem:[%s247 + $0x270] sm:$0xf]
      %v439 = vld [vmem:[%s247 + $0x274] sm:$0xf]
      %v440 = vld [vmem:[%s247 + $0x278] sm:$0xf]
      %v441 = vld [vmem:[%s247 + $0x27c] sm:$0xf]
      %v442 = vld [vmem:[%s247 + $0x280] sm:$0xf]
      %v443 = vld [vmem:[%s247 + $0x284] sm:$0xf]
      %v444 = vld [vmem:[%s247 + $0x288] sm:$0xf]
      %v445 = vld [vmem:[%s247 + $0x28c] sm:$0xf]
      %v446 = vld [vmem:[%s247 + $0x290] sm:$0xf]
      %v447 = vld [vmem:[%s247 + $0x294] sm:$0xf]
      %v448 = vld [vmem:[%s247 + $0x298] sm:$0xf]
      %v449 = vld [vmem:[%s247 + $0x29c] sm:$0xf]
      %v450 = vld [vmem:[%s247 + $0x2a0] sm:$0xf]
      %v451 = vld [vmem:[%s247 + $0x2a4] sm:$0xf]
      %v452 = vld [vmem:[%s247 + $0x2a8] sm:$0xf]
      %v453 = vld [vmem:[%s247 + $0x2ac] sm:$0xf]
      %v454 = vld [vmem:[%s247 + $0x2b0] sm:$0xf]
      %v455 = vld [vmem:[%s247 + $0x2b4] sm:$0xf]
      %v456 = vld [vmem:[%s247 + $0x2b8] sm:$0xf]
      %v457 = vld [vmem:[%s247 + $0x2bc] sm:$0xf]
      %v458 = vld [vmem:[%s247 + $0x2c0] sm:$0xf]
      %v459 = vld [vmem:[%s247 + $0x2c4] sm:$0xf]
      %v460 = vld [vmem:[%s247 + $0x2c8] sm:$0xf]
      %v461 = vld [vmem:[%s247 + $0x2cc] sm:$0xf]
      %v462 = vld [vmem:[%s247 + $0x2d0] sm:$0xf]
      %v463 = vld [vmem:[%s247 + $0x2d4] sm:$0xf]
      %v464 = vld [vmem:[%s247 + $0x2d8] sm:$0xf]
      %v465 = vld [vmem:[%s247 + $0x2dc] sm:$0xf]
      %v466 = vld [vmem:[%s247 + $0x2e0] sm:$0xf]
      %v467 = vld [vmem:[%s247 + $0x2e4] sm:$0xf]
      %v468 = vld [vmem:[%s247 + $0x2e8] sm:$0xf]
      %v469 = vld [vmem:[%s247 + $0x2ec] sm:$0xf]
      %v470 = vld [vmem:[%s247 + $0x2f0] sm:$0xf]
      %v471 = vld [vmem:[%s247 + $0x2f4] sm:$0xf]
      %v472 = vld [vmem:[%s247 + $0x2f8] sm:$0xf]
      %v473 = vld [vmem:[%s247 + $0x2fc] sm:$0xf]
      %v474 = vld [vmem:[%s247 + $0x300] sm:$0xf]
      %v475 = vld [vmem:[%s247 + $0x304] sm:$0xf]
      %v476 = vld [vmem:[%s247 + $0x308] sm:$0xf]
      %v477 = vld [vmem:[%s247 + $0x30c] sm:$0xf]
      %v478 = vld [vmem:[%s247 + $0x310] sm:$0xf]
      %v479 = vld [vmem:[%s247 + $0x314] sm:$0xf]
      %v480 = vld [vmem:[%s247 + $0x318] sm:$0xf]
      %v481 = vld [vmem:[%s247 + $0x31c] sm:$0xf]
      %v482 = vld [vmem:[%s247 + $0x320] sm:$0xf]
      %v483 = vld [vmem:[%s247 + $0x324] sm:$0xf]
      %v484 = vld [vmem:[%s247 + $0x328] sm:$0xf]
      %v485 = vld [vmem:[%s247 + $0x32c] sm:$0xf]
      %v486 = vld [vmem:[%s247 + $0x330] sm:$0xf]
      %v487 = vld [vmem:[%s247 + $0x334] sm:$0xf]
      %v488 = vld [vmem:[%s247 + $0x338] sm:$0xf]
      %v489 = vld [vmem:[%s247 + $0x33c] sm:$0xf]
      %v490 = vld [vmem:[%s247 + $0x340] sm:$0xf]
      %v491 = vld [vmem:[%s247 + $0x344] sm:$0xf]
      %v492 = vld [vmem:[%s247 + $0x348] sm:$0xf]
      %v493 = vld [vmem:[%s247 + $0x34c] sm:$0xf]
      %v494 = vld [vmem:[%s247 + $0x350] sm:$0xf]
      %v495 = vld [vmem:[%s247 + $0x354] sm:$0xf]
      %v496 = vld [vmem:[%s247 + $0x358] sm:$0xf]
      %v497 = vld [vmem:[%s247 + $0x35c] sm:$0xf]
      %v498 = vld [vmem:[%s247 + $0x360] sm:$0xf]
      %v499 = vld [vmem:[%s247 + $0x364] sm:$0xf]
      %v500 = vld [vmem:[%s247 + $0x368] sm:$0xf]
      %v501 = vld [vmem:[%s247 + $0x36c] sm:$0xf]
      %v502 = vld [vmem:[%s247 + $0x370] sm:$0xf]
      %v503 = vld [vmem:[%s247 + $0x374] sm:$0xf]
      %v504 = vld [vmem:[%s247 + $0x378] sm:$0xf]
      %v505 = vld [vmem:[%s247 + $0x37c] sm:$0xf]
      %v506 = vld [vmem:[%s247 + $0x380] sm:$0xf]
      %v507 = vld [vmem:[%s247 + $0x384] sm:$0xf]
      %v508 = vld [vmem:[%s247 + $0x388] sm:$0xf]
      %v509 = vld [vmem:[%s247 + $0x38c] sm:$0xf]
      %v510 = vld [vmem:[%s247 + $0x390] sm:$0xf]
      %v511 = vld [vmem:[%s247 + $0x394] sm:$0xf]
      %v512 = vld [vmem:[%s247 + $0x398] sm:$0xf]
      %v513 = vld [vmem:[%s247 + $0x39c] sm:$0xf]
      %v514 = vld [vmem:[%s247 + $0x3a0] sm:$0xf]
      %v515 = vld [vmem:[%s247 + $0x3a4] sm:$0xf]
      %v516 = vld [vmem:[%s247 + $0x3a8] sm:$0xf]
      %v517 = vld [vmem:[%s247 + $0x3ac] sm:$0xf]
      %v518 = vld [vmem:[%s247 + $0x3b0] sm:$0xf]
      %v519 = vld [vmem:[%s247 + $0x3b4] sm:$0xf]
      %v520 = vld [vmem:[%s247 + $0x3b8] sm:$0xf]
      %v521 = vld [vmem:[%s247 + $0x3bc] sm:$0xf]
      %v522 = vld [vmem:[%s247 + $0x3c0] sm:$0xf]
      %v523 = vld [vmem:[%s247 + $0x3c4] sm:$0xf]
      %v524 = vld [vmem:[%s247 + $0x3c8] sm:$0xf]
      %v525 = vld [vmem:[%s247 + $0x3cc] sm:$0xf]
      %v526 = vld [vmem:[%s247 + $0x3d0] sm:$0xf]
      %v527 = vld [vmem:[%s247 + $0x3d4] sm:$0xf]
      %v528 = vld [vmem:[%s247 + $0x3d8] sm:$0xf]
      %v529 = vld [vmem:[%s247 + $0x3dc] sm:$0xf]
      %v530 = vld [vmem:[%s247 + $0x3e0] sm:$0xf]
      %v531 = vld [vmem:[%s247 + $0x3e4] sm:$0xf]
      %v532 = vld [vmem:[%s247 + $0x3e8] sm:$0xf]
      %v533 = vld [vmem:[%s247 + $0x3ec] sm:$0xf]
      %v534 = vld [vmem:[%s247 + $0x3f0] sm:$0xf]
      %v535 = vld [vmem:[%s247 + $0x3f4] sm:$0xf]
      %v536 = vld [vmem:[%s247 + $0x3f8] sm:$0xf]
      %v537 = vld [vmem:[%s247 + $0x3fc] sm:$0xf]
      %v538 = vld [vmem:[%s247 + $0x400] sm:$0xf]
      %v539 = vld [vmem:[%s247 + $0x404] sm:$0xf]
      %v540 = vld [vmem:[%s247 + $0x408] sm:$0xf]
      %v541 = vld [vmem:[%s247 + $0x40c] sm:$0xf]
      %v542 = vld [vmem:[%s247 + $0x410] sm:$0xf]
      %v543 = vld [vmem:[%s247 + $0x414] sm:$0xf]
      %v544 = vld [vmem:[%s247 + $0x418] sm:$0xf]
      %v545 = vld [vmem:[%s247 + $0x41c] sm:$0xf]
      %v546 = vld [vmem:[%s247 + $0x420] sm:$0xf]
      %v547 = vld [vmem:[%s247 + $0x424] sm:$0xf]
      %v548 = vld [vmem:[%s247 + $0x428] sm:$0xf]
      %v549 = vld [vmem:[%s247 + $0x42c] sm:$0xf]
      %v550 = vld [vmem:[%s247 + $0x430] sm:$0xf]
      %v551 = vld [vmem:[%s247 + $0x434] sm:$0xf]
      %v552 = vld [vmem:[%s247 + $0x438] sm:$0xf]
      %v553 = vld [vmem:[%s247 + $0x43c] sm:$0xf]
      %v554 = vld [vmem:[%s247 + $0x440] sm:$0xf]
      %v555 = vld [vmem:[%s247 + $0x444] sm:$0xf]
      %v556 = vld [vmem:[%s247 + $0x448] sm:$0xf]
      %v557 = vld [vmem:[%s247 + $0x44c] sm:$0xf]
      %v558 = vld [vmem:[%s247 + $0x450] sm:$0xf]
      %v559 = vld [vmem:[%s247 + $0x454] sm:$0xf]
      %v560 = vld [vmem:[%s247 + $0x458] sm:$0xf]
      %v561 = vld [vmem:[%s247 + $0x45c] sm:$0xf]
      %v562 = vld [vmem:[%s247 + $0x460] sm:$0xf]
      %v563 = vld [vmem:[%s247 + $0x464] sm:$0xf]
      %v564 = vld [vmem:[%s247 + $0x468] sm:$0xf]
      %v565 = vld [vmem:[%s247 + $0x46c] sm:$0xf]
      %v566 = vld [vmem:[%s247 + $0x470] sm:$0xf]
      %v567 = vld [vmem:[%s247 + $0x474] sm:$0xf]
      %v568 = vld [vmem:[%s247 + $0x478] sm:$0xf]
      %v569 = vld [vmem:[%s247 + $0x47c] sm:$0xf]
      %v570 = vld [vmem:[%s247 + $0x480] sm:$0xf]
      %v571 = vld [vmem:[%s247 + $0x484] sm:$0xf]
      %v572 = vld [vmem:[%s247 + $0x488] sm:$0xf]
      %v573 = vld [vmem:[%s247 + $0x48c] sm:$0xf]
      %v574 = vld [vmem:[%s247 + $0x490] sm:$0xf]
      %v575 = vld [vmem:[%s247 + $0x494] sm:$0xf]
      %v576 = vld [vmem:[%s247 + $0x498] sm:$0xf]
      %v577 = vld [vmem:[%s247 + $0x49c] sm:$0xf]
      %v578 = vld [vmem:[%s247 + $0x4a0] sm:$0xf]
      %v579 = vld [vmem:[%s247 + $0x4a4] sm:$0xf]
      %v580 = vld [vmem:[%s247 + $0x4a8] sm:$0xf]
      %v581 = vld [vmem:[%s247 + $0x4ac] sm:$0xf]
      %v582 = vld [vmem:[%s247 + $0x4b0] sm:$0xf]
      %v583 = vld [vmem:[%s247 + $0x4b4] sm:$0xf]
      %v584 = vld [vmem:[%s247 + $0x4b8] sm:$0xf]
      %v585 = vld [vmem:[%s247 + $0x4bc] sm:$0xf]
      %v586 = vld [vmem:[%s247 + $0x4c0] sm:$0xf]
      %v587 = vld [vmem:[%s247 + $0x4c4] sm:$0xf]
      %v588 = vld [vmem:[%s247 + $0x4c8] sm:$0xf]
      %v589 = vld [vmem:[%s247 + $0x4cc] sm:$0xf]
      %v590 = vld [vmem:[%s247 + $0x4d0] sm:$0xf]
      %v591 = vld [vmem:[%s247 + $0x4d4] sm:$0xf]
      %v592 = vld [vmem:[%s247 + $0x4d8] sm:$0xf]
      %v593 = vld [vmem:[%s247 + $0x4dc] sm:$0xf]
      %v594 = vld [vmem:[%s247 + $0x4e0] sm:$0xf]
      %v595 = vld [vmem:[%s247 + $0x4e4] sm:$0xf]
      %v596 = vld [vmem:[%s247 + $0x4e8] sm:$0xf]
      %v597 = vld [vmem:[%s247 + $0x4ec] sm:$0xf]
      %v598 = vld [vmem:[%s247 + $0x4f0] sm:$0xf]
      %v599 = vld [vmem:[%s247 + $0x4f4] sm:$0xf]
      %v600 = vld [vmem:[%s247 + $0x4f8] sm:$0xf]
      %v601 = vld [vmem:[%s247 + $0x4fc] sm:$0xf]
      %v602 = vld [vmem:[%s247 + $0x500] sm:$0xf]
      %v603 = vld [vmem:[%s247 + $0x504] sm:$0xf]
      %v604 = vld [vmem:[%s247 + $0x508] sm:$0xf]
      %v605 = vld [vmem:[%s247 + $0x50c] sm:$0xf]
      %v606 = vld [vmem:[%s247 + $0x510] sm:$0xf]
      %v607 = vld [vmem:[%s247 + $0x514] sm:$0xf]
      %v608 = vld [vmem:[%s247 + $0x518] sm:$0xf]
      %v609 = vld [vmem:[%s247 + $0x51c] sm:$0xf]
      %v610 = vld [vmem:[%s247 + $0x520] sm:$0xf]
      %v611 = vld [vmem:[%s247 + $0x524] sm:$0xf]
      %v612 = vld [vmem:[%s247 + $0x528] sm:$0xf]
      %v613 = vld [vmem:[%s247 + $0x52c] sm:$0xf]
      %v614 = vld [vmem:[%s247 + $0x530] sm:$0xf]
      %v615 = vld [vmem:[%s247 + $0x534] sm:$0xf]
      %v616 = vld [vmem:[%s247 + $0x538] sm:$0xf]
      %v617 = vld [vmem:[%s247 + $0x53c] sm:$0xf]
      %v618 = vld [vmem:[%s247 + $0x540] sm:$0xf]
      %v619 = vld [vmem:[%s247 + $0x544] sm:$0xf]
      %v620 = vld [vmem:[%s247 + $0x548] sm:$0xf]
      %v621 = vld [vmem:[%s247 + $0x54c] sm:$0xf]
      %v622 = vld [vmem:[%s247 + $0x550] sm:$0xf]
      %v623 = vld [vmem:[%s247 + $0x554] sm:$0xf]
      %v624 = vld [vmem:[%s247 + $0x558] sm:$0xf]
      %v625 = vld [vmem:[%s247 + $0x55c] sm:$0xf]
      %v626 = vld [vmem:[%s247 + $0x560] sm:$0xf]
      %v627 = vld [vmem:[%s247 + $0x564] sm:$0xf]
      %v628 = vld [vmem:[%s247 + $0x568] sm:$0xf]
      %v629 = vld [vmem:[%s247 + $0x56c] sm:$0xf]
      %v630 = vld [vmem:[%s247 + $0x570] sm:$0xf]
      %v631 = vld [vmem:[%s247 + $0x574] sm:$0xf]
      %v632 = vld [vmem:[%s247 + $0x578] sm:$0xf]
      %v633 = vld [vmem:[%s247 + $0x57c] sm:$0xf]
      %v634 = vld [vmem:[%s247 + $0x580] sm:$0xf]
      %v635 = vld [vmem:[%s247 + $0x584] sm:$0xf]
      %v636 = vld [vmem:[%s247 + $0x588] sm:$0xf]
      %v637 = vld [vmem:[%s247 + $0x58c] sm:$0xf]
      %v638 = vld [vmem:[%s247 + $0x590] sm:$0xf]
      %v639 = vld [vmem:[%s247 + $0x594] sm:$0xf]
      %v640 = vld [vmem:[%s247 + $0x598] sm:$0xf]
      %v641 = vld [vmem:[%s247 + $0x59c] sm:$0xf]
      %v642 = vld [vmem:[%s247 + $0x5a0] sm:$0xf]
      %v643 = vld [vmem:[%s247 + $0x5a4] sm:$0xf]
      %v644 = vld [vmem:[%s247 + $0x5a8] sm:$0xf]
      %v645 = vld [vmem:[%s247 + $0x5ac] sm:$0xf]
      %v646 = vld [vmem:[%s247 + $0x5b0] sm:$0xf]
      %v647 = vld [vmem:[%s247 + $0x5b4] sm:$0xf]
      %v648 = vld [vmem:[%s247 + $0x5b8] sm:$0xf]
      %v649 = vld [vmem:[%s247 + $0x5bc] sm:$0xf]
      %v650 = vld [vmem:[%s247 + $0x5c0] sm:$0xf]
      %v651 = vld [vmem:[%s247 + $0x5c4] sm:$0xf]
      %v652 = vld [vmem:[%s247 + $0x5c8] sm:$0xf]
      %v653 = vld [vmem:[%s247 + $0x5cc] sm:$0xf]
      %v654 = vld [vmem:[%s247 + $0x5d0] sm:$0xf]
      %v655 = vld [vmem:[%s247 + $0x5d4] sm:$0xf]
      %v656 = vld [vmem:[%s247 + $0x5d8] sm:$0xf]
      %v657 = vld [vmem:[%s247 + $0x5dc] sm:$0xf]
      %v658 = vld [vmem:[%s247 + $0x5e0] sm:$0xf]
      %v659 = vld [vmem:[%s247 + $0x5e4] sm:$0xf]
      %v660 = vld [vmem:[%s247 + $0x5e8] sm:$0xf]
      %v661 = vld [vmem:[%s247 + $0x5ec] sm:$0xf]
      %v662 = vld [vmem:[%s247 + $0x5f0] sm:$0xf]
      %v663 = vld [vmem:[%s247 + $0x5f4] sm:$0xf]
      %v664 = vld [vmem:[%s247 + $0x5f8] sm:$0xf]
      %v665 = vld [vmem:[%s247 + $0x5fc] sm:$0xf]
      %v666 = vld [vmem:[%s247 + $0x600] sm:$0xf]
      %v667 = vld [vmem:[%s247 + $0x604] sm:$0xf]
      %v668 = vld [vmem:[%s247 + $0x608] sm:$0xf]
      %v669 = vld [vmem:[%s247 + $0x60c] sm:$0xf]
      %v670 = vld [vmem:[%s247 + $0x610] sm:$0xf]
      %v671 = vld [vmem:[%s247 + $0x614] sm:$0xf]
      %v672 = vld [vmem:[%s247 + $0x618] sm:$0xf]
      %v673 = vld [vmem:[%s247 + $0x61c] sm:$0xf]
      %v674 = vld [vmem:[%s247 + $0x620] sm:$0xf]
      %v675 = vld [vmem:[%s247 + $0x624] sm:$0xf]
      %v676 = vld [vmem:[%s247 + $0x628] sm:$0xf]
      %v677 = vld [vmem:[%s247 + $0x62c] sm:$0xf]
      %v678 = vld [vmem:[%s247 + $0x630] sm:$0xf]
      %v679 = vld [vmem:[%s247 + $0x634] sm:$0xf]
      %v680 = vld [vmem:[%s247 + $0x638] sm:$0xf]
      %v681 = vld [vmem:[%s247 + $0x63c] sm:$0xf]
      %v682 = vld [vmem:[%s247 + $0x640] sm:$0xf]
      %v683 = vld [vmem:[%s247 + $0x644] sm:$0xf]
      %v684 = vld [vmem:[%s247 + $0x648] sm:$0xf]
      %v685 = vld [vmem:[%s247 + $0x64c] sm:$0xf]
      %v686 = vld [vmem:[%s247 + $0x650] sm:$0xf]
      %v687 = vld [vmem:[%s247 + $0x654] sm:$0xf]
      %v688 = vld [vmem:[%s247 + $0x658] sm:$0xf]
      %v689 = vld [vmem:[%s247 + $0x65c] sm:$0xf]
      %v690 = vld [vmem:[%s247 + $0x660] sm:$0xf]
      %v691 = vld [vmem:[%s247 + $0x664] sm:$0xf]
      %v692 = vld [vmem:[%s247 + $0x668] sm:$0xf]
      %v693 = vld [vmem:[%s247 + $0x66c] sm:$0xf]
      %v694 = vld [vmem:[%s247 + $0x670] sm:$0xf]
      %v695 = vld [vmem:[%s247 + $0x674] sm:$0xf]
      %v696 = vld [vmem:[%s247 + $0x678] sm:$0xf]
      %v697 = vld [vmem:[%s247 + $0x67c] sm:$0xf]
      %v698 = vld [vmem:[%s247 + $0x680] sm:$0xf]
      %v699 = vld [vmem:[%s247 + $0x684] sm:$0xf]
      %v700 = vld [vmem:[%s247 + $0x688] sm:$0xf]
      %v701 = vld [vmem:[%s247 + $0x68c] sm:$0xf]
      %v702 = vld [vmem:[%s247 + $0x690] sm:$0xf]
      %v703 = vld [vmem:[%s247 + $0x694] sm:$0xf]
      %v704 = vld [vmem:[%s247 + $0x698] sm:$0xf]
      %v705 = vld [vmem:[%s247 + $0x69c] sm:$0xf]
      %v706 = vld [vmem:[%s247 + $0x6a0] sm:$0xf]
      %v707 = vld [vmem:[%s247 + $0x6a4] sm:$0xf]
      %v708 = vld [vmem:[%s247 + $0x6a8] sm:$0xf]
      %v709 = vld [vmem:[%s247 + $0x6ac] sm:$0xf]
      %v710 = vld [vmem:[%s247 + $0x6b0] sm:$0xf]
      %v711 = vld [vmem:[%s247 + $0x6b4] sm:$0xf]
      %v712 = vld [vmem:[%s247 + $0x6b8] sm:$0xf]
      %v713 = vld [vmem:[%s247 + $0x6bc] sm:$0xf]
      %v714 = vld [vmem:[%s247 + $0x6c0] sm:$0xf]
      %v715 = vld [vmem:[%s247 + $0x6c4] sm:$0xf]
      %v716 = vld [vmem:[%s247 + $0x6c8] sm:$0xf]
      %v717 = vld [vmem:[%s247 + $0x6cc] sm:$0xf]
      %v718 = vld [vmem:[%s247 + $0x6d0] sm:$0xf]
      %v719 = vld [vmem:[%s247 + $0x6d4] sm:$0xf]
      %v720 = vld [vmem:[%s247 + $0x6d8] sm:$0xf]
      %v721 = vld [vmem:[%s247 + $0x6dc] sm:$0xf]
      %v722 = vld [vmem:[%s247 + $0x6e0] sm:$0xf]
      %v723 = vld [vmem:[%s247 + $0x6e4] sm:$0xf]
      %v724 = vld [vmem:[%s247 + $0x6e8] sm:$0xf]
      %v725 = vld [vmem:[%s247 + $0x6ec] sm:$0xf]
      %v726 = vld [vmem:[%s247 + $0x6f0] sm:$0xf]
      %v727 = vld [vmem:[%s247 + $0x6f4] sm:$0xf]
      %v728 = vld [vmem:[%s247 + $0x6f8] sm:$0xf]
      %v729 = vld [vmem:[%s247 + $0x6fc] sm:$0xf]
      %v730 = vld [vmem:[%s247 + $0x700] sm:$0xf]
      %v731 = vld [vmem:[%s247 + $0x704] sm:$0xf]
      %v732 = vld [vmem:[%s247 + $0x708] sm:$0xf]
      %v733 = vld [vmem:[%s247 + $0x70c] sm:$0xf]
      %v734 = vld [vmem:[%s247 + $0x710] sm:$0xf]
      %v735 = vld [vmem:[%s247 + $0x714] sm:$0xf]
      %v736 = vld [vmem:[%s247 + $0x718] sm:$0xf]
      %v737 = vld [vmem:[%s247 + $0x71c] sm:$0xf]
      %v738 = vld [vmem:[%s247 + $0x720] sm:$0xf]
      %v739 = vld [vmem:[%s247 + $0x724] sm:$0xf]
      %v740 = vld [vmem:[%s247 + $0x728] sm:$0xf]
      %v741 = vld [vmem:[%s247 + $0x72c] sm:$0xf]
      %v742 = vld [vmem:[%s247 + $0x730] sm:$0xf]
      %v743 = vld [vmem:[%s247 + $0x734] sm:$0xf]
      %v744 = vld [vmem:[%s247 + $0x738] sm:$0xf]
      %v745 = vld [vmem:[%s247 + $0x73c] sm:$0xf]
      %v746 = vld [vmem:[%s247 + $0x740] sm:$0xf]
      %v747 = vld [vmem:[%s247 + $0x744] sm:$0xf]
      %v748 = vld [vmem:[%s247 + $0x748] sm:$0xf]
      %v749 = vld [vmem:[%s247 + $0x74c] sm:$0xf]
      %v750 = vld [vmem:[%s247 + $0x750] sm:$0xf]
      %v751 = vld [vmem:[%s247 + $0x754] sm:$0xf]
      %v752 = vld [vmem:[%s247 + $0x758] sm:$0xf]
      %v753 = vld [vmem:[%s247 + $0x75c] sm:$0xf]
      %v754 = vld [vmem:[%s247 + $0x760] sm:$0xf]
      %v755 = vld [vmem:[%s247 + $0x764] sm:$0xf]
      %v756 = vld [vmem:[%s247 + $0x768] sm:$0xf]
      %v757 = vld [vmem:[%s247 + $0x76c] sm:$0xf]
      %v758 = vld [vmem:[%s247 + $0x770] sm:$0xf]
      %v759 = vld [vmem:[%s247 + $0x774] sm:$0xf]
      %v760 = vld [vmem:[%s247 + $0x778] sm:$0xf]
      %v761 = vld [vmem:[%s247 + $0x77c] sm:$0xf]
      %v762 = vld [vmem:[%s247 + $0x780] sm:$0xf]
      %v763 = vld [vmem:[%s247 + $0x784] sm:$0xf]
      %v764 = vld [vmem:[%s247 + $0x788] sm:$0xf]
      %v765 = vld [vmem:[%s247 + $0x78c] sm:$0xf]
      %v766 = vld [vmem:[%s247 + $0x790] sm:$0xf]
      %v767 = vld [vmem:[%s247 + $0x794] sm:$0xf]
      %v768 = vld [vmem:[%s247 + $0x798] sm:$0xf]
      %v769 = vld [vmem:[%s247 + $0x79c] sm:$0xf]
      %v770 = vld [vmem:[%s247 + $0x7a0] sm:$0xf]
      %v771 = vld [vmem:[%s247 + $0x7a4] sm:$0xf]
      %v772 = vld [vmem:[%s247 + $0x7a8] sm:$0xf]
      %v773 = vld [vmem:[%s247 + $0x7ac] sm:$0xf]
      %v774 = vld [vmem:[%s247 + $0x7b0] sm:$0xf]
      %v775 = vld [vmem:[%s247 + $0x7b4] sm:$0xf]
      %v776 = vld [vmem:[%s247 + $0x7b8] sm:$0xf]
      %v777 = vld [vmem:[%s247 + $0x7bc] sm:$0xf]
      %v778 = vld [vmem:[%s247 + $0x7c0] sm:$0xf]
      %v779 = vld [vmem:[%s247 + $0x7c4] sm:$0xf]
      %v780 = vld [vmem:[%s247 + $0x7c8] sm:$0xf]
      %v781 = vld [vmem:[%s247 + $0x7cc] sm:$0xf]
      %v782 = vld [vmem:[%s247 + $0x7d0] sm:$0xf]
      %v783 = vld [vmem:[%s247 + $0x7d4] sm:$0xf]
      %v784 = vld [vmem:[%s247 + $0x7d8] sm:$0xf]
      %v785 = vld [vmem:[%s247 + $0x7dc] sm:$0xf]
      %v786 = vld [vmem:[%s247 + $0x7e0] sm:$0xf]
      %v787 = vld [vmem:[%s247 + $0x7e4] sm:$0xf]
      %v788 = vld [vmem:[%s247 + $0x7e8] sm:$0xf]
      %v789 = vld [vmem:[%s247 + $0x7ec] sm:$0xf]
      %v790 = vld [vmem:[%s247 + $0x7f0] sm:$0xf]
      %v791 = vld [vmem:[%s247 + $0x7f4] sm:$0xf]
      %v792 = vld [vmem:[%s247 + $0x7f8] sm:$0xf]
      %v793 = vld [vmem:[%s247 + $0x7fc] sm:$0xf]
      %v810 = vunpack.c.l.b16 %v266
      %v811 = vunpack.c.h.b16 %v266
      %v812 = vunpack.c.l.b16 %v267
      %v813 = vunpack.c.h.b16 %v267
      %v814 = vunpack.c.l.b16 %v268
      %v815 = vunpack.c.h.b16 %v268
      %v816 = vunpack.c.l.b16 %v269
      %v817 = vunpack.c.h.b16 %v269
      %v818 = vunpack.c.l.b16 %v270
      %v819 = vunpack.c.h.b16 %v270
      %v820 = vunpack.c.l.b16 %v271
      %v821 = vunpack.c.h.b16 %v271
      %v822 = vunpack.c.l.b16 %v272
      %v823 = vunpack.c.h.b16 %v272
      %v824 = vunpack.c.l.b16 %v273
      %v825 = vunpack.c.h.b16 %v273
      %v826 = vunpack.c.l.b16 %v274
      %v827 = vunpack.c.h.b16 %v274
      %v828 = vunpack.c.l.b16 %v275
      %v829 = vunpack.c.h.b16 %v275
      %v830 = vunpack.c.l.b16 %v276
      %v831 = vunpack.c.h.b16 %v276
      %v832 = vunpack.c.l.b16 %v277
      %v833 = vunpack.c.h.b16 %v277
      %v834 = vunpack.c.l.b16 %v278
      %v835 = vunpack.c.h.b16 %v278
      %v836 = vunpack.c.l.b16 %v279
      %v837 = vunpack.c.h.b16 %v279
      %v838 = vunpack.c.l.b16 %v280
      %v839 = vunpack.c.h.b16 %v280
      %v840 = vunpack.c.l.b16 %v281
      %v841 = vunpack.c.h.b16 %v281
      %v842 = vpack.c.b16 %v810, %v810
      %v843 = vpack.c.b16 %v811, %v811
      %v844 = vpack.c.b16 %v812, %v812
      %v845 = vpack.c.b16 %v813, %v813
      %v846 = vpack.c.b16 %v814, %v814
      %v847 = vpack.c.b16 %v815, %v815
      %v848 = vpack.c.b16 %v816, %v816
      %v849 = vpack.c.b16 %v817, %v817
      %v850 = vpack.c.b16 %v818, %v818
      %v851 = vpack.c.b16 %v819, %v819
      %v852 = vpack.c.b16 %v820, %v820
      %v853 = vpack.c.b16 %v821, %v821
      %v854 = vpack.c.b16 %v822, %v822
      %v855 = vpack.c.b16 %v823, %v823
      %v856 = vpack.c.b16 %v824, %v824
      %v857 = vpack.c.b16 %v825, %v825
      %v858 = vpack.c.b16 %v826, %v826
      %v859 = vpack.c.b16 %v827, %v827
      %v860 = vpack.c.b16 %v828, %v828
      %v861 = vpack.c.b16 %v829, %v829
      %v862 = vpack.c.b16 %v830, %v830
      %v863 = vpack.c.b16 %v831, %v831
      %v864 = vpack.c.b16 %v832, %v832
      %v865 = vpack.c.b16 %v833, %v833
      %v866 = vpack.c.b16 %v834, %v834
      %v867 = vpack.c.b16 %v835, %v835
      %v868 = vpack.c.b16 %v836, %v836
      %v869 = vpack.c.b16 %v837, %v837
      %v870 = vpack.c.b16 %v838, %v838
      %v871 = vpack.c.b16 %v839, %v839
      %v872 = vpack.c.b16 %v840, %v840
      %v873 = vpack.c.b16 %v841, %v841
      %v1418 = vunpack.c.l.b16 %v282
      %v1419 = vunpack.c.l.b16 %v283
      %v1420 = vunpack.c.l.b16 %v284
      %v1421 = vunpack.c.l.b16 %v285
      %v1422 = vunpack.c.l.b16 %v286
      %v1423 = vunpack.c.l.b16 %v287
      %v1424 = vunpack.c.l.b16 %v288
      %v1425 = vunpack.c.l.b16 %v289
      %v1426 = vunpack.c.l.b16 %v290
      %v1427 = vunpack.c.l.b16 %v291
      %v1428 = vunpack.c.l.b16 %v292
      %v1429 = vunpack.c.l.b16 %v293
      %v1430 = vunpack.c.l.b16 %v294
      %v1431 = vunpack.c.l.b16 %v295
      %v1432 = vunpack.c.l.b16 %v296
      %v1433 = vunpack.c.l.b16 %v297
      %v1434 = vunpack.c.l.b16 %v298
      %v1435 = vunpack.c.l.b16 %v299
      %v1436 = vunpack.c.l.b16 %v300
      %v1437 = vunpack.c.l.b16 %v301
      %v1438 = vunpack.c.l.b16 %v302
      %v1439 = vunpack.c.l.b16 %v303
      %v1440 = vunpack.c.l.b16 %v304
      %v1441 = vunpack.c.l.b16 %v305
      %v1442 = vunpack.c.l.b16 %v306
      %v1443 = vunpack.c.l.b16 %v307
      %v1444 = vunpack.c.l.b16 %v308
      %v1445 = vunpack.c.l.b16 %v309
      %v1446 = vunpack.c.l.b16 %v310
      %v1447 = vunpack.c.l.b16 %v311
      %v1448 = vunpack.c.l.b16 %v312
      %v1449 = vunpack.c.l.b16 %v313
      %v1450 = vunpack.c.l.b16 %v314
      %v1451 = vunpack.c.l.b16 %v315
      %v1452 = vunpack.c.l.b16 %v316
      %v1453 = vunpack.c.l.b16 %v317
      %v1454 = vunpack.c.l.b16 %v318
      %v1455 = vunpack.c.l.b16 %v319
      %v1456 = vunpack.c.l.b16 %v320
      %v1457 = vunpack.c.l.b16 %v321
      %v1458 = vunpack.c.l.b16 %v322
      %v1459 = vunpack.c.l.b16 %v323
      %v1460 = vunpack.c.l.b16 %v324
      %v1461 = vunpack.c.l.b16 %v325
      %v1462 = vunpack.c.l.b16 %v326
      %v1463 = vunpack.c.l.b16 %v327
      %v1464 = vunpack.c.l.b16 %v328
      %v1465 = vunpack.c.l.b16 %v329
      %v1466 = vunpack.c.l.b16 %v330
      %v1467 = vunpack.c.l.b16 %v331
      %v1468 = vunpack.c.l.b16 %v332
      %v1469 = vunpack.c.l.b16 %v333
      %v1470 = vunpack.c.l.b16 %v334
      %v1471 = vunpack.c.l.b16 %v335
      %v1472 = vunpack.c.l.b16 %v336
      %v1473 = vunpack.c.l.b16 %v337
      %v1474 = vunpack.c.l.b16 %v338
      %v1475 = vunpack.c.l.b16 %v339
      %v1476 = vunpack.c.l.b16 %v340
      %v1477 = vunpack.c.l.b16 %v341
      %v1478 = vunpack.c.l.b16 %v342
      %v1479 = vunpack.c.l.b16 %v343
      %v1480 = vunpack.c.l.b16 %v344
      %v1481 = vunpack.c.l.b16 %v345
      %v1482 = vunpack.c.l.b16 %v346
      %v1483 = vunpack.c.l.b16 %v347
      %v1484 = vunpack.c.l.b16 %v348
      %v1485 = vunpack.c.l.b16 %v349
      %v1486 = vunpack.c.l.b16 %v350
      %v1487 = vunpack.c.l.b16 %v351
      %v1488 = vunpack.c.l.b16 %v352
      %v1489 = vunpack.c.l.b16 %v353
      %v1490 = vunpack.c.l.b16 %v354
      %v1491 = vunpack.c.l.b16 %v355
      %v1492 = vunpack.c.l.b16 %v356
      %v1493 = vunpack.c.l.b16 %v357
      %v1494 = vunpack.c.l.b16 %v358
      %v1495 = vunpack.c.l.b16 %v359
      %v1496 = vunpack.c.l.b16 %v360
      %v1497 = vunpack.c.l.b16 %v361
      %v1498 = vunpack.c.l.b16 %v362
      %v1499 = vunpack.c.l.b16 %v363
      %v1500 = vunpack.c.l.b16 %v364
      %v1501 = vunpack.c.l.b16 %v365
      %v1502 = vunpack.c.l.b16 %v366
      %v1503 = vunpack.c.l.b16 %v367
      %v1504 = vunpack.c.l.b16 %v368
      %v1505 = vunpack.c.l.b16 %v369
      %v1506 = vunpack.c.l.b16 %v370
      %v1507 = vunpack.c.l.b16 %v371
      %v1508 = vunpack.c.l.b16 %v372
      %v1509 = vunpack.c.l.b16 %v373
      %v1510 = vunpack.c.l.b16 %v374
      %v1511 = vunpack.c.l.b16 %v375
      %v1512 = vunpack.c.l.b16 %v376
      %v1513 = vunpack.c.l.b16 %v377
      %v1514 = vunpack.c.l.b16 %v378
      %v1515 = vunpack.c.l.b16 %v379
      %v1516 = vunpack.c.l.b16 %v380
      %v1517 = vunpack.c.l.b16 %v381
      %v1518 = vunpack.c.l.b16 %v382
      %v1519 = vunpack.c.l.b16 %v383
      %v1520 = vunpack.c.l.b16 %v384
      %v1521 = vunpack.c.l.b16 %v385
      %v1522 = vunpack.c.l.b16 %v386
      %v1523 = vunpack.c.l.b16 %v387
      %v1524 = vunpack.c.l.b16 %v388
      %v1525 = vunpack.c.l.b16 %v389
      %v1526 = vunpack.c.l.b16 %v390
      %v1527 = vunpack.c.l.b16 %v391
      %v1528 = vunpack.c.l.b16 %v392
      %v1529 = vunpack.c.l.b16 %v393
      %v1530 = vunpack.c.l.b16 %v394
      %v1531 = vunpack.c.l.b16 %v395
      %v1532 = vunpack.c.l.b16 %v396
      %v1533 = vunpack.c.l.b16 %v397
      %v1534 = vunpack.c.l.b16 %v398
      %v1535 = vunpack.c.l.b16 %v399
      %v1536 = vunpack.c.l.b16 %v400
      %v1537 = vunpack.c.l.b16 %v401
      %v1538 = vunpack.c.l.b16 %v402
      %v1539 = vunpack.c.l.b16 %v403
      %v1540 = vunpack.c.l.b16 %v404
      %v1541 = vunpack.c.l.b16 %v405
      %v1542 = vunpack.c.l.b16 %v406
      %v1543 = vunpack.c.l.b16 %v407
      %v1544 = vunpack.c.l.b16 %v408
      %v1545 = vunpack.c.l.b16 %v409
      %v1546 = vunpack.c.l.b16 %v410
      %v1547 = vunpack.c.l.b16 %v411
      %v1548 = vunpack.c.l.b16 %v412
      %v1549 = vunpack.c.l.b16 %v413
      %v1550 = vunpack.c.l.b16 %v414
      %v1551 = vunpack.c.l.b16 %v415
      %v1552 = vunpack.c.l.b16 %v416
      %v1553 = vunpack.c.l.b16 %v417
      %v1554 = vunpack.c.l.b16 %v418
      %v1555 = vunpack.c.l.b16 %v419
      %v1556 = vunpack.c.l.b16 %v420
      %v1557 = vunpack.c.l.b16 %v421
      %v1558 = vunpack.c.l.b16 %v422
      %v1559 = vunpack.c.l.b16 %v423
      %v1560 = vunpack.c.l.b16 %v424
      %v1561 = vunpack.c.l.b16 %v425
      %v1562 = vunpack.c.l.b16 %v426
      %v1563 = vunpack.c.l.b16 %v427
      %v1564 = vunpack.c.l.b16 %v428
      %v1565 = vunpack.c.l.b16 %v429
      %v1566 = vunpack.c.l.b16 %v430
      %v1567 = vunpack.c.l.b16 %v431
      %v1568 = vunpack.c.l.b16 %v432
      %v1569 = vunpack.c.l.b16 %v433
      %v1570 = vunpack.c.l.b16 %v434
      %v1571 = vunpack.c.l.b16 %v435
      %v1572 = vunpack.c.l.b16 %v436
      %v1573 = vunpack.c.l.b16 %v437
      %v1574 = vunpack.c.l.b16 %v438
      %v1575 = vunpack.c.l.b16 %v439
      %v1576 = vunpack.c.l.b16 %v440
      %v1577 = vunpack.c.l.b16 %v441
      %v1578 = vunpack.c.l.b16 %v442
      %v1579 = vunpack.c.l.b16 %v443
      %v1580 = vunpack.c.l.b16 %v444
      %v1581 = vunpack.c.l.b16 %v445
      %v1582 = vunpack.c.l.b16 %v446
      %v1583 = vunpack.c.l.b16 %v447
      %v1584 = vunpack.c.l.b16 %v448
      %v1585 = vunpack.c.l.b16 %v449
      %v1586 = vunpack.c.l.b16 %v450
      %v1587 = vunpack.c.l.b16 %v451
      %v1588 = vunpack.c.l.b16 %v452
      %v1589 = vunpack.c.l.b16 %v453
      %v1590 = vunpack.c.l.b16 %v454
      %v1591 = vunpack.c.l.b16 %v455
      %v1592 = vunpack.c.l.b16 %v456
      %v1593 = vunpack.c.l.b16 %v457
      %v1594 = vunpack.c.l.b16 %v458
      %v1595 = vunpack.c.l.b16 %v459
      %v1596 = vunpack.c.l.b16 %v460
      %v1597 = vunpack.c.l.b16 %v461
      %v1598 = vunpack.c.l.b16 %v462
      %v1599 = vunpack.c.l.b16 %v463
      %v1600 = vunpack.c.l.b16 %v464
      %v1601 = vunpack.c.l.b16 %v465
      %v1602 = vunpack.c.l.b16 %v466
      %v1603 = vunpack.c.l.b16 %v467
      %v1604 = vunpack.c.l.b16 %v468
      %v1605 = vunpack.c.l.b16 %v469
      %v1606 = vunpack.c.l.b16 %v470
      %v1607 = vunpack.c.l.b16 %v471
      %v1608 = vunpack.c.l.b16 %v472
      %v1609 = vunpack.c.l.b16 %v473
      %v1610 = vunpack.c.l.b16 %v474
      %v1611 = vunpack.c.l.b16 %v475
      %v1612 = vunpack.c.l.b16 %v476
      %v1613 = vunpack.c.l.b16 %v477
      %v1614 = vunpack.c.l.b16 %v478
      %v1615 = vunpack.c.l.b16 %v479
      %v1616 = vunpack.c.l.b16 %v480
      %v1617 = vunpack.c.l.b16 %v481
      %v1618 = vunpack.c.l.b16 %v482
      %v1619 = vunpack.c.l.b16 %v483
      %v1620 = vunpack.c.l.b16 %v484
      %v1621 = vunpack.c.l.b16 %v485
      %v1622 = vunpack.c.l.b16 %v486
      %v1623 = vunpack.c.l.b16 %v487
      %v1624 = vunpack.c.l.b16 %v488
      %v1625 = vunpack.c.l.b16 %v489
      %v1626 = vunpack.c.l.b16 %v490
      %v1627 = vunpack.c.l.b16 %v491
      %v1628 = vunpack.c.l.b16 %v492
      %v1629 = vunpack.c.l.b16 %v493
      %v1630 = vunpack.c.l.b16 %v494
      %v1631 = vunpack.c.l.b16 %v495
      %v1632 = vunpack.c.l.b16 %v496
      %v1633 = vunpack.c.l.b16 %v497
      %v1634 = vunpack.c.l.b16 %v498
      %v1635 = vunpack.c.l.b16 %v499
      %v1636 = vunpack.c.l.b16 %v500
      %v1637 = vunpack.c.l.b16 %v501
      %v1638 = vunpack.c.l.b16 %v502
      %v1639 = vunpack.c.l.b16 %v503
      %v1640 = vunpack.c.l.b16 %v504
      %v1641 = vunpack.c.l.b16 %v505
      %v1642 = vunpack.c.l.b16 %v506
      %v1643 = vunpack.c.l.b16 %v507
      %v1644 = vunpack.c.l.b16 %v508
      %v1645 = vunpack.c.l.b16 %v509
      %v1646 = vunpack.c.l.b16 %v510
      %v1647 = vunpack.c.l.b16 %v511
      %v1648 = vunpack.c.l.b16 %v512
      %v1649 = vunpack.c.l.b16 %v513
      %v1650 = vunpack.c.l.b16 %v514
      %v1651 = vunpack.c.l.b16 %v515
      %v1652 = vunpack.c.l.b16 %v516
      %v1653 = vunpack.c.l.b16 %v517
      %v1654 = vunpack.c.l.b16 %v518
      %v1655 = vunpack.c.l.b16 %v519
      %v1656 = vunpack.c.l.b16 %v520
      %v1657 = vunpack.c.l.b16 %v521
      %v1658 = vunpack.c.l.b16 %v522
      %v1659 = vunpack.c.l.b16 %v523
      %v1660 = vunpack.c.l.b16 %v524
      %v1661 = vunpack.c.l.b16 %v525
      %v1662 = vunpack.c.l.b16 %v526
      %v1663 = vunpack.c.l.b16 %v527
      %v1664 = vunpack.c.l.b16 %v528
      %v1665 = vunpack.c.l.b16 %v529
      %v1666 = vunpack.c.l.b16 %v530
      %v1667 = vunpack.c.l.b16 %v531
      %v1668 = vunpack.c.l.b16 %v532
      %v1669 = vunpack.c.l.b16 %v533
      %v1670 = vunpack.c.l.b16 %v534
      %v1671 = vunpack.c.l.b16 %v535
      %v1672 = vunpack.c.l.b16 %v536
      %v1673 = vunpack.c.l.b16 %v537
      %v1674 = vunpack.c.l.b16 %v538
      %v1675 = vunpack.c.l.b16 %v539
      %v1676 = vunpack.c.l.b16 %v540
      %v1677 = vunpack.c.l.b16 %v541
      %v1678 = vunpack.c.l.b16 %v542
      %v1679 = vunpack.c.l.b16 %v543
      %v1680 = vunpack.c.l.b16 %v544
      %v1681 = vunpack.c.l.b16 %v545
      %v1682 = vunpack.c.l.b16 %v546
      %v1683 = vunpack.c.l.b16 %v547
      %v1684 = vunpack.c.l.b16 %v548
      %v1685 = vunpack.c.l.b16 %v549
      %v1686 = vunpack.c.l.b16 %v550
      %v1687 = vunpack.c.l.b16 %v551
      %v1688 = vunpack.c.l.b16 %v552
      %v1689 = vunpack.c.l.b16 %v553
      %v1690 = vunpack.c.l.b16 %v554
      %v1691 = vunpack.c.l.b16 %v555
      %v1692 = vunpack.c.l.b16 %v556
      %v1693 = vunpack.c.l.b16 %v557
      %v1694 = vunpack.c.l.b16 %v558
      %v1695 = vunpack.c.l.b16 %v559
      %v1696 = vunpack.c.l.b16 %v560
      %v1697 = vunpack.c.l.b16 %v561
      %v1698 = vunpack.c.l.b16 %v562
      %v1699 = vunpack.c.l.b16 %v563
      %v1700 = vunpack.c.l.b16 %v564
      %v1701 = vunpack.c.l.b16 %v565
      %v1702 = vunpack.c.l.b16 %v566
      %v1703 = vunpack.c.l.b16 %v567
      %v1704 = vunpack.c.l.b16 %v568
      %v1705 = vunpack.c.l.b16 %v569
      %v1706 = vunpack.c.l.b16 %v570
      %v1707 = vunpack.c.l.b16 %v571
      %v1708 = vunpack.c.l.b16 %v572
      %v1709 = vunpack.c.l.b16 %v573
      %v1710 = vunpack.c.l.b16 %v574
      %v1711 = vunpack.c.l.b16 %v575
      %v1712 = vunpack.c.l.b16 %v576
      %v1713 = vunpack.c.l.b16 %v577
      %v1714 = vunpack.c.l.b16 %v578
      %v1715 = vunpack.c.l.b16 %v579
      %v1716 = vunpack.c.l.b16 %v580
      %v1717 = vunpack.c.l.b16 %v581
      %v1718 = vunpack.c.l.b16 %v582
      %v1719 = vunpack.c.l.b16 %v583
      %v1720 = vunpack.c.l.b16 %v584
      %v1721 = vunpack.c.l.b16 %v585
      %v1722 = vunpack.c.l.b16 %v586
      %v1723 = vunpack.c.l.b16 %v587
      %v1724 = vunpack.c.l.b16 %v588
      %v1725 = vunpack.c.l.b16 %v589
      %v1726 = vunpack.c.l.b16 %v590
      %v1727 = vunpack.c.l.b16 %v591
      %v1728 = vunpack.c.l.b16 %v592
      %v1729 = vunpack.c.l.b16 %v593
      %v1730 = vunpack.c.l.b16 %v594
      %v1731 = vunpack.c.l.b16 %v595
      %v1732 = vunpack.c.l.b16 %v596
      %v1733 = vunpack.c.l.b16 %v597
      %v1734 = vunpack.c.l.b16 %v598
      %v1735 = vunpack.c.l.b16 %v599
      %v1736 = vunpack.c.l.b16 %v600
      %v1737 = vunpack.c.l.b16 %v601
      %v1738 = vunpack.c.l.b16 %v602
      %v1739 = vunpack.c.l.b16 %v603
      %v1740 = vunpack.c.l.b16 %v604
      %v1741 = vunpack.c.l.b16 %v605
      %v1742 = vunpack.c.l.b16 %v606
      %v1743 = vunpack.c.l.b16 %v607
      %v1744 = vunpack.c.l.b16 %v608
      %v1745 = vunpack.c.l.b16 %v609
      %v1746 = vunpack.c.l.b16 %v610
      %v1747 = vunpack.c.l.b16 %v611
      %v1748 = vunpack.c.l.b16 %v612
      %v1749 = vunpack.c.l.b16 %v613
      %v1750 = vunpack.c.l.b16 %v614
      %v1751 = vunpack.c.l.b16 %v615
      %v1752 = vunpack.c.l.b16 %v616
      %v1753 = vunpack.c.l.b16 %v617
      %v1754 = vunpack.c.l.b16 %v618
      %v1755 = vunpack.c.l.b16 %v619
      %v1756 = vunpack.c.l.b16 %v620
      %v1757 = vunpack.c.l.b16 %v621
      %v1758 = vunpack.c.l.b16 %v622
      %v1759 = vunpack.c.l.b16 %v623
      %v1760 = vunpack.c.l.b16 %v624
      %v1761 = vunpack.c.l.b16 %v625
      %v1762 = vunpack.c.l.b16 %v626
      %v1763 = vunpack.c.l.b16 %v627
      %v1764 = vunpack.c.l.b16 %v628
      %v1765 = vunpack.c.l.b16 %v629
      %v1766 = vunpack.c.l.b16 %v630
      %v1767 = vunpack.c.l.b16 %v631
      %v1768 = vunpack.c.l.b16 %v632
      %v1769 = vunpack.c.l.b16 %v633
      %v1770 = vunpack.c.l.b16 %v634
      %v1771 = vunpack.c.l.b16 %v635
      %v1772 = vunpack.c.l.b16 %v636
      %v1773 = vunpack.c.l.b16 %v637
      %v1774 = vunpack.c.l.b16 %v638
      %v1775 = vunpack.c.l.b16 %v639
      %v1776 = vunpack.c.l.b16 %v640
      %v1777 = vunpack.c.l.b16 %v641
      %v1778 = vunpack.c.l.b16 %v642
      %v1779 = vunpack.c.l.b16 %v643
      %v1780 = vunpack.c.l.b16 %v644
      %v1781 = vunpack.c.l.b16 %v645
      %v1782 = vunpack.c.l.b16 %v646
      %v1783 = vunpack.c.l.b16 %v647
      %v1784 = vunpack.c.l.b16 %v648
      %v1785 = vunpack.c.l.b16 %v649
      %v1786 = vunpack.c.l.b16 %v650
      %v1787 = vunpack.c.l.b16 %v651
      %v1788 = vunpack.c.l.b16 %v652
      %v1789 = vunpack.c.l.b16 %v653
      %v1790 = vunpack.c.l.b16 %v654
      %v1791 = vunpack.c.l.b16 %v655
      %v1792 = vunpack.c.l.b16 %v656
      %v1793 = vunpack.c.l.b16 %v657
      %v1794 = vunpack.c.l.b16 %v658
      %v1795 = vunpack.c.l.b16 %v659
      %v1796 = vunpack.c.l.b16 %v660
      %v1797 = vunpack.c.l.b16 %v661
      %v1798 = vunpack.c.l.b16 %v662
      %v1799 = vunpack.c.l.b16 %v663
      %v1800 = vunpack.c.l.b16 %v664
      %v1801 = vunpack.c.l.b16 %v665
      %v1802 = vunpack.c.l.b16 %v666
      %v1803 = vunpack.c.l.b16 %v667
      %v1804 = vunpack.c.l.b16 %v668
      %v1805 = vunpack.c.l.b16 %v669
      %v1806 = vunpack.c.l.b16 %v670
      %v1807 = vunpack.c.l.b16 %v671
      %v1808 = vunpack.c.l.b16 %v672
      %v1809 = vunpack.c.l.b16 %v673
      %v1810 = vunpack.c.l.b16 %v674
      %v1811 = vunpack.c.l.b16 %v675
      %v1812 = vunpack.c.l.b16 %v676
      %v1813 = vunpack.c.l.b16 %v677
      %v1814 = vunpack.c.l.b16 %v678
      %v1815 = vunpack.c.l.b16 %v679
      %v1816 = vunpack.c.l.b16 %v680
      %v1817 = vunpack.c.l.b16 %v681
      %v1818 = vunpack.c.l.b16 %v682
      %v1819 = vunpack.c.l.b16 %v683
      %v1820 = vunpack.c.l.b16 %v684
      %v1821 = vunpack.c.l.b16 %v685
      %v1822 = vunpack.c.l.b16 %v686
      %v1823 = vunpack.c.l.b16 %v687
      %v1824 = vunpack.c.l.b16 %v688
      %v1825 = vunpack.c.l.b16 %v689
      %v1826 = vunpack.c.l.b16 %v690
      %v1827 = vunpack.c.l.b16 %v691
      %v1828 = vunpack.c.l.b16 %v692
      %v1829 = vunpack.c.l.b16 %v693
      %v1830 = vunpack.c.l.b16 %v694
      %v1831 = vunpack.c.l.b16 %v695
      %v1832 = vunpack.c.l.b16 %v696
      %v1833 = vunpack.c.l.b16 %v697
      %v1834 = vunpack.c.l.b16 %v698
      %v1835 = vunpack.c.l.b16 %v699
      %v1836 = vunpack.c.l.b16 %v700
      %v1837 = vunpack.c.l.b16 %v701
      %v1838 = vunpack.c.l.b16 %v702
      %v1839 = vunpack.c.l.b16 %v703
      %v1840 = vunpack.c.l.b16 %v704
      %v1841 = vunpack.c.l.b16 %v705
      %v1842 = vunpack.c.l.b16 %v706
      %v1843 = vunpack.c.l.b16 %v707
      %v1844 = vunpack.c.l.b16 %v708
      %v1845 = vunpack.c.l.b16 %v709
      %v1846 = vunpack.c.l.b16 %v710
      %v1847 = vunpack.c.l.b16 %v711
      %v1848 = vunpack.c.l.b16 %v712
      %v1849 = vunpack.c.l.b16 %v713
      %v1850 = vunpack.c.l.b16 %v714
      %v1851 = vunpack.c.l.b16 %v715
      %v1852 = vunpack.c.l.b16 %v716
      %v1853 = vunpack.c.l.b16 %v717
      %v1854 = vunpack.c.l.b16 %v718
      %v1855 = vunpack.c.l.b16 %v719
      %v1856 = vunpack.c.l.b16 %v720
      %v1857 = vunpack.c.l.b16 %v721
      %v1858 = vunpack.c.l.b16 %v722
      %v1859 = vunpack.c.l.b16 %v723
      %v1860 = vunpack.c.l.b16 %v724
      %v1861 = vunpack.c.l.b16 %v725
      %v1862 = vunpack.c.l.b16 %v726
      %v1863 = vunpack.c.l.b16 %v727
      %v1864 = vunpack.c.l.b16 %v728
      %v1865 = vunpack.c.l.b16 %v729
      %v1866 = vunpack.c.l.b16 %v730
      %v1867 = vunpack.c.l.b16 %v731
      %v1868 = vunpack.c.l.b16 %v732
      %v1869 = vunpack.c.l.b16 %v733
      %v1870 = vunpack.c.l.b16 %v734
      %v1871 = vunpack.c.l.b16 %v735
      %v1872 = vunpack.c.l.b16 %v736
      %v1873 = vunpack.c.l.b16 %v737
      %v1874 = vunpack.c.l.b16 %v738
      %v1875 = vunpack.c.l.b16 %v739
      %v1876 = vunpack.c.l.b16 %v740
      %v1877 = vunpack.c.l.b16 %v741
      %v1878 = vunpack.c.l.b16 %v742
      %v1879 = vunpack.c.l.b16 %v743
      %v1880 = vunpack.c.l.b16 %v744
      %v1881 = vunpack.c.l.b16 %v745
      %v1882 = vunpack.c.l.b16 %v746
      %v1883 = vunpack.c.l.b16 %v747
      %v1884 = vunpack.c.l.b16 %v748
      %v1885 = vunpack.c.l.b16 %v749
      %v1886 = vunpack.c.l.b16 %v750
      %v1887 = vunpack.c.l.b16 %v751
      %v1888 = vunpack.c.l.b16 %v752
      %v1889 = vunpack.c.l.b16 %v753
      %v1890 = vunpack.c.l.b16 %v754
      %v1891 = vunpack.c.l.b16 %v755
      %v1892 = vunpack.c.l.b16 %v756
      %v1893 = vunpack.c.l.b16 %v757
      %v1894 = vunpack.c.l.b16 %v758
      %v1895 = vunpack.c.l.b16 %v759
      %v1896 = vunpack.c.l.b16 %v760
      %v1897 = vunpack.c.l.b16 %v761
      %v1898 = vunpack.c.l.b16 %v762
      %v1899 = vunpack.c.l.b16 %v763
      %v1900 = vunpack.c.l.b16 %v764
      %v1901 = vunpack.c.l.b16 %v765
      %v1902 = vunpack.c.l.b16 %v766
      %v1903 = vunpack.c.l.b16 %v767
      %v1904 = vunpack.c.l.b16 %v768
      %v1905 = vunpack.c.l.b16 %v769
      %v1906 = vunpack.c.l.b16 %v770
      %v1907 = vunpack.c.l.b16 %v771
      %v1908 = vunpack.c.l.b16 %v772
      %v1909 = vunpack.c.l.b16 %v773
      %v1910 = vunpack.c.l.b16 %v774
      %v1911 = vunpack.c.l.b16 %v775
      %v1912 = vunpack.c.l.b16 %v776
      %v1913 = vunpack.c.l.b16 %v777
      %v1914 = vunpack.c.l.b16 %v778
      %v1915 = vunpack.c.l.b16 %v779
      %v1916 = vunpack.c.l.b16 %v780
      %v1917 = vunpack.c.l.b16 %v781
      %v1918 = vunpack.c.l.b16 %v782
      %v1919 = vunpack.c.l.b16 %v783
      %v1920 = vunpack.c.l.b16 %v784
      %v1921 = vunpack.c.l.b16 %v785
      %v1922 = vunpack.c.l.b16 %v786
      %v1923 = vunpack.c.l.b16 %v787
      %v1924 = vunpack.c.l.b16 %v788
      %v1925 = vunpack.c.l.b16 %v789
      %v1926 = vunpack.c.l.b16 %v790
      %v1927 = vunpack.c.l.b16 %v791
      %v1928 = vunpack.c.l.b16 %v792
      %v1929 = vunpack.c.l.b16 %v793
      %v1930 = vpack.c.b16 %v1419, %v1418
      %v1931 = vpack.c.b16 %v1421, %v1420
      %v1932 = vpack.c.b16 %v1423, %v1422
      %v1933 = vpack.c.b16 %v1425, %v1424
      %v1934 = vpack.c.b16 %v1427, %v1426
      %v1935 = vpack.c.b16 %v1429, %v1428
      %v1936 = vpack.c.b16 %v1431, %v1430
      %v1937 = vpack.c.b16 %v1433, %v1432
      %v1938 = vpack.c.b16 %v1435, %v1434
      %v1939 = vpack.c.b16 %v1437, %v1436
      %v1940 = vpack.c.b16 %v1439, %v1438
      %v1941 = vpack.c.b16 %v1441, %v1440
      %v1942 = vpack.c.b16 %v1443, %v1442
      %v1943 = vpack.c.b16 %v1445, %v1444
      %v1944 = vpack.c.b16 %v1447, %v1446
      %v1945 = vpack.c.b16 %v1449, %v1448
      %v1946 = vpack.c.b16 %v1451, %v1450
      %v1947 = vpack.c.b16 %v1453, %v1452
      %v1948 = vpack.c.b16 %v1455, %v1454
      %v1949 = vpack.c.b16 %v1457, %v1456
      %v1950 = vpack.c.b16 %v1459, %v1458
      %v1951 = vpack.c.b16 %v1461, %v1460
      %v1952 = vpack.c.b16 %v1463, %v1462
      %v1953 = vpack.c.b16 %v1465, %v1464
      %v1954 = vpack.c.b16 %v1467, %v1466
      %v1955 = vpack.c.b16 %v1469, %v1468
      %v1956 = vpack.c.b16 %v1471, %v1470
      %v1957 = vpack.c.b16 %v1473, %v1472
      %v1958 = vpack.c.b16 %v1475, %v1474
      %v1959 = vpack.c.b16 %v1477, %v1476
      %v1960 = vpack.c.b16 %v1479, %v1478
      %v1961 = vpack.c.b16 %v1481, %v1480
      %v1962 = vpack.c.b16 %v1483, %v1482
      %v1963 = vpack.c.b16 %v1485, %v1484
      %v1964 = vpack.c.b16 %v1487, %v1486
      %v1965 = vpack.c.b16 %v1489, %v1488
      %v1966 = vpack.c.b16 %v1491, %v1490
      %v1967 = vpack.c.b16 %v1493, %v1492
      %v1968 = vpack.c.b16 %v1495, %v1494
      %v1969 = vpack.c.b16 %v1497, %v1496
      %v1970 = vpack.c.b16 %v1499, %v1498
      %v1971 = vpack.c.b16 %v1501, %v1500
      %v1972 = vpack.c.b16 %v1503, %v1502
      %v1973 = vpack.c.b16 %v1505, %v1504
      %v1974 = vpack.c.b16 %v1507, %v1506
      %v1975 = vpack.c.b16 %v1509, %v1508
      %v1976 = vpack.c.b16 %v1511, %v1510
      %v1977 = vpack.c.b16 %v1513, %v1512
      %v1978 = vpack.c.b16 %v1515, %v1514
      %v1979 = vpack.c.b16 %v1517, %v1516
      %v1980 = vpack.c.b16 %v1519, %v1518
      %v1981 = vpack.c.b16 %v1521, %v1520
      %v1982 = vpack.c.b16 %v1523, %v1522
      %v1983 = vpack.c.b16 %v1525, %v1524
      %v1984 = vpack.c.b16 %v1527, %v1526
      %v1985 = vpack.c.b16 %v1529, %v1528
      %v1986 = vpack.c.b16 %v1531, %v1530
      %v1987 = vpack.c.b16 %v1533, %v1532
      %v1988 = vpack.c.b16 %v1535, %v1534
      %v1989 = vpack.c.b16 %v1537, %v1536
      %v1990 = vpack.c.b16 %v1539, %v1538
      %v1991 = vpack.c.b16 %v1541, %v1540
      %v1992 = vpack.c.b16 %v1543, %v1542
      %v1993 = vpack.c.b16 %v1545, %v1544
      %v1994 = vpack.c.b16 %v1547, %v1546
      %v1995 = vpack.c.b16 %v1549, %v1548
      %v1996 = vpack.c.b16 %v1551, %v1550
      %v1997 = vpack.c.b16 %v1553, %v1552
      %v1998 = vpack.c.b16 %v1555, %v1554
      %v1999 = vpack.c.b16 %v1557, %v1556
      %v2000 = vpack.c.b16 %v1559, %v1558
      %v2001 = vpack.c.b16 %v1561, %v1560
      %v2002 = vpack.c.b16 %v1563, %v1562
      %v2003 = vpack.c.b16 %v1565, %v1564
      %v2004 = vpack.c.b16 %v1567, %v1566
      %v2005 = vpack.c.b16 %v1569, %v1568
      %v2006 = vpack.c.b16 %v1571, %v1570
      %v2007 = vpack.c.b16 %v1573, %v1572
      %v2008 = vpack.c.b16 %v1575, %v1574
      %v2009 = vpack.c.b16 %v1577, %v1576
      %v2010 = vpack.c.b16 %v1579, %v1578
      %v2011 = vpack.c.b16 %v1581, %v1580
      %v2012 = vpack.c.b16 %v1583, %v1582
      %v2013 = vpack.c.b16 %v1585, %v1584
      %v2014 = vpack.c.b16 %v1587, %v1586
      %v2015 = vpack.c.b16 %v1589, %v1588
      %v2016 = vpack.c.b16 %v1591, %v1590
      %v2017 = vpack.c.b16 %v1593, %v1592
      %v2018 = vpack.c.b16 %v1595, %v1594
      %v2019 = vpack.c.b16 %v1597, %v1596
      %v2020 = vpack.c.b16 %v1599, %v1598
      %v2021 = vpack.c.b16 %v1601, %v1600
      %v2022 = vpack.c.b16 %v1603, %v1602
      %v2023 = vpack.c.b16 %v1605, %v1604
      %v2024 = vpack.c.b16 %v1607, %v1606
      %v2025 = vpack.c.b16 %v1609, %v1608
      %v2026 = vpack.c.b16 %v1611, %v1610
      %v2027 = vpack.c.b16 %v1613, %v1612
      %v2028 = vpack.c.b16 %v1615, %v1614
      %v2029 = vpack.c.b16 %v1617, %v1616
      %v2030 = vpack.c.b16 %v1619, %v1618
      %v2031 = vpack.c.b16 %v1621, %v1620
      %v2032 = vpack.c.b16 %v1623, %v1622
      %v2033 = vpack.c.b16 %v1625, %v1624
      %v2034 = vpack.c.b16 %v1627, %v1626
      %v2035 = vpack.c.b16 %v1629, %v1628
      %v2036 = vpack.c.b16 %v1631, %v1630
      %v2037 = vpack.c.b16 %v1633, %v1632
      %v2038 = vpack.c.b16 %v1635, %v1634
      %v2039 = vpack.c.b16 %v1637, %v1636
      %v2040 = vpack.c.b16 %v1639, %v1638
      %v2041 = vpack.c.b16 %v1641, %v1640
      %v2042 = vpack.c.b16 %v1643, %v1642
      %v2043 = vpack.c.b16 %v1645, %v1644
      %v2044 = vpack.c.b16 %v1647, %v1646
      %v2045 = vpack.c.b16 %v1649, %v1648
      %v2046 = vpack.c.b16 %v1651, %v1650
      %v2047 = vpack.c.b16 %v1653, %v1652
      %v2048 = vpack.c.b16 %v1655, %v1654
      %v2049 = vpack.c.b16 %v1657, %v1656
      %v2050 = vpack.c.b16 %v1659, %v1658
      %v2051 = vpack.c.b16 %v1661, %v1660
      %v2052 = vpack.c.b16 %v1663, %v1662
      %v2053 = vpack.c.b16 %v1665, %v1664
      %v2054 = vpack.c.b16 %v1667, %v1666
      %v2055 = vpack.c.b16 %v1669, %v1668
      %v2056 = vpack.c.b16 %v1671, %v1670
      %v2057 = vpack.c.b16 %v1673, %v1672
      %v2058 = vpack.c.b16 %v1675, %v1674
      %v2059 = vpack.c.b16 %v1677, %v1676
      %v2060 = vpack.c.b16 %v1679, %v1678
      %v2061 = vpack.c.b16 %v1681, %v1680
      %v2062 = vpack.c.b16 %v1683, %v1682
      %v2063 = vpack.c.b16 %v1685, %v1684
      %v2064 = vpack.c.b16 %v1687, %v1686
      %v2065 = vpack.c.b16 %v1689, %v1688
      %v2066 = vpack.c.b16 %v1691, %v1690
      %v2067 = vpack.c.b16 %v1693, %v1692
      %v2068 = vpack.c.b16 %v1695, %v1694
      %v2069 = vpack.c.b16 %v1697, %v1696
      %v2070 = vpack.c.b16 %v1699, %v1698
      %v2071 = vpack.c.b16 %v1701, %v1700
      %v2072 = vpack.c.b16 %v1703, %v1702
      %v2073 = vpack.c.b16 %v1705, %v1704
      %v2074 = vpack.c.b16 %v1707, %v1706
      %v2075 = vpack.c.b16 %v1709, %v1708
      %v2076 = vpack.c.b16 %v1711, %v1710
      %v2077 = vpack.c.b16 %v1713, %v1712
      %v2078 = vpack.c.b16 %v1715, %v1714
      %v2079 = vpack.c.b16 %v1717, %v1716
      %v2080 = vpack.c.b16 %v1719, %v1718
      %v2081 = vpack.c.b16 %v1721, %v1720
      %v2082 = vpack.c.b16 %v1723, %v1722
      %v2083 = vpack.c.b16 %v1725, %v1724
      %v2084 = vpack.c.b16 %v1727, %v1726
      %v2085 = vpack.c.b16 %v1729, %v1728
      %v2086 = vpack.c.b16 %v1731, %v1730
      %v2087 = vpack.c.b16 %v1733, %v1732
      %v2088 = vpack.c.b16 %v1735, %v1734
      %v2089 = vpack.c.b16 %v1737, %v1736
      %v2090 = vpack.c.b16 %v1739, %v1738
      %v2091 = vpack.c.b16 %v1741, %v1740
      %v2092 = vpack.c.b16 %v1743, %v1742
      %v2093 = vpack.c.b16 %v1745, %v1744
      %v2094 = vpack.c.b16 %v1747, %v1746
      %v2095 = vpack.c.b16 %v1749, %v1748
      %v2096 = vpack.c.b16 %v1751, %v1750
      %v2097 = vpack.c.b16 %v1753, %v1752
      %v2098 = vpack.c.b16 %v1755, %v1754
      %v2099 = vpack.c.b16 %v1757, %v1756
      %v2100 = vpack.c.b16 %v1759, %v1758
      %v2101 = vpack.c.b16 %v1761, %v1760
      %v2102 = vpack.c.b16 %v1763, %v1762
      %v2103 = vpack.c.b16 %v1765, %v1764
      %v2104 = vpack.c.b16 %v1767, %v1766
      %v2105 = vpack.c.b16 %v1769, %v1768
      %v2106 = vpack.c.b16 %v1771, %v1770
      %v2107 = vpack.c.b16 %v1773, %v1772
      %v2108 = vpack.c.b16 %v1775, %v1774
      %v2109 = vpack.c.b16 %v1777, %v1776
      %v2110 = vpack.c.b16 %v1779, %v1778
      %v2111 = vpack.c.b16 %v1781, %v1780
      %v2112 = vpack.c.b16 %v1783, %v1782
      %v2113 = vpack.c.b16 %v1785, %v1784
      %v2114 = vpack.c.b16 %v1787, %v1786
      %v2115 = vpack.c.b16 %v1789, %v1788
      %v2116 = vpack.c.b16 %v1791, %v1790
      %v2117 = vpack.c.b16 %v1793, %v1792
      %v2118 = vpack.c.b16 %v1795, %v1794
      %v2119 = vpack.c.b16 %v1797, %v1796
      %v2120 = vpack.c.b16 %v1799, %v1798
      %v2121 = vpack.c.b16 %v1801, %v1800
      %v2122 = vpack.c.b16 %v1803, %v1802
      %v2123 = vpack.c.b16 %v1805, %v1804
      %v2124 = vpack.c.b16 %v1807, %v1806
      %v2125 = vpack.c.b16 %v1809, %v1808
      %v2126 = vpack.c.b16 %v1811, %v1810
      %v2127 = vpack.c.b16 %v1813, %v1812
      %v2128 = vpack.c.b16 %v1815, %v1814
      %v2129 = vpack.c.b16 %v1817, %v1816
      %v2130 = vpack.c.b16 %v1819, %v1818
      %v2131 = vpack.c.b16 %v1821, %v1820
      %v2132 = vpack.c.b16 %v1823, %v1822
      %v2133 = vpack.c.b16 %v1825, %v1824
      %v2134 = vpack.c.b16 %v1827, %v1826
      %v2135 = vpack.c.b16 %v1829, %v1828
      %v2136 = vpack.c.b16 %v1831, %v1830
      %v2137 = vpack.c.b16 %v1833, %v1832
      %v2138 = vpack.c.b16 %v1835, %v1834
      %v2139 = vpack.c.b16 %v1837, %v1836
      %v2140 = vpack.c.b16 %v1839, %v1838
      %v2141 = vpack.c.b16 %v1841, %v1840
      %v2142 = vpack.c.b16 %v1843, %v1842
      %v2143 = vpack.c.b16 %v1845, %v1844
      %v2144 = vpack.c.b16 %v1847, %v1846
      %v2145 = vpack.c.b16 %v1849, %v1848
      %v2146 = vpack.c.b16 %v1851, %v1850
      %v2147 = vpack.c.b16 %v1853, %v1852
      %v2148 = vpack.c.b16 %v1855, %v1854
      %v2149 = vpack.c.b16 %v1857, %v1856
      %v2150 = vpack.c.b16 %v1859, %v1858
      %v2151 = vpack.c.b16 %v1861, %v1860
      %v2152 = vpack.c.b16 %v1863, %v1862
      %v2153 = vpack.c.b16 %v1865, %v1864
      %v2154 = vpack.c.b16 %v1867, %v1866
      %v2155 = vpack.c.b16 %v1869, %v1868
      %v2156 = vpack.c.b16 %v1871, %v1870
      %v2157 = vpack.c.b16 %v1873, %v1872
      %v2158 = vpack.c.b16 %v1875, %v1874
      %v2159 = vpack.c.b16 %v1877, %v1876
      %v2160 = vpack.c.b16 %v1879, %v1878
      %v2161 = vpack.c.b16 %v1881, %v1880
      %v2162 = vpack.c.b16 %v1883, %v1882
      %v2163 = vpack.c.b16 %v1885, %v1884
      %v2164 = vpack.c.b16 %v1887, %v1886
      %v2165 = vpack.c.b16 %v1889, %v1888
      %v2166 = vpack.c.b16 %v1891, %v1890
      %v2167 = vpack.c.b16 %v1893, %v1892
      %v2168 = vpack.c.b16 %v1895, %v1894
      %v2169 = vpack.c.b16 %v1897, %v1896
      %v2170 = vpack.c.b16 %v1899, %v1898
      %v2171 = vpack.c.b16 %v1901, %v1900
      %v2172 = vpack.c.b16 %v1903, %v1902
      %v2173 = vpack.c.b16 %v1905, %v1904
      %v2174 = vpack.c.b16 %v1907, %v1906
      %v2175 = vpack.c.b16 %v1909, %v1908
      %v2176 = vpack.c.b16 %v1911, %v1910
      %v2177 = vpack.c.b16 %v1913, %v1912
      %v2178 = vpack.c.b16 %v1915, %v1914
      %v2179 = vpack.c.b16 %v1917, %v1916
      %v2180 = vpack.c.b16 %v1919, %v1918
      %v2181 = vpack.c.b16 %v1921, %v1920
      %v2182 = vpack.c.b16 %v1923, %v1922
      %v2183 = vpack.c.b16 %v1925, %v1924
      %v2184 = vpack.c.b16 %v1927, %v1926
      %v2185 = vpack.c.b16 %v1929, %v1928
      %2442 = vmatprep.subr.bf16.mxu0 0
      %2443 = vmatpush1.bf16.msra.mxu0 %v1937
      %2444 = vmatprep.subr.bf16.mxu0 0
      %2445 = vmatpush1.bf16.msra.mxu0 %v1936
      %2446 = vmatprep.subr.bf16.mxu0 0
      %2447 = vmatpush1.bf16.msra.mxu0 %v1935
      %2448 = vmatprep.subr.bf16.mxu0 0
      %2449 = vmatpush1.bf16.msra.mxu0 %v1934
      %2450 = vmatprep.subr.bf16.mxu0 0
      %2451 = vmatpush1.bf16.msra.mxu0 %v1933
      %2452 = vmatprep.subr.bf16.mxu0 0
      %2453 = vmatpush1.bf16.msra.mxu0 %v1932
      %2454 = vmatprep.subr.bf16.mxu0 0
      %2455 = vmatpush1.bf16.msra.mxu0 %v1931
      %2456 = vmatprep.subr.bf16.mxu0 0
      %2457 = vmatpush1.bf16.msra.mxu0 %v1930
      %2458 = vmatprep.subr.bf16.mxu0 0
      %2459 = vmatpush2.bf16.msra.mxu0 %v1945
      %2460 = vmatprep.subr.bf16.mxu0 0
      %2461 = vmatpush2.bf16.msra.mxu0 %v1944
      %2462 = vmatprep.subr.bf16.mxu0 0
      %2463 = vmatpush2.bf16.msra.mxu0 %v1943
      %2464 = vmatprep.subr.bf16.mxu0 0
      %2465 = vmatpush2.bf16.msra.mxu0 %v1942
      %2466 = vmatprep.subr.bf16.mxu0 0
      %2467 = vmatpush2.bf16.msra.mxu0 %v1941
      %2468 = vmatprep.subr.bf16.mxu0 0
      %2469 = vmatpush2.bf16.msra.mxu0 %v1940
      %2470 = vmatprep.subr.bf16.mxu0 0
      %2471 = vmatpush2.bf16.msra.mxu0 %v1939
      %2472 = vmatprep.subr.bf16.mxu0 0
      %2473 = vmatpush2.bf16.msra.mxu0 %v1938
      %2474 = vmatprep.mubr.bf16.mxu0 %v843
      %2475 = vmatmul.mubr.bf16.gmra.mxu0 %v842
      %v2476 = vpop.f32.mrf.mxu0
      %v2477 = vadd.f32 0.0, %v2476
      %v2478 = vpop.f32.mrf.mxu0
      %v2479 = vpop.f32.mrf.mxu0
      %v2480 = vpop.f32.mrf.mxu0
      %2481 = vdwg.mxu0
      %2482 = vmatprep.subr.bf16.mxu0 0
      %2483 = vmatpush1.bf16.msra.mxu0 %v1953
      %2484 = vmatprep.subr.bf16.mxu0 0
      %2485 = vmatpush1.bf16.msra.mxu0 %v1952
      %2486 = vmatprep.subr.bf16.mxu0 0
      %2487 = vmatpush1.bf16.msra.mxu0 %v1951
      %2488 = vmatprep.subr.bf16.mxu0 0
      %2489 = vmatpush1.bf16.msra.mxu0 %v1950
      %2490 = vmatprep.subr.bf16.mxu0 0
      %2491 = vmatpush1.bf16.msra.mxu0 %v1949
      %2492 = vmatprep.subr.bf16.mxu0 0
      %2493 = vmatpush1.bf16.msra.mxu0 %v1948
      %2494 = vmatprep.subr.bf16.mxu0 0
      %2495 = vmatpush1.bf16.msra.mxu0 %v1947
      %2496 = vmatprep.subr.bf16.mxu0 0
      %2497 = vmatpush1.bf16.msra.mxu0 %v1946
      %2498 = vmatprep.subr.bf16.mxu0 0
      %2499 = vmatpush2.bf16.msra.mxu0 %v1961
      %2500 = vmatprep.subr.bf16.mxu0 0
      %2501 = vmatpush2.bf16.msra.mxu0 %v1960
      %2502 = vmatprep.subr.bf16.mxu0 0
      %2503 = vmatpush2.bf16.msra.mxu0 %v1959
      %2504 = vmatprep.subr.bf16.mxu0 0
      %2505 = vmatpush2.bf16.msra.mxu0 %v1958
      %2506 = vmatprep.subr.bf16.mxu0 0
      %2507 = vmatpush2.bf16.msra.mxu0 %v1957
      %2508 = vmatprep.subr.bf16.mxu0 0
      %2509 = vmatpush2.bf16.msra.mxu0 %v1956
      %2510 = vmatprep.subr.bf16.mxu0 0
      %2511 = vmatpush2.bf16.msra.mxu0 %v1955
      %2512 = vmatprep.subr.bf16.mxu0 0
      %2513 = vmatpush2.bf16.msra.mxu0 %v1954
      %2514 = vmatprep.mubr.bf16.mxu0 %v845
      %2515 = vmatmul.mubr.bf16.gmra.mxu0 %v844
      %v2516 = vpop.f32.mrf.mxu0
      %v2517 = vadd.f32 %v2477, %v2516
      %v2518 = vpop.f32.mrf.mxu0
      %v2519 = vpop.f32.mrf.mxu0
      %v2520 = vpop.f32.mrf.mxu0
      %2521 = vdwg.mxu0
      %2522 = vmatprep.subr.bf16.mxu0 0
      %2523 = vmatpush1.bf16.msra.mxu0 %v1969
      %2524 = vmatprep.subr.bf16.mxu0 0
      %2525 = vmatpush1.bf16.msra.mxu0 %v1968
      %2526 = vmatprep.subr.bf16.mxu0 0
      %2527 = vmatpush1.bf16.msra.mxu0 %v1967
      %2528 = vmatprep.subr.bf16.mxu0 0
      %2529 = vmatpush1.bf16.msra.mxu0 %v1966
      %2530 = vmatprep.subr.bf16.mxu0 0
      %2531 = vmatpush1.bf16.msra.mxu0 %v1965
      %2532 = vmatprep.subr.bf16.mxu0 0
      %2533 = vmatpush1.bf16.msra.mxu0 %v1964
      %2534 = vmatprep.subr.bf16.mxu0 0
      %2535 = vmatpush1.bf16.msra.mxu0 %v1963
      %2536 = vmatprep.subr.bf16.mxu0 0
      %2537 = vmatpush1.bf16.msra.mxu0 %v1962
      %2538 = vmatprep.subr.bf16.mxu0 0
      %2539 = vmatpush2.bf16.msra.mxu0 %v1977
      %2540 = vmatprep.subr.bf16.mxu0 0
      %2541 = vmatpush2.bf16.msra.mxu0 %v1976
      %2542 = vmatprep.subr.bf16.mxu0 0
      %2543 = vmatpush2.bf16.msra.mxu0 %v1975
      %2544 = vmatprep.subr.bf16.mxu0 0
      %2545 = vmatpush2.bf16.msra.mxu0 %v1974
      %2546 = vmatprep.subr.bf16.mxu0 0
      %2547 = vmatpush2.bf16.msra.mxu0 %v1973
      %2548 = vmatprep.subr.bf16.mxu0 0
      %2549 = vmatpush2.bf16.msra.mxu0 %v1972
      %2550 = vmatprep.subr.bf16.mxu0 0
      %2551 = vmatpush2.bf16.msra.mxu0 %v1971
      %2552 = vmatprep.subr.bf16.mxu0 0
      %2553 = vmatpush2.bf16.msra.mxu0 %v1970
      %2554 = vmatprep.mubr.bf16.mxu0 %v847
      %2555 = vmatmul.mubr.bf16.gmra.mxu0 %v846
      %v2556 = vpop.f32.mrf.mxu0
      %v2557 = vadd.f32 %v2517, %v2556
      %v2558 = vpop.f32.mrf.mxu0
      %v2559 = vpop.f32.mrf.mxu0
      %v2560 = vpop.f32.mrf.mxu0
      %2561 = vdwg.mxu0
      %2562 = vmatprep.subr.bf16.mxu0 0
      %2563 = vmatpush1.bf16.msra.mxu0 %v1985
      %2564 = vmatprep.subr.bf16.mxu0 0
      %2565 = vmatpush1.bf16.msra.mxu0 %v1984
      %2566 = vmatprep.subr.bf16.mxu0 0
      %2567 = vmatpush1.bf16.msra.mxu0 %v1983
      %2568 = vmatprep.subr.bf16.mxu0 0
      %2569 = vmatpush1.bf16.msra.mxu0 %v1982
      %2570 = vmatprep.subr.bf16.mxu0 0
      %2571 = vmatpush1.bf16.msra.mxu0 %v1981
      %2572 = vmatprep.subr.bf16.mxu0 0
      %2573 = vmatpush1.bf16.msra.mxu0 %v1980
      %2574 = vmatprep.subr.bf16.mxu0 0
      %2575 = vmatpush1.bf16.msra.mxu0 %v1979
      %2576 = vmatprep.subr.bf16.mxu0 0
      %2577 = vmatpush1.bf16.msra.mxu0 %v1978
      %2578 = vmatprep.subr.bf16.mxu0 0
      %2579 = vmatpush2.bf16.msra.mxu0 %v1993
      %2580 = vmatprep.subr.bf16.mxu0 0
      %2581 = vmatpush2.bf16.msra.mxu0 %v1992
      %2582 = vmatprep.subr.bf16.mxu0 0
      %2583 = vmatpush2.bf16.msra.mxu0 %v1991
      %2584 = vmatprep.subr.bf16.mxu0 0
      %2585 = vmatpush2.bf16.msra.mxu0 %v1990
      %2586 = vmatprep.subr.bf16.mxu0 0
      %2587 = vmatpush2.bf16.msra.mxu0 %v1989
      %2588 = vmatprep.subr.bf16.mxu0 0
      %2589 = vmatpush2.bf16.msra.mxu0 %v1988
      %2590 = vmatprep.subr.bf16.mxu0 0
      %2591 = vmatpush2.bf16.msra.mxu0 %v1987
      %2592 = vmatprep.subr.bf16.mxu0 0
      %2593 = vmatpush2.bf16.msra.mxu0 %v1986
      %2594 = vmatprep.mubr.bf16.mxu0 %v849
      %2595 = vmatmul.mubr.bf16.gmra.mxu0 %v848
      %v2596 = vpop.f32.mrf.mxu0
      %v2597 = vadd.f32 %v2557, %v2596
      %v2598 = vpop.f32.mrf.mxu0
      %v2599 = vpop.f32.mrf.mxu0
      %v2600 = vpop.f32.mrf.mxu0
      %2601 = vdwg.mxu0
      %2602 = vmatprep.subr.bf16.mxu0 0
      %2603 = vmatpush1.bf16.msra.mxu0 %v2001
      %2604 = vmatprep.subr.bf16.mxu0 0
      %2605 = vmatpush1.bf16.msra.mxu0 %v2000
      %2606 = vmatprep.subr.bf16.mxu0 0
      %2607 = vmatpush1.bf16.msra.mxu0 %v1999
      %2608 = vmatprep.subr.bf16.mxu0 0
      %2609 = vmatpush1.bf16.msra.mxu0 %v1998
      %2610 = vmatprep.subr.bf16.mxu0 0
      %2611 = vmatpush1.bf16.msra.mxu0 %v1997
      %2612 = vmatprep.subr.bf16.mxu0 0
      %2613 = vmatpush1.bf16.msra.mxu0 %v1996
      %2614 = vmatprep.subr.bf16.mxu0 0
      %2615 = vmatpush1.bf16.msra.mxu0 %v1995
      %2616 = vmatprep.subr.bf16.mxu0 0
      %2617 = vmatpush1.bf16.msra.mxu0 %v1994
      %2618 = vmatprep.subr.bf16.mxu0 0
      %2619 = vmatpush2.bf16.msra.mxu0 %v2009
      %2620 = vmatprep.subr.bf16.mxu0 0
      %2621 = vmatpush2.bf16.msra.mxu0 %v2008
      %2622 = vmatprep.subr.bf16.mxu0 0
      %2623 = vmatpush2.bf16.msra.mxu0 %v2007
      %2624 = vmatprep.subr.bf16.mxu0 0
      %2625 = vmatpush2.bf16.msra.mxu0 %v2006
      %2626 = vmatprep.subr.bf16.mxu0 0
      %2627 = vmatpush2.bf16.msra.mxu0 %v2005
      %2628 = vmatprep.subr.bf16.mxu0 0
      %2629 = vmatpush2.bf16.msra.mxu0 %v2004
      %2630 = vmatprep.subr.bf16.mxu0 0
      %2631 = vmatpush2.bf16.msra.mxu0 %v2003
      %2632 = vmatprep.subr.bf16.mxu0 0
      %2633 = vmatpush2.bf16.msra.mxu0 %v2002
      %2634 = vmatprep.mubr.bf16.mxu0 %v851
      %2635 = vmatmul.mubr.bf16.gmra.mxu0 %v850
      %v2636 = vpop.f32.mrf.mxu0
      %v2637 = vadd.f32 %v2597, %v2636
      %v2638 = vpop.f32.mrf.mxu0
      %v2639 = vpop.f32.mrf.mxu0
      %v2640 = vpop.f32.mrf.mxu0
      %2641 = vdwg.mxu0
      %2642 = vmatprep.subr.bf16.mxu0 0
      %2643 = vmatpush1.bf16.msra.mxu0 %v2017
      %2644 = vmatprep.subr.bf16.mxu0 0
      %2645 = vmatpush1.bf16.msra.mxu0 %v2016
      %2646 = vmatprep.subr.bf16.mxu0 0
      %2647 = vmatpush1.bf16.msra.mxu0 %v2015
      %2648 = vmatprep.subr.bf16.mxu0 0
      %2649 = vmatpush1.bf16.msra.mxu0 %v2014
      %2650 = vmatprep.subr.bf16.mxu0 0
      %2651 = vmatpush1.bf16.msra.mxu0 %v2013
      %2652 = vmatprep.subr.bf16.mxu0 0
      %2653 = vmatpush1.bf16.msra.mxu0 %v2012
      %2654 = vmatprep.subr.bf16.mxu0 0
      %2655 = vmatpush1.bf16.msra.mxu0 %v2011
      %2656 = vmatprep.subr.bf16.mxu0 0
      %2657 = vmatpush1.bf16.msra.mxu0 %v2010
      %2658 = vmatprep.subr.bf16.mxu0 0
      %2659 = vmatpush2.bf16.msra.mxu0 %v2025
      %2660 = vmatprep.subr.bf16.mxu0 0
      %2661 = vmatpush2.bf16.msra.mxu0 %v2024
      %2662 = vmatprep.subr.bf16.mxu0 0
      %2663 = vmatpush2.bf16.msra.mxu0 %v2023
      %2664 = vmatprep.subr.bf16.mxu0 0
      %2665 = vmatpush2.bf16.msra.mxu0 %v2022
      %2666 = vmatprep.subr.bf16.mxu0 0
      %2667 = vmatpush2.bf16.msra.mxu0 %v2021
      %2668 = vmatprep.subr.bf16.mxu0 0
      %2669 = vmatpush2.bf16.msra.mxu0 %v2020
      %2670 = vmatprep.subr.bf16.mxu0 0
      %2671 = vmatpush2.bf16.msra.mxu0 %v2019
      %2672 = vmatprep.subr.bf16.mxu0 0
      %2673 = vmatpush2.bf16.msra.mxu0 %v2018
      %2674 = vmatprep.mubr.bf16.mxu0 %v853
      %2675 = vmatmul.mubr.bf16.gmra.mxu0 %v852
      %v2676 = vpop.f32.mrf.mxu0
      %v2677 = vadd.f32 %v2637, %v2676
      %v2678 = vpop.f32.mrf.mxu0
      %v2679 = vpop.f32.mrf.mxu0
      %v2680 = vpop.f32.mrf.mxu0
      %2681 = vdwg.mxu0
      %2682 = vmatprep.subr.bf16.mxu0 0
      %2683 = vmatpush1.bf16.msra.mxu0 %v2033
      %2684 = vmatprep.subr.bf16.mxu0 0
      %2685 = vmatpush1.bf16.msra.mxu0 %v2032
      %2686 = vmatprep.subr.bf16.mxu0 0
      %2687 = vmatpush1.bf16.msra.mxu0 %v2031
      %2688 = vmatprep.subr.bf16.mxu0 0
      %2689 = vmatpush1.bf16.msra.mxu0 %v2030
      %2690 = vmatprep.subr.bf16.mxu0 0
      %2691 = vmatpush1.bf16.msra.mxu0 %v2029
      %2692 = vmatprep.subr.bf16.mxu0 0
      %2693 = vmatpush1.bf16.msra.mxu0 %v2028
      %2694 = vmatprep.subr.bf16.mxu0 0
      %2695 = vmatpush1.bf16.msra.mxu0 %v2027
      %2696 = vmatprep.subr.bf16.mxu0 0
      %2697 = vmatpush1.bf16.msra.mxu0 %v2026
      %2698 = vmatprep.subr.bf16.mxu0 0
      %2699 = vmatpush2.bf16.msra.mxu0 %v2041
      %2700 = vmatprep.subr.bf16.mxu0 0
      %2701 = vmatpush2.bf16.msra.mxu0 %v2040
      %2702 = vmatprep.subr.bf16.mxu0 0
      %2703 = vmatpush2.bf16.msra.mxu0 %v2039
      %2704 = vmatprep.subr.bf16.mxu0 0
      %2705 = vmatpush2.bf16.msra.mxu0 %v2038
      %2706 = vmatprep.subr.bf16.mxu0 0
      %2707 = vmatpush2.bf16.msra.mxu0 %v2037
      %2708 = vmatprep.subr.bf16.mxu0 0
      %2709 = vmatpush2.bf16.msra.mxu0 %v2036
      %2710 = vmatprep.subr.bf16.mxu0 0
      %2711 = vmatpush2.bf16.msra.mxu0 %v2035
      %2712 = vmatprep.subr.bf16.mxu0 0
      %2713 = vmatpush2.bf16.msra.mxu0 %v2034
      %2714 = vmatprep.mubr.bf16.mxu0 %v855
      %2715 = vmatmul.mubr.bf16.gmra.mxu0 %v854
      %v2716 = vpop.f32.mrf.mxu0
      %v2717 = vadd.f32 %v2677, %v2716
      %v2718 = vpop.f32.mrf.mxu0
      %v2719 = vpop.f32.mrf.mxu0
      %v2720 = vpop.f32.mrf.mxu0
      %2721 = vdwg.mxu0
      %2722 = vmatprep.subr.bf16.mxu0 0
      %2723 = vmatpush1.bf16.msra.mxu0 %v2049
      %2724 = vmatprep.subr.bf16.mxu0 0
      %2725 = vmatpush1.bf16.msra.mxu0 %v2048
      %2726 = vmatprep.subr.bf16.mxu0 0
      %2727 = vmatpush1.bf16.msra.mxu0 %v2047
      %2728 = vmatprep.subr.bf16.mxu0 0
      %2729 = vmatpush1.bf16.msra.mxu0 %v2046
      %2730 = vmatprep.subr.bf16.mxu0 0
      %2731 = vmatpush1.bf16.msra.mxu0 %v2045
      %2732 = vmatprep.subr.bf16.mxu0 0
      %2733 = vmatpush1.bf16.msra.mxu0 %v2044
      %2734 = vmatprep.subr.bf16.mxu0 0
      %2735 = vmatpush1.bf16.msra.mxu0 %v2043
      %2736 = vmatprep.subr.bf16.mxu0 0
      %2737 = vmatpush1.bf16.msra.mxu0 %v2042
      %2738 = vmatprep.subr.bf16.mxu0 0
      %2739 = vmatpush2.bf16.msra.mxu0 %v2057
      %2740 = vmatprep.subr.bf16.mxu0 0
      %2741 = vmatpush2.bf16.msra.mxu0 %v2056
      %2742 = vmatprep.subr.bf16.mxu0 0
      %2743 = vmatpush2.bf16.msra.mxu0 %v2055
      %2744 = vmatprep.subr.bf16.mxu0 0
      %2745 = vmatpush2.bf16.msra.mxu0 %v2054
      %2746 = vmatprep.subr.bf16.mxu0 0
      %2747 = vmatpush2.bf16.msra.mxu0 %v2053
      %2748 = vmatprep.subr.bf16.mxu0 0
      %2749 = vmatpush2.bf16.msra.mxu0 %v2052
      %2750 = vmatprep.subr.bf16.mxu0 0
      %2751 = vmatpush2.bf16.msra.mxu0 %v2051
      %2752 = vmatprep.subr.bf16.mxu0 0
      %2753 = vmatpush2.bf16.msra.mxu0 %v2050
      %2754 = vmatprep.mubr.bf16.mxu0 %v857
      %2755 = vmatmul.mubr.bf16.gmra.mxu0 %v856
      %v2756 = vpop.f32.mrf.mxu0
      %v2757 = vadd.f32 %v2717, %v2756
      %v2758 = vpop.f32.mrf.mxu0
      %v2759 = vpop.f32.mrf.mxu0
      %v2760 = vpop.f32.mrf.mxu0
      %2761 = vdwg.mxu0
      %2762 = vmatprep.subr.bf16.mxu0 0
      %2763 = vmatpush1.bf16.msra.mxu0 %v2065
      %2764 = vmatprep.subr.bf16.mxu0 0
      %2765 = vmatpush1.bf16.msra.mxu0 %v2064
      %2766 = vmatprep.subr.bf16.mxu0 0
      %2767 = vmatpush1.bf16.msra.mxu0 %v2063
      %2768 = vmatprep.subr.bf16.mxu0 0
      %2769 = vmatpush1.bf16.msra.mxu0 %v2062
      %2770 = vmatprep.subr.bf16.mxu0 0
      %2771 = vmatpush1.bf16.msra.mxu0 %v2061
      %2772 = vmatprep.subr.bf16.mxu0 0
      %2773 = vmatpush1.bf16.msra.mxu0 %v2060
      %2774 = vmatprep.subr.bf16.mxu0 0
      %2775 = vmatpush1.bf16.msra.mxu0 %v2059
      %2776 = vmatprep.subr.bf16.mxu0 0
      %2777 = vmatpush1.bf16.msra.mxu0 %v2058
      %2778 = vmatprep.subr.bf16.mxu0 0
      %2779 = vmatpush2.bf16.msra.mxu0 %v2073
      %2780 = vmatprep.subr.bf16.mxu0 0
      %2781 = vmatpush2.bf16.msra.mxu0 %v2072
      %2782 = vmatprep.subr.bf16.mxu0 0
      %2783 = vmatpush2.bf16.msra.mxu0 %v2071
      %2784 = vmatprep.subr.bf16.mxu0 0
      %2785 = vmatpush2.bf16.msra.mxu0 %v2070
      %2786 = vmatprep.subr.bf16.mxu0 0
      %2787 = vmatpush2.bf16.msra.mxu0 %v2069
      %2788 = vmatprep.subr.bf16.mxu0 0
      %2789 = vmatpush2.bf16.msra.mxu0 %v2068
      %2790 = vmatprep.subr.bf16.mxu0 0
      %2791 = vmatpush2.bf16.msra.mxu0 %v2067
      %2792 = vmatprep.subr.bf16.mxu0 0
      %2793 = vmatpush2.bf16.msra.mxu0 %v2066
      %2794 = vmatprep.mubr.bf16.mxu0 %v859
      %2795 = vmatmul.mubr.bf16.gmra.mxu0 %v858
      %v2796 = vpop.f32.mrf.mxu0
      %v2797 = vadd.f32 %v2757, %v2796
      %v2798 = vpop.f32.mrf.mxu0
      %v2799 = vpop.f32.mrf.mxu0
      %v2800 = vpop.f32.mrf.mxu0
      %2801 = vdwg.mxu0
      %2802 = vmatprep.subr.bf16.mxu0 0
      %2803 = vmatpush1.bf16.msra.mxu0 %v2081
      %2804 = vmatprep.subr.bf16.mxu0 0
      %2805 = vmatpush1.bf16.msra.mxu0 %v2080
      %2806 = vmatprep.subr.bf16.mxu0 0
      %2807 = vmatpush1.bf16.msra.mxu0 %v2079
      %2808 = vmatprep.subr.bf16.mxu0 0
      %2809 = vmatpush1.bf16.msra.mxu0 %v2078
      %2810 = vmatprep.subr.bf16.mxu0 0
      %2811 = vmatpush1.bf16.msra.mxu0 %v2077
      %2812 = vmatprep.subr.bf16.mxu0 0
      %2813 = vmatpush1.bf16.msra.mxu0 %v2076
      %2814 = vmatprep.subr.bf16.mxu0 0
      %2815 = vmatpush1.bf16.msra.mxu0 %v2075
      %2816 = vmatprep.subr.bf16.mxu0 0
      %2817 = vmatpush1.bf16.msra.mxu0 %v2074
      %2818 = vmatprep.subr.bf16.mxu0 0
      %2819 = vmatpush2.bf16.msra.mxu0 %v2089
      %2820 = vmatprep.subr.bf16.mxu0 0
      %2821 = vmatpush2.bf16.msra.mxu0 %v2088
      %2822 = vmatprep.subr.bf16.mxu0 0
      %2823 = vmatpush2.bf16.msra.mxu0 %v2087
      %2824 = vmatprep.subr.bf16.mxu0 0
      %2825 = vmatpush2.bf16.msra.mxu0 %v2086
      %2826 = vmatprep.subr.bf16.mxu0 0
      %2827 = vmatpush2.bf16.msra.mxu0 %v2085
      %2828 = vmatprep.subr.bf16.mxu0 0
      %2829 = vmatpush2.bf16.msra.mxu0 %v2084
      %2830 = vmatprep.subr.bf16.mxu0 0
      %2831 = vmatpush2.bf16.msra.mxu0 %v2083
      %2832 = vmatprep.subr.bf16.mxu0 0
      %2833 = vmatpush2.bf16.msra.mxu0 %v2082
      %2834 = vmatprep.mubr.bf16.mxu0 %v861
      %2835 = vmatmul.mubr.bf16.gmra.mxu0 %v860
      %v2836 = vpop.f32.mrf.mxu0
      %v2837 = vadd.f32 %v2797, %v2836
      %v2838 = vpop.f32.mrf.mxu0
      %v2839 = vpop.f32.mrf.mxu0
      %v2840 = vpop.f32.mrf.mxu0
      %2841 = vdwg.mxu0
      %2842 = vmatprep.subr.bf16.mxu0 0
      %2843 = vmatpush1.bf16.msra.mxu0 %v2097
      %2844 = vmatprep.subr.bf16.mxu0 0
      %2845 = vmatpush1.bf16.msra.mxu0 %v2096
      %2846 = vmatprep.subr.bf16.mxu0 0
      %2847 = vmatpush1.bf16.msra.mxu0 %v2095
      %2848 = vmatprep.subr.bf16.mxu0 0
      %2849 = vmatpush1.bf16.msra.mxu0 %v2094
      %2850 = vmatprep.subr.bf16.mxu0 0
      %2851 = vmatpush1.bf16.msra.mxu0 %v2093
      %2852 = vmatprep.subr.bf16.mxu0 0
      %2853 = vmatpush1.bf16.msra.mxu0 %v2092
      %2854 = vmatprep.subr.bf16.mxu0 0
      %2855 = vmatpush1.bf16.msra.mxu0 %v2091
      %2856 = vmatprep.subr.bf16.mxu0 0
      %2857 = vmatpush1.bf16.msra.mxu0 %v2090
      %2858 = vmatprep.subr.bf16.mxu0 0
      %2859 = vmatpush2.bf16.msra.mxu0 %v2105
      %2860 = vmatprep.subr.bf16.mxu0 0
      %2861 = vmatpush2.bf16.msra.mxu0 %v2104
      %2862 = vmatprep.subr.bf16.mxu0 0
      %2863 = vmatpush2.bf16.msra.mxu0 %v2103
      %2864 = vmatprep.subr.bf16.mxu0 0
      %2865 = vmatpush2.bf16.msra.mxu0 %v2102
      %2866 = vmatprep.subr.bf16.mxu0 0
      %2867 = vmatpush2.bf16.msra.mxu0 %v2101
      %2868 = vmatprep.subr.bf16.mxu0 0
      %2869 = vmatpush2.bf16.msra.mxu0 %v2100
      %2870 = vmatprep.subr.bf16.mxu0 0
      %2871 = vmatpush2.bf16.msra.mxu0 %v2099
      %2872 = vmatprep.subr.bf16.mxu0 0
      %2873 = vmatpush2.bf16.msra.mxu0 %v2098
      %2874 = vmatprep.mubr.bf16.mxu0 %v863
      %2875 = vmatmul.mubr.bf16.gmra.mxu0 %v862
      %v2876 = vpop.f32.mrf.mxu0
      %v2877 = vadd.f32 %v2837, %v2876
      %v2878 = vpop.f32.mrf.mxu0
      %v2879 = vpop.f32.mrf.mxu0
      %v2880 = vpop.f32.mrf.mxu0
      %2881 = vdwg.mxu0
      %2882 = vmatprep.subr.bf16.mxu0 0
      %2883 = vmatpush1.bf16.msra.mxu0 %v2113
      %2884 = vmatprep.subr.bf16.mxu0 0
      %2885 = vmatpush1.bf16.msra.mxu0 %v2112
      %2886 = vmatprep.subr.bf16.mxu0 0
      %2887 = vmatpush1.bf16.msra.mxu0 %v2111
      %2888 = vmatprep.subr.bf16.mxu0 0
      %2889 = vmatpush1.bf16.msra.mxu0 %v2110
      %2890 = vmatprep.subr.bf16.mxu0 0
      %2891 = vmatpush1.bf16.msra.mxu0 %v2109
      %2892 = vmatprep.subr.bf16.mxu0 0
      %2893 = vmatpush1.bf16.msra.mxu0 %v2108
      %2894 = vmatprep.subr.bf16.mxu0 0
      %2895 = vmatpush1.bf16.msra.mxu0 %v2107
      %2896 = vmatprep.subr.bf16.mxu0 0
      %2897 = vmatpush1.bf16.msra.mxu0 %v2106
      %2898 = vmatprep.subr.bf16.mxu0 0
      %2899 = vmatpush2.bf16.msra.mxu0 %v2121
      %2900 = vmatprep.subr.bf16.mxu0 0
      %2901 = vmatpush2.bf16.msra.mxu0 %v2120
      %2902 = vmatprep.subr.bf16.mxu0 0
      %2903 = vmatpush2.bf16.msra.mxu0 %v2119
      %2904 = vmatprep.subr.bf16.mxu0 0
      %2905 = vmatpush2.bf16.msra.mxu0 %v2118
      %2906 = vmatprep.subr.bf16.mxu0 0
      %2907 = vmatpush2.bf16.msra.mxu0 %v2117
      %2908 = vmatprep.subr.bf16.mxu0 0
      %2909 = vmatpush2.bf16.msra.mxu0 %v2116
      %2910 = vmatprep.subr.bf16.mxu0 0
      %2911 = vmatpush2.bf16.msra.mxu0 %v2115
      %2912 = vmatprep.subr.bf16.mxu0 0
      %2913 = vmatpush2.bf16.msra.mxu0 %v2114
      %2914 = vmatprep.mubr.bf16.mxu0 %v865
      %2915 = vmatmul.mubr.bf16.gmra.mxu0 %v864
      %v2916 = vpop.f32.mrf.mxu0
      %v2917 = vadd.f32 %v2877, %v2916
      %v2918 = vpop.f32.mrf.mxu0
      %v2919 = vpop.f32.mrf.mxu0
      %v2920 = vpop.f32.mrf.mxu0
      %2921 = vdwg.mxu0
      %2922 = vmatprep.subr.bf16.mxu0 0
      %2923 = vmatpush1.bf16.msra.mxu0 %v2129
      %2924 = vmatprep.subr.bf16.mxu0 0
      %2925 = vmatpush1.bf16.msra.mxu0 %v2128
      %2926 = vmatprep.subr.bf16.mxu0 0
      %2927 = vmatpush1.bf16.msra.mxu0 %v2127
      %2928 = vmatprep.subr.bf16.mxu0 0
      %2929 = vmatpush1.bf16.msra.mxu0 %v2126
      %2930 = vmatprep.subr.bf16.mxu0 0
      %2931 = vmatpush1.bf16.msra.mxu0 %v2125
      %2932 = vmatprep.subr.bf16.mxu0 0
      %2933 = vmatpush1.bf16.msra.mxu0 %v2124
      %2934 = vmatprep.subr.bf16.mxu0 0
      %2935 = vmatpush1.bf16.msra.mxu0 %v2123
      %2936 = vmatprep.subr.bf16.mxu0 0
      %2937 = vmatpush1.bf16.msra.mxu0 %v2122
      %2938 = vmatprep.subr.bf16.mxu0 0
      %2939 = vmatpush2.bf16.msra.mxu0 %v2137
      %2940 = vmatprep.subr.bf16.mxu0 0
      %2941 = vmatpush2.bf16.msra.mxu0 %v2136
      %2942 = vmatprep.subr.bf16.mxu0 0
      %2943 = vmatpush2.bf16.msra.mxu0 %v2135
      %2944 = vmatprep.subr.bf16.mxu0 0
      %2945 = vmatpush2.bf16.msra.mxu0 %v2134
      %2946 = vmatprep.subr.bf16.mxu0 0
      %2947 = vmatpush2.bf16.msra.mxu0 %v2133
      %2948 = vmatprep.subr.bf16.mxu0 0
      %2949 = vmatpush2.bf16.msra.mxu0 %v2132
      %2950 = vmatprep.subr.bf16.mxu0 0
      %2951 = vmatpush2.bf16.msra.mxu0 %v2131
      %2952 = vmatprep.subr.bf16.mxu0 0
      %2953 = vmatpush2.bf16.msra.mxu0 %v2130
      %2954 = vmatprep.mubr.bf16.mxu0 %v867
      %2955 = vmatmul.mubr.bf16.gmra.mxu0 %v866
      %v2956 = vpop.f32.mrf.mxu0
      %v2957 = vadd.f32 %v2917, %v2956
      %v2958 = vpop.f32.mrf.mxu0
      %v2959 = vpop.f32.mrf.mxu0
      %v2960 = vpop.f32.mrf.mxu0
      %2961 = vdwg.mxu0
      %2962 = vmatprep.subr.bf16.mxu0 0
      %2963 = vmatpush1.bf16.msra.mxu0 %v2145
      %2964 = vmatprep.subr.bf16.mxu0 0
      %2965 = vmatpush1.bf16.msra.mxu0 %v2144
      %2966 = vmatprep.subr.bf16.mxu0 0
      %2967 = vmatpush1.bf16.msra.mxu0 %v2143
      %2968 = vmatprep.subr.bf16.mxu0 0
      %2969 = vmatpush1.bf16.msra.mxu0 %v2142
      %2970 = vmatprep.subr.bf16.mxu0 0
      %2971 = vmatpush1.bf16.msra.mxu0 %v2141
      %2972 = vmatprep.subr.bf16.mxu0 0
      %2973 = vmatpush1.bf16.msra.mxu0 %v2140
      %2974 = vmatprep.subr.bf16.mxu0 0
      %2975 = vmatpush1.bf16.msra.mxu0 %v2139
      %2976 = vmatprep.subr.bf16.mxu0 0
      %2977 = vmatpush1.bf16.msra.mxu0 %v2138
      %2978 = vmatprep.subr.bf16.mxu0 0
      %2979 = vmatpush2.bf16.msra.mxu0 %v2153
      %2980 = vmatprep.subr.bf16.mxu0 0
      %2981 = vmatpush2.bf16.msra.mxu0 %v2152
      %2982 = vmatprep.subr.bf16.mxu0 0
      %2983 = vmatpush2.bf16.msra.mxu0 %v2151
      %2984 = vmatprep.subr.bf16.mxu0 0
      %2985 = vmatpush2.bf16.msra.mxu0 %v2150
      %2986 = vmatprep.subr.bf16.mxu0 0
      %2987 = vmatpush2.bf16.msra.mxu0 %v2149
      %2988 = vmatprep.subr.bf16.mxu0 0
      %2989 = vmatpush2.bf16.msra.mxu0 %v2148
      %2990 = vmatprep.subr.bf16.mxu0 0
      %2991 = vmatpush2.bf16.msra.mxu0 %v2147
      %2992 = vmatprep.subr.bf16.mxu0 0
      %2993 = vmatpush2.bf16.msra.mxu0 %v2146
      %2994 = vmatprep.mubr.bf16.mxu0 %v869
      %2995 = vmatmul.mubr.bf16.gmra.mxu0 %v868
      %v2996 = vpop.f32.mrf.mxu0
      %v2997 = vadd.f32 %v2957, %v2996
      %v2998 = vpop.f32.mrf.mxu0
      %v2999 = vpop.f32.mrf.mxu0
      %v3000 = vpop.f32.mrf.mxu0
      %3001 = vdwg.mxu0
      %3002 = vmatprep.subr.bf16.mxu0 0
      %3003 = vmatpush1.bf16.msra.mxu0 %v2161
      %3004 = vmatprep.subr.bf16.mxu0 0
      %3005 = vmatpush1.bf16.msra.mxu0 %v2160
      %3006 = vmatprep.subr.bf16.mxu0 0
      %3007 = vmatpush1.bf16.msra.mxu0 %v2159
      %3008 = vmatprep.subr.bf16.mxu0 0
      %3009 = vmatpush1.bf16.msra.mxu0 %v2158
      %3010 = vmatprep.subr.bf16.mxu0 0
      %3011 = vmatpush1.bf16.msra.mxu0 %v2157
      %3012 = vmatprep.subr.bf16.mxu0 0
      %3013 = vmatpush1.bf16.msra.mxu0 %v2156
      %3014 = vmatprep.subr.bf16.mxu0 0
      %3015 = vmatpush1.bf16.msra.mxu0 %v2155
      %3016 = vmatprep.subr.bf16.mxu0 0
      %3017 = vmatpush1.bf16.msra.mxu0 %v2154
      %3018 = vmatprep.subr.bf16.mxu0 0
      %3019 = vmatpush2.bf16.msra.mxu0 %v2169
      %3020 = vmatprep.subr.bf16.mxu0 0
      %3021 = vmatpush2.bf16.msra.mxu0 %v2168
      %3022 = vmatprep.subr.bf16.mxu0 0
      %3023 = vmatpush2.bf16.msra.mxu0 %v2167
      %3024 = vmatprep.subr.bf16.mxu0 0
      %3025 = vmatpush2.bf16.msra.mxu0 %v2166
      %3026 = vmatprep.subr.bf16.mxu0 0
      %3027 = vmatpush2.bf16.msra.mxu0 %v2165
      %3028 = vmatprep.subr.bf16.mxu0 0
      %3029 = vmatpush2.bf16.msra.mxu0 %v2164
      %3030 = vmatprep.subr.bf16.mxu0 0
      %3031 = vmatpush2.bf16.msra.mxu0 %v2163
      %3032 = vmatprep.subr.bf16.mxu0 0
      %3033 = vmatpush2.bf16.msra.mxu0 %v2162
      %3034 = vmatprep.mubr.bf16.mxu0 %v871
      %3035 = vmatmul.mubr.bf16.gmra.mxu0 %v870
      %v3036 = vpop.f32.mrf.mxu0
      %v3037 = vadd.f32 %v2997, %v3036
      %v3038 = vpop.f32.mrf.mxu0
      %v3039 = vpop.f32.mrf.mxu0
      %v3040 = vpop.f32.mrf.mxu0
      %3041 = vdwg.mxu0
      %3042 = vmatprep.subr.bf16.mxu0 0
      %3043 = vmatpush1.bf16.msra.mxu0 %v2177
      %3044 = vmatprep.subr.bf16.mxu0 0
      %3045 = vmatpush1.bf16.msra.mxu0 %v2176
      %3046 = vmatprep.subr.bf16.mxu0 0
      %3047 = vmatpush1.bf16.msra.mxu0 %v2175
      %3048 = vmatprep.subr.bf16.mxu0 0
      %3049 = vmatpush1.bf16.msra.mxu0 %v2174
      %3050 = vmatprep.subr.bf16.mxu0 0
      %3051 = vmatpush1.bf16.msra.mxu0 %v2173
      %3052 = vmatprep.subr.bf16.mxu0 0
      %3053 = vmatpush1.bf16.msra.mxu0 %v2172
      %3054 = vmatprep.subr.bf16.mxu0 0
      %3055 = vmatpush1.bf16.msra.mxu0 %v2171
      %3056 = vmatprep.subr.bf16.mxu0 0
      %3057 = vmatpush1.bf16.msra.mxu0 %v2170
      %3058 = vmatprep.subr.bf16.mxu0 0
      %3059 = vmatpush2.bf16.msra.mxu0 %v2185
      %3060 = vmatprep.subr.bf16.mxu0 0
      %3061 = vmatpush2.bf16.msra.mxu0 %v2184
      %3062 = vmatprep.subr.bf16.mxu0 0
      %3063 = vmatpush2.bf16.msra.mxu0 %v2183
      %3064 = vmatprep.subr.bf16.mxu0 0
      %3065 = vmatpush2.bf16.msra.mxu0 %v2182
      %3066 = vmatprep.subr.bf16.mxu0 0
      %3067 = vmatpush2.bf16.msra.mxu0 %v2181
      %3068 = vmatprep.subr.bf16.mxu0 0
      %3069 = vmatpush2.bf16.msra.mxu0 %v2180
      %3070 = vmatprep.subr.bf16.mxu0 0
      %3071 = vmatpush2.bf16.msra.mxu0 %v2179
      %3072 = vmatprep.subr.bf16.mxu0 0
      %3073 = vmatpush2.bf16.msra.mxu0 %v2178
      %3074 = vmatprep.mubr.bf16.mxu0 %v873
      %3075 = vmatmul.mubr.bf16.gmra.mxu0 %v872
      %v3076 = vpop.f32.mrf.mxu0
      %v3077 = vadd.f32 %v3037, %v3076
      %v3078 = vpop.f32.mrf.mxu0
      %v3079 = vpop.f32.mrf.mxu0
      %v3080 = vpop.f32.mrf.mxu0
      %3081 = vdwg.mxu0
      %v3082 = vadd.f32 %v265, %v3077
      %3083 = vst [vmem:[#allocation2] sm:$0xff] %v3082
      %p3084 = scmp.eq.s32.totalorder %s21, 7
      // Predicated region
      $region37: #{cnn_gru_forward.8} parent=31 // pred_check
        %p3085 = pneg %p3084
      $region38: #{cnn_gru_forward.8} parent=31 // pred_check_branch
        %3087 = sbr.rel (%p3085) target = $region40
      $region39: #{cnn_gru_forward.8} parent=31 // pred_region
        %v3088 = vld [vmem:[#allocation2] sm:$0xff]
        %v3089 = vld [vmem:[%s251] sm:$0x1]
        %v3091 = vlaneseq
        %v3092 = vshrl.u32 %v3091, 7
        %v3093 = vsub.s32 0, %v3092
        %v3094 = vrot.slane %v3089, %v3093
        %v3096 = vadd.f32 %v3088, %v3094
        %v3097 = vmax.f32 %v3096, 0.0
        %v3098 = vpack.c.bf16 %v3097, %v3097
        %3099 = vst [vmem:[%s258] sm:$0xf] %v3098
      $region40: #{cnn_gru_forward.8} parent=31 // pred_fallthru
        _
      %p3100 = scmp.lt.s32.totalorder %s19, 0
      %s3101 = scalar_select %p3100, %s19, 0
      %p3102 = scmp.lt.s32.totalorder %s20, 0
      %s3103 = scalar_select %p3102, %s20, 0
      %s3104 = sadd.s32 %s3103, %s3101
      %s3105 = smul.addr %s3104, 4
      %s3106 = scalar_lea.vmem %s3, %s3105
      // Predicated region
      $region41: #{cnn_gru_forward.8} parent=31 // pred_check
        %p3107 = pneg %p135
      $region42: #{cnn_gru_forward.8} parent=31 // pred_check_branch
        %3109 = sbr.rel (%p3107) target = $region44
      $region43: #{cnn_gru_forward.8} parent=31 // pred_region
        _
      $region44: #{cnn_gru_forward.8} parent=31 // pred_fallthru
        _
      // Predicated region
      $region45: #{cnn_gru_forward.8} parent=31 // pred_check
        %p3110 = pneg %p135
      $region46: #{cnn_gru_forward.8} parent=31 // pred_check_branch
        %3112 = sbr.rel (%p3110) target = $region48
      $region47: #{cnn_gru_forward.8} parent=31 // pred_region
        %p3113 = scmp.lt.s32.totalorder %s19, 0
        %s3114 = scalar_select %p3113, %s19, 0
        %p3115 = scmp.lt.s32.totalorder %s20, 0
        %s3116 = scalar_select %p3115, %s20, 0
        %s3117 = sadd.s32 %s3116, %s3114
        %s3118 = smul.addr %s3117, 4
        %s3119 = scalar_lea.vmem %s3, %s3118
      $region48: #{cnn_gru_forward.8} parent=31 // pred_fallthru
        _
    $region32: #{cnn_gru_forward.8} parent=5 // pred_fallthru
      _
    %p3120 = scmp.le.s32.totalorder 2, %s9
    // Predicated region
    $region49: #{cnn_gru_forward.8} parent=5 // pred_check
      %p3121 = pneg %p3120
    $region50: #{cnn_gru_forward.8} parent=5 // pred_check_branch
      %3123 = sbr.rel (%p3121) target = $region52
    $region51: #{cnn_gru_forward.8} parent=5 // pred_region
      %s3124 = ssub.s32 %s9, 2
    $region52: #{cnn_gru_forward.8} parent=5 // pred_fallthru
      _
  $region6: #{cnn_gru_forward.8} parent=0 // loop_footer
    %s13 = sadd.s32 1, %s9
  $region7: #{cnn_gru_forward.8} parent=0 // loop_footer_branch
    %8 = sbr.rel target = $region3
  $region8: #{cnn_gru_forward.8} parent=0 // loop_exit
    _

</llo_original>
